<compile_context>
chip_gen: v6e
topology: v6e:2x2x1
jax: 0.10.0
libtpu: 0.0.40
codegen_flags: <defaults>
</compile_context>

<pallas_src>
import math

import jax
import jax.numpy as jnp
from jax.experimental import pallas as pl
from jax.experimental.pallas import tpu as pltpu


# ---------------------------------------------------------------------------
# Pallas kernel: one batch-block (Bt examples) per grid step.
# ---------------------------------------------------------------------------
def sca_kernel(
    lens_ref,                 # [Bt, 1, S] int32 (src_lengths broadcast over lanes)
    src_lm_emb_ref,           # [Bt, S, D] bf16
    tgt_lm_emb_ref,           # [Bt, T, D] bf16
    src_emb_ref,              # [Bt, S, D] bf16
    tgt_emb_ref,              # [Bt, T, D] bf16
    w_src_lm_ref,             # [D, V] bf16
    w_tgt_lm_ref,             # [D, V] bf16
    w_enc_ref,                # [D, D] bf16
    w_fuse_src_ref,           # [V, D] bf16
    b_enc_ref,                # [1, D] f32
    w_dec_ref,                # [D, D] bf16
    w_fuse_tgt_ref,           # [V, D] bf16
    b_dec_ref,                # [1, D] f32
    w_out_ref,                # [D, V] bf16
    b_out_ref,                # [1, V] f32
    out_ref,                  # [Bt, T, V] out_dtype
):
    Bt, S, D = src_lm_emb_ref.shape
    T = tgt_lm_emb_ref.shape[1]
    V = w_src_lm_ref.shape[1]
    bf16 = jnp.bfloat16
    f32 = jnp.float32

    def softmax_last(x, out_dtype=f32):
        # f32 softmax; denominator via approx reciprocal (EUP slot, ~free).
        m = jnp.max(x, axis=-1, keepdims=True)
        e = jnp.exp(x - m)
        inv = pl.reciprocal(jnp.sum(e, axis=-1, keepdims=True), approx=True)
        return (e * inv).astype(out_dtype)

    def mm(a_bf16, w_ref):  # bf16 x bf16 -> f32 accumulation on the MXU
        return jnp.dot(a_bf16, w_ref[...], preferred_element_type=f32)

    # Flatten the batch block into the M dimension for all weight matmuls.
    # (S, T multiples of 8 and D multiple of 128 -> reshapes are layout no-ops.)
    src_lm_x = src_lm_emb_ref[...].reshape(Bt * S, D)
    tgt_lm_x = tgt_lm_emb_ref[...].reshape(Bt * T, D)
    src_x = src_emb_ref[...].reshape(Bt * S, D)
    tgt_x = tgt_emb_ref[...].reshape(Bt * T, D)

    # --- src_lm / tgt_lm : logits -> softmax (F.softmax(..., dim=-1)) -------
    # Emit probs directly in bf16: they only feed the fusion matmuls.
    src_lm_probs = softmax_last(mm(src_lm_x, w_src_lm_ref), bf16)    # [Bt*S, V]
    tgt_lm_probs = softmax_last(mm(tgt_lm_x, w_tgt_lm_ref), bf16)    # [Bt*T, V]

    # --- encoder(src_tokens, srclmoutput, src_lengths) -----------------------
    # TODO(synk): optionally fuse the two matmuls via a pre-concatenated
    # [W_enc; W_fuse_src] (K = D+V) weight in the wrapper; measure first.
    enc_bf = jnp.tanh(
        mm(src_x, w_enc_ref)
        + mm(src_lm_probs, w_fuse_src_ref)
        + b_enc_ref[...]
    ).astype(bf16).reshape(Bt, S, D)                                 # bf16, reused twice

    # --- decoder(prev_output_tokens, tgtlmoutput, encoder_out) --------------
    dec_h = jnp.tanh(
        mm(tgt_x, w_dec_ref)
        + mm(tgt_lm_probs, w_fuse_tgt_ref)
        + b_dec_ref[...]
    ).reshape(Bt, T, D)                                              # f32
    dec_bf = dec_h.astype(bf16)                                      # cast once

    # Scaled dot-product attention over encoder states, masked by src_lengths.
    # Transpose-free batched einsums (contract last dims).
    # TODO(synk): at production S/T, tile so the softmaxed dim uses >=128 lanes.
    scale = jnp.float32(1.0 / math.sqrt(float(D)))
    scores = jnp.einsum(
        "btd,bsd->bts", dec_bf, enc_bf, preferred_element_type=f32,
    ) * scale                                                        # [Bt, T, S] f32

    # Single vectorized mask: one broadcasted compare, no per-example slicing.
    col = jax.lax.broadcasted_iota(jnp.int32, (Bt, T, S), 2)
    mask = col < lens_ref[...]                                       # (Bt,T,S) < (Bt,1,S)
    scores = jnp.where(mask, scores, jnp.float32(-1e30))

    attn = softmax_last(scores, bf16)                                # [Bt, T, S] bf16
    ctx = jnp.einsum(
        "bts,bsd->btd", attn, enc_bf, preferred_element_type=f32,
    )                                                                # [Bt, T, D] f32

    # Output projection to vocab logits (lane-dense V).
    h = (dec_h + ctx).reshape(Bt * T, D).astype(bf16)
    out = mm(h, w_out_ref) + b_out_ref[...]                          # [Bt*T, V] f32
    out_ref[...] = out.reshape(Bt, T, V).astype(out_ref.dtype)


# ---------------------------------------------------------------------------
# Wrapper
# ---------------------------------------------------------------------------
def _pick_batch_block(B, rows_per_example, target_rows=256, min_grid=2):
    """Pick Bt so Bt*rows ~= target_rows (256-wide MXU) but keep >= min_grid steps."""
    bt = max(1, target_rows // max(1, rows_per_example))
    if B >= min_grid:
        bt = min(bt, B // min_grid)   # keep both v7x TensorCores busy
    bt = max(1, min(bt, B))
    while B % bt != 0:
        bt -= 1
    return bt


def fairseq_sca_forward(
    src_lengths,              # [B] int32 (must be >= 1; len==0 would softmax-uniform)
    src_lm_emb, tgt_lm_emb,   # [B, S, D], [B, T, D]
    src_emb, tgt_emb,         # [B, S, D], [B, T, D]
    params,
    *,
    batch_block=None,
    out_dtype=jnp.float32,    # set bf16 to halve output writeback if tolerated
):
    B, S, D = src_emb.shape
    T = tgt_emb.shape[1]
    V = params["w_out"].shape[1]
    assert D % 128 == 0 and V % 128 == 0, "pad D and V to multiples of 128 lanes"
    assert S % 8 == 0 and T % 8 == 0

    Bt = batch_block if batch_block is not None else _pick_batch_block(B, min(S, T))
    assert B % Bt == 0

    bf16 = jnp.bfloat16
    f32 = jnp.float32

    # bf16 MXU inputs; biases stay f32 (added to the f32 accumulators).
    acts = [x.astype(bf16) for x in (src_lm_emb, tgt_lm_emb, src_emb, tgt_emb)]
    w = {k: (v.astype(bf16) if k.startswith("w_") else v.astype(f32))
         for k, v in params.items()}

    # src_lengths broadcast across the source-position (lane) dim -> the in-kernel
    # mask is one vectorized compare.
    lens_b = jnp.broadcast_to(src_lengths.astype(jnp.int32)[:, None, None], (B, 1, S))

    lens_spec = pl.BlockSpec((Bt, 1, S), lambda g: (g, 0, 0))
    act_spec_S = pl.BlockSpec((Bt, S, D), lambda g: (g, 0, 0))
    act_spec_T = pl.BlockSpec((Bt, T, D), lambda g: (g, 0, 0))

    # Grid-invariant weights/biases: constant block index across the grid, so the
    # pipeline does not re-fetch them after the first step.
    def weight_spec(shape):
        return pl.BlockSpec(shape, lambda g: (0, 0))

    grid_spec = pltpu.PrefetchScalarGridSpec(
        num_scalar_prefetch=0,
        grid=(B // Bt,),
        in_specs=[
            lens_spec,                  # src_lengths (broadcast)
            act_spec_S,                 # src_lm_emb
            act_spec_T,                 # tgt_lm_emb
            act_spec_S,                 # src_emb
            act_spec_T,                 # tgt_emb
            weight_spec((D, V)),        # w_src_lm
            weight_spec((D, V)),        # w_tgt_lm
            weight_spec((D, D)),        # w_enc
            weight_spec((V, D)),        # w_fuse_src
            weight_spec((1, D)),        # b_enc
            weight_spec((D, D)),        # w_dec
            weight_spec((V, D)),        # w_fuse_tgt
            weight_spec((1, D)),        # b_dec
            weight_spec((D, V)),        # w_out
            weight_spec((1, V)),        # b_out
        ],
        out_specs=pl.BlockSpec((Bt, T, V), lambda g: (g, 0, 0)),
    )

    # Explicit VMEM budget derived from actual tile sizes (with headroom),
    # capped at 48 MiB to stay inside v7x's 64 MiB per-TC VMEM.
    def nbytes(shape, dtype):
        return math.prod(shape) * jnp.dtype(dtype).itemsize

    out_isize = jnp.dtype(out_dtype).itemsize
    vmem_bytes = (
        2 * 2 * (nbytes((Bt, S, D), bf16) + nbytes((Bt, T, D), bf16))       # dbl-buf acts
        + 2 * nbytes((Bt, 1, S), jnp.int32)                                 # lengths
        + 2 * sum(nbytes(v.shape, v.dtype) for v in w.values())             # weights
        + 2 * Bt * T * V * out_isize                                        # dbl-buf out
        + 4 * (nbytes((Bt * S, V), f32) + nbytes((Bt * T, V), f32))         # logits/probs
        + 8 * nbytes((Bt * max(S, T), D), f32)                              # enc/dec/ctx
    )
    vmem_limit = int(min(48 * 1024 * 1024, max(2 * vmem_bytes, 8 * 1024 * 1024)))

    return pl.pallas_call(
        sca_kernel,
        out_shape=jax.ShapeDtypeStruct((B, T, V), out_dtype),
        grid_spec=grid_spec,
        compiler_params=pltpu.CompilerParams(
            dimension_semantics=("parallel",),     # batch blocks are independent
            vmem_limit_bytes=vmem_limit,
        ),
    )(
        lens_b,
        *acts,
        w["w_src_lm"], w["w_tgt_lm"],
        w["w_enc"], w["w_fuse_src"], w["b_enc"],
        w["w_dec"], w["w_fuse_tgt"], w["b_dec"],
        w["w_out"], w["b_out"],
    )


# ---------------------------------------------------------------------------
# Pure-JAX reference (same math, same bf16-in / f32-accumulate mixed precision)
# ---------------------------------------------------------------------------
def reference_forward(src_lengths, src_lm_emb, tgt_lm_emb, src_emb, tgt_emb, params):
    bf16 = jnp.bfloat16
    f32 = jnp.float32
    D = src_emb.shape[-1]
    S = src_emb.shape[1]

    def bmm(a, w):
        return jnp.dot(a.astype(bf16), w.astype(bf16), preferred_element_type=f32)

    src_lm_probs = jax.nn.softmax(bmm(src_lm_emb, params["w_src_lm"]), axis=-1)
    tgt_lm_probs = jax.nn.softmax(bmm(tgt_lm_emb, params["w_tgt_lm"]), axis=-1)

    enc = jnp.tanh(
        bmm(src_emb, params["w_enc"]) + bmm(src_lm_probs, params["w_fuse_src"])
        + params["b_enc"].astype(f32)
    )
    dec_h = jnp.tanh(
        bmm(tgt_emb, params["w_dec"]) + bmm(tgt_lm_probs, params["w_fuse_tgt"])
        + params["b_dec"].astype(f32)
    )

    scale = 1.0 / math.sqrt(float(D))
    scores = jnp.einsum("btd,bsd->bts", dec_h.astype(bf16), enc.astype(bf16),
                        preferred_element_type=f32) * scale
    col = jnp.arange(S)[None, None, :]
    mask = col < src_lengths[:, None, None]
    scores = jnp.where(mask, scores, jnp.float32(-1e30))
    attn = jax.nn.softmax(scores, axis=-1)
    ctx = jnp.einsum("bts,bsd->btd", attn.astype(bf16), enc.astype(bf16),
                     preferred_element_type=f32)

    return bmm(dec_h + ctx, params["w_out"]) + params["b_out"].astype(f32)


# ---------------------------------------------------------------------------
# Main
# ---------------------------------------------------------------------------
if __name__ == "__main__":
    # Small but MXU-friendly shapes: D, V lane-dense; Bt*S = Bt*T = 256 rows / step
    # with 2 grid steps (keeps both v7x TensorCores busy).
    B, S, T, D, V = 16, 32, 32, 128, 256

    key = jax.random.PRNGKey(0)
    keys = jax.random.split(key, 20)

    def init(k, shape, scale=0.1):
        return jax.random.normal(k, shape, dtype=jnp.float32) * scale

    # embedding tables for the four submodules
    emb_src_lm = init(keys[0], (V, D))
    emb_tgt_lm = init(keys[1], (V, D))
    emb_src = init(keys[2], (V, D))
    emb_tgt = init(keys[3], (V, D))

    params = {
        "w_src_lm": init(keys[4], (D, V)),
        "w_tgt_lm": init(keys[5], (D, V)),
        "w_enc": init(keys[6], (D, D)),
        "w_fuse_src": init(keys[7], (V, D)),
        "b_enc": init(keys[8], (1, D)),
        "w_dec": init(keys[9], (D, D)),
        "w_fuse_tgt": init(keys[10], (V, D)),
        "b_dec": init(keys[11], (1, D)),
        "w_out": init(keys[12], (D, V)),
        "b_out": init(keys[13], (1, V)),
    }

    # token inputs (mirroring forward(src_tokens_lm, src_tokens, src_lengths,
    # prev_output_tokens, prev_output_tokens_lm))
    src_tokens_lm = jax.random.randint(keys[14], (B, S), 0, V)
    src_tokens = jax.random.randint(keys[15], (B, S), 0, V)
    prev_output_tokens = jax.random.randint(keys[16], (B, T), 1, V)
    prev_output_tokens_lm = jax.random.randint(keys[17], (B, T), 1, V)
    src_lengths = jnp.array(
        [S, S - 3, 17, 5, S, 11, 1, 26, 8, S, 20, 3, 15, S, 7, 24],
        dtype=jnp.int32,
    )  # all >= 1

    # embedding lookups (glue, plain JAX)
    src_lm_emb = jnp.take(emb_src_lm, src_tokens_lm, axis=0)
    tgt_lm_emb = jnp.take(emb_tgt_lm, prev_output_tokens_lm, axis=0)
    src_emb = jnp.take(emb_src, src_tokens, axis=0)
    tgt_emb = jnp.take(emb_tgt, prev_output_tokens, axis=0)

    out = fairseq_sca_forward(
        src_lengths, src_lm_emb, tgt_lm_emb, src_emb, tgt_emb, params
    )
    out = jax.block_until_ready(out)

    ref = reference_forward(
        src_lengths, src_lm_emb, tgt_lm_emb, src_emb, tgt_emb, params
    )
    ref = jax.block_until_ready(ref)

    assert out.shape == (B, T, V), out.shape
    max_err = float(jnp.max(jnp.abs(out - ref)))
    # bf16 MXU inputs + approx-reciprocal softmax vs. identical-precision reference
    assert jnp.allclose(out, ref, atol=1e-2, rtol=1e-2), max_err

    print("KERNEL_OK")
</pallas_src>

<mosaic_0001>
module attributes {stable_mosaic.version = 11 : i64} {
  func.func @sca_kernel(%arg0: i32, %arg1: memref<8x1x32xi32, #tpu.memory_space<vmem>>, %arg2: memref<8x32x128xbf16, #tpu.memory_space<vmem>>, %arg3: memref<8x32x128xbf16, #tpu.memory_space<vmem>>, %arg4: memref<8x32x128xbf16, #tpu.memory_space<vmem>>, %arg5: memref<8x32x128xbf16, #tpu.memory_space<vmem>>, %arg6: memref<128x256xbf16, #tpu.memory_space<vmem>>, %arg7: memref<128x256xbf16, #tpu.memory_space<vmem>>, %arg8: memref<128x128xbf16, #tpu.memory_space<vmem>>, %arg9: memref<256x128xbf16, #tpu.memory_space<vmem>>, %arg10: memref<1x128xf32, #tpu.memory_space<vmem>>, %arg11: memref<128x128xbf16, #tpu.memory_space<vmem>>, %arg12: memref<256x128xbf16, #tpu.memory_space<vmem>>, %arg13: memref<1x128xf32, #tpu.memory_space<vmem>>, %arg14: memref<128x256xbf16, #tpu.memory_space<vmem>>, %arg15: memref<1x256xf32, #tpu.memory_space<vmem>>, %arg16: memref<8x32x256xf32, #tpu.memory_space<vmem>>) attributes {dimension_semantics = [#tpu.dimension_semantics<parallel>], iteration_bounds = array<i64: 2>, scalar_prefetch = 0 : i64, scratch_operands = 0 : i64, tpu.core_type = #tpu.core_type<tc>, window_params = [{transform_indices = @transform_0, window_bounds = array<i64: 8, 1, 32>}, {transform_indices = @transform_1, window_bounds = array<i64: 8, 32, 128>}, {transform_indices = @transform_2, window_bounds = array<i64: 8, 32, 128>}, {transform_indices = @transform_3, window_bounds = array<i64: 8, 32, 128>}, {transform_indices = @transform_4, window_bounds = array<i64: 8, 32, 128>}, {pipeline_mode = #tpu.pipeline_mode<synchronous>, transform_indices = @transform_5, window_bounds = array<i64: 128, 256>}, {pipeline_mode = #tpu.pipeline_mode<synchronous>, transform_indices = @transform_6, window_bounds = array<i64: 128, 256>}, {pipeline_mode = #tpu.pipeline_mode<synchronous>, transform_indices = @transform_7, window_bounds = array<i64: 128, 128>}, {pipeline_mode = #tpu.pipeline_mode<synchronous>, transform_indices = @transform_8, window_bounds = array<i64: 256, 128>}, {pipeline_mode = #tpu.pipeline_mode<synchronous>, transform_indices = @transform_9, window_bounds = array<i64: 1, 128>}, {pipeline_mode = #tpu.pipeline_mode<synchronous>, transform_indices = @transform_10, window_bounds = array<i64: 128, 128>}, {pipeline_mode = #tpu.pipeline_mode<synchronous>, transform_indices = @transform_11, window_bounds = array<i64: 256, 128>}, {pipeline_mode = #tpu.pipeline_mode<synchronous>, transform_indices = @transform_12, window_bounds = array<i64: 1, 128>}, {pipeline_mode = #tpu.pipeline_mode<synchronous>, transform_indices = @transform_13, window_bounds = array<i64: 128, 256>}, {pipeline_mode = #tpu.pipeline_mode<synchronous>, transform_indices = @transform_14, window_bounds = array<i64: 1, 256>}, {transform_indices = @transform_15, window_bounds = array<i64: 8, 32, 256>}]} {
    %c0 = arith.constant 0 : index
    %c0_0 = arith.constant 0 : index
    %c0_1 = arith.constant 0 : index
    %0 = vector.load %arg2[%c0, %c0_0, %c0_1] : memref<8x32x128xbf16, #tpu.memory_space<vmem>>, vector<8x32x128xbf16>
    %1 = vector.shape_cast %0 : vector<8x32x128xbf16> to vector<256x128xbf16>
    %c0_2 = arith.constant 0 : index
    %c0_3 = arith.constant 0 : index
    %c0_4 = arith.constant 0 : index
    %2 = vector.load %arg3[%c0_2, %c0_3, %c0_4] : memref<8x32x128xbf16, #tpu.memory_space<vmem>>, vector<8x32x128xbf16>
    %3 = vector.shape_cast %2 : vector<8x32x128xbf16> to vector<256x128xbf16>
    %c0_5 = arith.constant 0 : index
    %c0_6 = arith.constant 0 : index
    %c0_7 = arith.constant 0 : index
    %4 = vector.load %arg4[%c0_5, %c0_6, %c0_7] : memref<8x32x128xbf16, #tpu.memory_space<vmem>>, vector<8x32x128xbf16>
    %5 = vector.shape_cast %4 : vector<8x32x128xbf16> to vector<256x128xbf16>
    %c0_8 = arith.constant 0 : index
    %c0_9 = arith.constant 0 : index
    %c0_10 = arith.constant 0 : index
    %6 = vector.load %arg5[%c0_8, %c0_9, %c0_10] : memref<8x32x128xbf16, #tpu.memory_space<vmem>>, vector<8x32x128xbf16>
    %7 = vector.shape_cast %6 : vector<8x32x128xbf16> to vector<256x128xbf16>
    %c0_11 = arith.constant 0 : index
    %c0_12 = arith.constant 0 : index
    %8 = vector.load %arg6[%c0_11, %c0_12] : memref<128x256xbf16, #tpu.memory_space<vmem>>, vector<128x256xbf16>
    %cst = arith.constant dense<0.000000e+00> : vector<256x256xf32>
    %9 = tpu.matmul %1, %8, %cst {dimension_numbers = #tpu.dot_dimension_numbers<[1], [0], [0], [1], [0, 0, 1, 1], [], []>} : vector<256x128xbf16>, vector<128x256xbf16>, vector<256x256xf32> -> vector<256x256xf32>
    %cst_13 = arith.constant dense<0xFF800000> : vector<256xf32>
    %10 = vector.multi_reduction <maximumf>, %9, %cst_13 [1] : vector<256x256xf32> to vector<256xf32>
    %11 = vector.shape_cast %10 : vector<256xf32> to vector<256x1xf32>
    %12 = vector.broadcast %11 : vector<256x1xf32> to vector<256x256xf32>
    %13 = arith.subf %9, %12 : vector<256x256xf32>
    %14 = math.exp %13 : vector<256x256xf32>
    %cst_14 = arith.constant dense<0.000000e+00> : vector<256xf32>
    %15 = vector.multi_reduction <add>, %14, %cst_14 [1] : vector<256x256xf32> to vector<256xf32>
    %16 = vector.shape_cast %15 : vector<256xf32> to vector<256x1xf32>
    %17 = tpu.reciprocal %16 {approx = true} : vector<256x1xf32> -> vector<256x1xf32>
    %18 = vector.broadcast %17 : vector<256x1xf32> to vector<256x256xf32>
    %19 = arith.mulf %14, %18 : vector<256x256xf32>
    %20 = arith.truncf %19 : vector<256x256xf32> to vector<256x256xbf16>
    %c0_15 = arith.constant 0 : index
    %c0_16 = arith.constant 0 : index
    %21 = vector.load %arg7[%c0_15, %c0_16] : memref<128x256xbf16, #tpu.memory_space<vmem>>, vector<128x256xbf16>
    %cst_17 = arith.constant dense<0.000000e+00> : vector<256x256xf32>
    %22 = tpu.matmul %3, %21, %cst_17 {dimension_numbers = #tpu.dot_dimension_numbers<[1], [0], [0], [1], [0, 0, 1, 1], [], []>} : vector<256x128xbf16>, vector<128x256xbf16>, vector<256x256xf32> -> vector<256x256xf32>
    %cst_18 = arith.constant dense<0xFF800000> : vector<256xf32>
    %23 = vector.multi_reduction <maximumf>, %22, %cst_18 [1] : vector<256x256xf32> to vector<256xf32>
    %24 = vector.shape_cast %23 : vector<256xf32> to vector<256x1xf32>
    %25 = vector.broadcast %24 : vector<256x1xf32> to vector<256x256xf32>
    %26 = arith.subf %22, %25 : vector<256x256xf32>
    %27 = math.exp %26 : vector<256x256xf32>
    %cst_19 = arith.constant dense<0.000000e+00> : vector<256xf32>
    %28 = vector.multi_reduction <add>, %27, %cst_19 [1] : vector<256x256xf32> to vector<256xf32>
    %29 = vector.shape_cast %28 : vector<256xf32> to vector<256x1xf32>
    %30 = tpu.reciprocal %29 {approx = true} : vector<256x1xf32> -> vector<256x1xf32>
    %31 = vector.broadcast %30 : vector<256x1xf32> to vector<256x256xf32>
    %32 = arith.mulf %27, %31 : vector<256x256xf32>
    %33 = arith.truncf %32 : vector<256x256xf32> to vector<256x256xbf16>
    %c0_20 = arith.constant 0 : index
    %c0_21 = arith.constant 0 : index
    %34 = vector.load %arg8[%c0_20, %c0_21] : memref<128x128xbf16, #tpu.memory_space<vmem>>, vector<128x128xbf16>
    %cst_22 = arith.constant dense<0.000000e+00> : vector<256x128xf32>
    %35 = tpu.matmul %5, %34, %cst_22 {dimension_numbers = #tpu.dot_dimension_numbers<[1], [0], [0], [1], [0, 0, 1, 1], [], []>} : vector<256x128xbf16>, vector<128x128xbf16>, vector<256x128xf32> -> vector<256x128xf32>
    %c0_23 = arith.constant 0 : index
    %c0_24 = arith.constant 0 : index
    %36 = vector.load %arg9[%c0_23, %c0_24] : memref<256x128xbf16, #tpu.memory_space<vmem>>, vector<256x128xbf16>
    %cst_25 = arith.constant dense<0.000000e+00> : vector<256x128xf32>
    %37 = tpu.matmul %20, %36, %cst_25 {dimension_numbers = #tpu.dot_dimension_numbers<[1], [0], [0], [1], [0, 0, 1, 1], [], []>} : vector<256x256xbf16>, vector<256x128xbf16>, vector<256x128xf32> -> vector<256x128xf32>
    %38 = arith.addf %35, %37 : vector<256x128xf32>
    %c0_26 = arith.constant 0 : index
    %c0_27 = arith.constant 0 : index
    %39 = vector.load %arg10[%c0_26, %c0_27] : memref<1x128xf32, #tpu.memory_space<vmem>>, vector<1x128xf32>
    %40 = vector.broadcast %39 : vector<1x128xf32> to vector<256x128xf32>
    %41 = arith.addf %38, %40 : vector<256x128xf32>
    %42 = math.tanh %41 : vector<256x128xf32>
    %43 = arith.truncf %42 : vector<256x128xf32> to vector<256x128xbf16>
    %44 = vector.shape_cast %43 : vector<256x128xbf16> to vector<8x32x128xbf16>
    %c0_28 = arith.constant 0 : index
    %c0_29 = arith.constant 0 : index
    %45 = vector.load %arg11[%c0_28, %c0_29] : memref<128x128xbf16, #tpu.memory_space<vmem>>, vector<128x128xbf16>
    %cst_30 = arith.constant dense<0.000000e+00> : vector<256x128xf32>
    %46 = tpu.matmul %7, %45, %cst_30 {dimension_numbers = #tpu.dot_dimension_numbers<[1], [0], [0], [1], [0, 0, 1, 1], [], []>} : vector<256x128xbf16>, vector<128x128xbf16>, vector<256x128xf32> -> vector<256x128xf32>
    %c0_31 = arith.constant 0 : index
    %c0_32 = arith.constant 0 : index
    %47 = vector.load %arg12[%c0_31, %c0_32] : memref<256x128xbf16, #tpu.memory_space<vmem>>, vector<256x128xbf16>
    %cst_33 = arith.constant dense<0.000000e+00> : vector<256x128xf32>
    %48 = tpu.matmul %33, %47, %cst_33 {dimension_numbers = #tpu.dot_dimension_numbers<[1], [0], [0], [1], [0, 0, 1, 1], [], []>} : vector<256x256xbf16>, vector<256x128xbf16>, vector<256x128xf32> -> vector<256x128xf32>
    %49 = arith.addf %46, %48 : vector<256x128xf32>
    %c0_34 = arith.constant 0 : index
    %c0_35 = arith.constant 0 : index
    %50 = vector.load %arg13[%c0_34, %c0_35] : memref<1x128xf32, #tpu.memory_space<vmem>>, vector<1x128xf32>
    %51 = vector.broadcast %50 : vector<1x128xf32> to vector<256x128xf32>
    %52 = arith.addf %49, %51 : vector<256x128xf32>
    %53 = math.tanh %52 : vector<256x128xf32>
    %54 = vector.shape_cast %53 : vector<256x128xf32> to vector<8x32x128xf32>
    %55 = arith.truncf %54 : vector<8x32x128xf32> to vector<8x32x128xbf16>
    "tpu.trace_start"() <{level = 10 : i32, message = "btd,bsd->bts"}> : () -> ()
    %cst_36 = arith.constant dense<0.000000e+00> : vector<8x32x32xf32>
    %56 = tpu.matmul %55, %44, %cst_36 {dimension_numbers = #tpu.dot_dimension_numbers<[2], [2], [1], [1], [0, 0, 0, 1, 1, 1], [0], [0]>} : vector<8x32x128xbf16>, vector<8x32x128xbf16>, vector<8x32x32xf32> -> vector<8x32x32xf32>
    "tpu.trace_stop"() : () -> ()
    %cst_37 = arith.constant 0.0883883461 : f32
    %57 = vector.broadcast %cst_37 : f32 to vector<8x32x32xf32>
    %58 = arith.mulf %56, %57 : vector<8x32x32xf32>
    %59 = tpu.iota {dimensions = array<i32: 2>} : vector<8x32x32xi32>
    %c0_38 = arith.constant 0 : index
    %c0_39 = arith.constant 0 : index
    %c0_40 = arith.constant 0 : index
    %60 = vector.load %arg1[%c0_38, %c0_39, %c0_40] : memref<8x1x32xi32, #tpu.memory_space<vmem>>, vector<8x1x32xi32>
    %61 = vector.broadcast %60 : vector<8x1x32xi32> to vector<8x32x32xi32>
    %62 = arith.cmpi slt, %59, %61 : vector<8x32x32xi32>
    %cst_41 = arith.constant -1.000000e+30 : f32
    %63 = vector.broadcast %cst_41 : f32 to vector<8x32x32xf32>
    %64 = arith.select %62, %58, %63 : vector<8x32x32xi1>, vector<8x32x32xf32>
    %cst_42 = arith.constant dense<0xFF800000> : vector<8x32xf32>
    %65 = vector.multi_reduction <maximumf>, %64, %cst_42 [2] : vector<8x32x32xf32> to vector<8x32xf32>
    %66 = vector.shape_cast %65 : vector<8x32xf32> to vector<8x32x1xf32>
    %67 = vector.broadcast %66 : vector<8x32x1xf32> to vector<8x32x32xf32>
    %68 = arith.subf %64, %67 : vector<8x32x32xf32>
    %69 = math.exp %68 : vector<8x32x32xf32>
    %cst_43 = arith.constant dense<0.000000e+00> : vector<8x32xf32>
    %70 = vector.multi_reduction <add>, %69, %cst_43 [2] : vector<8x32x32xf32> to vector<8x32xf32>
    %71 = vector.shape_cast %70 : vector<8x32xf32> to vector<8x32x1xf32>
    %72 = tpu.reciprocal %71 {approx = true} : vector<8x32x1xf32> -> vector<8x32x1xf32>
    %73 = vector.broadcast %72 : vector<8x32x1xf32> to vector<8x32x32xf32>
    %74 = arith.mulf %69, %73 : vector<8x32x32xf32>
    %75 = arith.truncf %74 : vector<8x32x32xf32> to vector<8x32x32xbf16>
    "tpu.trace_start"() <{level = 10 : i32, message = "bts,bsd->btd"}> : () -> ()
    %cst_44 = arith.constant dense<0.000000e+00> : vector<8x32x128xf32>
    %76 = tpu.matmul %75, %44, %cst_44 {dimension_numbers = #tpu.dot_dimension_numbers<[2], [1], [1], [2], [0, 0, 0, 1, 1, 2], [0], [0]>} : vector<8x32x32xbf16>, vector<8x32x128xbf16>, vector<8x32x128xf32> -> vector<8x32x128xf32>
    "tpu.trace_stop"() : () -> ()
    %77 = arith.addf %54, %76 : vector<8x32x128xf32>
    %78 = vector.shape_cast %77 : vector<8x32x128xf32> to vector<256x128xf32>
    %79 = arith.truncf %78 : vector<256x128xf32> to vector<256x128xbf16>
    %c0_45 = arith.constant 0 : index
    %c0_46 = arith.constant 0 : index
    %80 = vector.load %arg14[%c0_45, %c0_46] : memref<128x256xbf16, #tpu.memory_space<vmem>>, vector<128x256xbf16>
    %cst_47 = arith.constant dense<0.000000e+00> : vector<256x256xf32>
    %81 = tpu.matmul %79, %80, %cst_47 {dimension_numbers = #tpu.dot_dimension_numbers<[1], [0], [0], [1], [0, 0, 1, 1], [], []>} : vector<256x128xbf16>, vector<128x256xbf16>, vector<256x256xf32> -> vector<256x256xf32>
    %c0_48 = arith.constant 0 : index
    %c0_49 = arith.constant 0 : index
    %82 = vector.load %arg15[%c0_48, %c0_49] : memref<1x256xf32, #tpu.memory_space<vmem>>, vector<1x256xf32>
    %83 = vector.broadcast %82 : vector<1x256xf32> to vector<256x256xf32>
    %84 = arith.addf %81, %83 : vector<256x256xf32>
    %85 = vector.shape_cast %84 : vector<256x256xf32> to vector<8x32x256xf32>
    %c0_50 = arith.constant 0 : index
    %c0_51 = arith.constant 0 : index
    %c0_52 = arith.constant 0 : index
    %86 = vector.load %arg16[%c0_50, %c0_51, %c0_52] : memref<8x32x256xf32, #tpu.memory_space<vmem>>, vector<8x32x256xf32>
    tpu.vector_store %arg16[%c0_50, %c0_51, %c0_52], %85 {strides = array<i32>} : memref<8x32x256xf32, #tpu.memory_space<vmem>>, vector<8x32x256xf32>,
    return
  }
  func.func @transform_0(%arg0: i32) -> (i32, i32, i32) {
    %c0_i32 = arith.constant 0 : i32
    %c0_i32_0 = arith.constant 0 : i32
    %c0_i32_1 = arith.constant 0 : i32
    return %arg0, %c0_i32, %c0_i32_0 : i32, i32, i32
  }
  func.func @transform_1(%arg0: i32) -> (i32, i32, i32) {
    %c0_i32 = arith.constant 0 : i32
    %c0_i32_0 = arith.constant 0 : i32
    %c0_i32_1 = arith.constant 0 : i32
    return %arg0, %c0_i32, %c0_i32_0 : i32, i32, i32
  }
  func.func @transform_2(%arg0: i32) -> (i32, i32, i32) {
    %c0_i32 = arith.constant 0 : i32
    %c0_i32_0 = arith.constant 0 : i32
    %c0_i32_1 = arith.constant 0 : i32
    return %arg0, %c0_i32, %c0_i32_0 : i32, i32, i32
  }
  func.func @transform_3(%arg0: i32) -> (i32, i32, i32) {
    %c0_i32 = arith.constant 0 : i32
    %c0_i32_0 = arith.constant 0 : i32
    %c0_i32_1 = arith.constant 0 : i32
    return %arg0, %c0_i32, %c0_i32_0 : i32, i32, i32
  }
  func.func @transform_4(%arg0: i32) -> (i32, i32, i32) {
    %c0_i32 = arith.constant 0 : i32
    %c0_i32_0 = arith.constant 0 : i32
    %c0_i32_1 = arith.constant 0 : i32
    return %arg0, %c0_i32, %c0_i32_0 : i32, i32, i32
  }
  func.func @transform_5(%arg0: i32) -> (i32, i32) {
    %c0_i32 = arith.constant 0 : i32
    %c0_i32_0 = arith.constant 0 : i32
    %c0_i32_1 = arith.constant 0 : i32
    return %c0_i32, %c0_i32_0 : i32, i32
  }
  func.func @transform_6(%arg0: i32) -> (i32, i32) {
    %c0_i32 = arith.constant 0 : i32
    %c0_i32_0 = arith.constant 0 : i32
    %c0_i32_1 = arith.constant 0 : i32
    return %c0_i32, %c0_i32_0 : i32, i32
  }
  func.func @transform_7(%arg0: i32) -> (i32, i32) {
    %c0_i32 = arith.constant 0 : i32
    %c0_i32_0 = arith.constant 0 : i32
    %c0_i32_1 = arith.constant 0 : i32
    return %c0_i32, %c0_i32_0 : i32, i32
  }
  func.func @transform_8(%arg0: i32) -> (i32, i32) {
    %c0_i32 = arith.constant 0 : i32
    %c0_i32_0 = arith.constant 0 : i32
    %c0_i32_1 = arith.constant 0 : i32
    return %c0_i32, %c0_i32_0 : i32, i32
  }
  func.func @transform_9(%arg0: i32) -> (i32, i32) {
    %c0_i32 = arith.constant 0 : i32
    %c0_i32_0 = arith.constant 0 : i32
    %c0_i32_1 = arith.constant 0 : i32
    return %c0_i32, %c0_i32_0 : i32, i32
  }
  func.func @transform_10(%arg0: i32) -> (i32, i32) {
    %c0_i32 = arith.constant 0 : i32
    %c0_i32_0 = arith.constant 0 : i32
    %c0_i32_1 = arith.constant 0 : i32
    return %c0_i32, %c0_i32_0 : i32, i32
  }
  func.func @transform_11(%arg0: i32) -> (i32, i32) {
    %c0_i32 = arith.constant 0 : i32
    %c0_i32_0 = arith.constant 0 : i32
    %c0_i32_1 = arith.constant 0 : i32
    return %c0_i32, %c0_i32_0 : i32, i32
  }
  func.func @transform_12(%arg0: i32) -> (i32, i32) {
    %c0_i32 = arith.constant 0 : i32
    %c0_i32_0 = arith.constant 0 : i32
    %c0_i32_1 = arith.constant 0 : i32
    return %c0_i32, %c0_i32_0 : i32, i32
  }
  func.func @transform_13(%arg0: i32) -> (i32, i32) {
    %c0_i32 = arith.constant 0 : i32
    %c0_i32_0 = arith.constant 0 : i32
    %c0_i32_1 = arith.constant 0 : i32
    return %c0_i32, %c0_i32_0 : i32, i32
  }
  func.func @transform_14(%arg0: i32) -> (i32, i32) {
    %c0_i32 = arith.constant 0 : i32
    %c0_i32_0 = arith.constant 0 : i32
    %c0_i32_1 = arith.constant 0 : i32
    return %c0_i32, %c0_i32_0 : i32, i32
  }
  func.func @transform_15(%arg0: i32) -> (i32, i32, i32) {
    %c0_i32 = arith.constant 0 : i32
    %c0_i32_0 = arith.constant 0 : i32
    %c0_i32_1 = arith.constant 0 : i32
    return %arg0, %c0_i32, %c0_i32_0 : i32, i32, i32
  }
}

</mosaic_0001>

<llo_original>
// kernel: tpu_custom_call.1
$region0: #{tpu_custom_call.1}
  #allocation0 [shape = 'u32[]', space=smem, size = 0x4, offset = 0x4, fixed_abs, tag = 'smem constant byte address 0x4 - core index']
  #allocation1 [shape = 'u32[144,128]{1,0:T(1,128)}', space=vmem, size = 0x12000, scoped, tag = 'internal scratch']
  %s0 = inlined_call_operand.hbm [shape: s32[16,1,32], index: 0, kind: input, shape index: {}]
  %s1 = inlined_call_operand.hbm [shape: bf16[16,32,128], index: 1, kind: input, shape index: {}]
  %s2 = inlined_call_operand.hbm [shape: bf16[16,32,128], index: 2, kind: input, shape index: {}]
  %s3 = inlined_call_operand.hbm [shape: bf16[16,32,128], index: 3, kind: input, shape index: {}]
  %s4 = inlined_call_operand.hbm [shape: bf16[16,32,128], index: 4, kind: input, shape index: {}]
  %s5 = inlined_call_operand.hbm [shape: bf16[128,256], index: 5, kind: input, shape index: {}]
  %s6 = inlined_call_operand.hbm [shape: bf16[128,256], index: 6, kind: input, shape index: {}]
  %s7 = inlined_call_operand.hbm [shape: bf16[128,128], index: 7, kind: input, shape index: {}]
  %s8 = inlined_call_operand.hbm [shape: bf16[256,128], index: 8, kind: input, shape index: {}]
  %s9 = inlined_call_operand.vmem [shape: f32[1,128], index: 9, kind: input, shape index: {}]
  %s10 = inlined_call_operand.hbm [shape: bf16[128,128], index: 10, kind: input, shape index: {}]
  %s11 = inlined_call_operand.hbm [shape: bf16[256,128], index: 11, kind: input, shape index: {}]
  %s12 = inlined_call_operand.vmem [shape: f32[1,128], index: 12, kind: input, shape index: {}]
  %s13 = inlined_call_operand.hbm [shape: bf16[128,256], index: 13, kind: input, shape index: {}]
  %s14 = inlined_call_operand.vmem [shape: f32[1,256], index: 14, kind: input, shape index: {}]
  %s15 = inlined_call_operand.hbm [shape: f32[16,32,256], index: 15, kind: output, shape index: {}]
  %s16 = sld [smem:[#allocation0]]
  $region141: #{tpu_custom_call.1} parent=0
    _
  %s18 = ssub.s32 1, %s16
  %s19 = scalar_select 0, %s18, %s16
  $region1: #{tpu_custom_call.1} parent=0
    #allocation2 [shape = 'u8[8192]{0}', space=vmem, size = 0x2000, scoped, tag = 'input window, operand 0']
    #allocation3 [shape = 's32[2]{0}', space=sflag, size = 0x8, scoped, tag = 'scoped memory for tpu_custom_call.1']
    #allocation4 [shape = 's32[2]{0}', space=sflag, size = 0x8, scoped, tag = 'scoped memory for tpu_custom_call.1']
    #allocation5 [shape = 'u8[131072]{0}', space=vmem, size = 0x20000, scoped, tag = 'input window, operand 1']
    #allocation6 [shape = 's32[2]{0}', space=sflag, size = 0x8, scoped, tag = 'scoped memory for tpu_custom_call.1']
    #allocation7 [shape = 'u8[131072]{0}', space=vmem, size = 0x20000, scoped, tag = 'input window, operand 2']
    #allocation8 [shape = 'u8[131072]{0}', space=vmem, size = 0x20000, scoped, tag = 'input window, operand 3']
    #allocation9 [shape = 's32[2]{0}', space=sflag, size = 0x8, scoped, tag = 'scoped memory for tpu_custom_call.1']
    #allocation10 [shape = 'u8[131072]{0}', space=vmem, size = 0x20000, scoped, tag = 'input window, operand 4']
    #allocation11 [shape = 'u8[65536]{0}', space=vmem, size = 0x10000, scoped, tag = 'input window, operand 5, single buffered']
    #allocation12 [shape = 's32[1]{0}', space=sflag, size = 0x4, scoped, tag = 'scoped memory for tpu_custom_call.1']
    #allocation13 [shape = 'u8[65536]{0}', space=vmem, size = 0x10000, scoped, tag = 'input window, operand 6, single buffered']
    #allocation14 [shape = 'u8[32768]{0}', space=vmem, size = 0x8000, scoped, tag = 'input window, operand 7, single buffered']
    #allocation15 [shape = 's32[1]{0}', space=sflag, size = 0x4, scoped, tag = 'scoped memory for tpu_custom_call.1']
    #allocation16 [shape = 'u8[65536]{0}', space=vmem, size = 0x10000, scoped, tag = 'input window, operand 8, single buffered']
    #allocation17 [shape = 'u8[32768]{0}', space=vmem, size = 0x8000, scoped, tag = 'input window, operand 10, single buffered']
    #allocation18 [shape = 's32[1]{0}', space=sflag, size = 0x4, scoped, tag = 'scoped memory for tpu_custom_call.1']
    #allocation19 [shape = 'u8[65536]{0}', space=vmem, size = 0x10000, scoped, tag = 'input window, operand 11, single buffered']
    #allocation20 [shape = 'u8[65536]{0}', space=vmem, size = 0x10000, scoped, tag = 'input window, operand 13, single buffered']
    #allocation21 [shape = 's32[1]{0}', space=sflag, size = 0x4, scoped, tag = 'scoped memory for tpu_custom_call.1']
    #allocation22 [shape = 'u8[524288]{0}', space=vmem, size = 0x80000, scoped, tag = 'output window, operand 0']
    %20 = vsyncpa [#allocation3], 0
    %s21 = scalar_lea.sflag [#allocation3], 1
    %22 = vsyncpa %s21, 0
    %23 = vsyncpa [#allocation6], 0
    %s24 = scalar_lea.sflag [#allocation6], 1
    %25 = vsyncpa %s24, 0
    %26 = vsyncpa [#allocation9], 0
    %s27 = scalar_lea.sflag [#allocation9], 1
    %28 = vsyncpa %s27, 0
    %29 = vsyncpa [#allocation12], 0
    %30 = vsyncpa [#allocation15], 0
    %31 = vsyncpa [#allocation18], 0
    %32 = vsyncpa [#allocation21], 0
    %33 = vsyncpa [#allocation4], 0
    %s34 = scalar_lea.sflag [#allocation4], 1
    %35 = vsyncpa %s34, 0
    loop: start=0, step=1, limit=4
    $region2: #{tpu_custom_call.1} parent=1 // loop_pre_header
      _
    $region3: #{tpu_custom_call.1} parent=1 // loop_header
      %s37 = sphi 0, %s41
      %p38 = scmp.ge.s32.totalorder %s37, 4
      %s47 = sphi 0, %s49
      %s50 = sphi 0, %s47
      %s51 = sphi 0, %s50
      %s67 = sphi 0, %s51
      %s73 = sphi 0, %s75
      %s76 = sphi 0, %s73
      %s77 = sphi 0, %s76
      %s93 = sphi 0, %s77
      %s99 = sphi 0, %s101
      %s102 = sphi 0, %s99
      %s103 = sphi 0, %s102
      %s119 = sphi 0, %s103
      %s125 = sphi 0, %s127
      %s128 = sphi 0, %s125
      %s129 = sphi 0, %s128
      %s145 = sphi 0, %s129
      %s151 = sphi 0, %s153
      %s154 = sphi 0, %s151
      %s155 = sphi 0, %s154
      %s171 = sphi 0, %s155
      %s175 = sphi 0, %s175
      %s177 = sphi 0, %s175
      %s178 = sphi 0, %s177
      %s192 = sphi 0, %s178
      %s196 = sphi 0, %s196
      %s198 = sphi 0, %s196
      %s199 = sphi 0, %s198
      %s213 = sphi 0, %s199
      %s217 = sphi 0, %s217
      %s219 = sphi 0, %s217
      %s220 = sphi 0, %s219
      %s234 = sphi 0, %s220
      %s238 = sphi 0, %s238
      %s240 = sphi 0, %s238
      %s241 = sphi 0, %s240
      %s255 = sphi 0, %s241
      %s259 = sphi 0, %s259
      %s261 = sphi 0, %s259
      %s262 = sphi 0, %s261
      %s276 = sphi 0, %s262
      %s280 = sphi 0, %s280
      %s282 = sphi 0, %s280
      %s283 = sphi 0, %s282
      %s297 = sphi 0, %s283
      %s301 = sphi 0, %s301
      %s303 = sphi 0, %s301
      %s304 = sphi 0, %s303
      %s318 = sphi 0, %s304
      %s322 = sphi 0, %s322
      %s324 = sphi 0, %s322
      %s325 = sphi 0, %s324
      %s339 = sphi 0, %s325
      %s343 = sphi 0, %s343
      %s345 = sphi 0, %s343
      %s346 = sphi 0, %s345
      %s360 = sphi 0, %s346
      %s364 = sphi 0, %s364
      %s366 = sphi 0, %s364
      %s367 = sphi 0, %s366
      %s381 = sphi 0, %s367
      %s387 = sphi 0, %s389
      %s390 = sphi 0, %s387
      %s391 = sphi 0, %s390
      %s407 = sphi 0, %s391
    $region4: #{tpu_custom_call.1} parent=1 // loop_header_branch
      %40 = sbr.rel (%p38) target = $region8
    $region5: #{tpu_custom_call.1} parent=1 // loop_body
      %s42 = ssub.s32 %s37, 1
      %s43 = ssub.s32 %s37, 2
      %s44 = sadd.s32 %s37, 1
      %s45 = ssub.s32 %s37, %s44
      %p46 = scmp.eq.s32.totalorder %s45, 0
      %s48 = sadd.s32 %s47, 1
      %s49 = scalar_select %p46, %s47, %s48
      %p52 = pneg %p46
      %p53 = scmp.eq.s32.totalorder %s37, 1
      %p54 = por %p52, %p53
      %p55 = scmp.ne.s32.totalorder %s47, %s50
      %p56 = scmp.eq.s32.totalorder %s37, 0
      %p57 = por %p55, %p56
      %p58 = scmp.ne.s32.totalorder %s47, %s50
      %p59 = scmp.eq.s32.totalorder %s42, 1
      %p60 = por %p58, %p59
      %p61 = scmp.ne.s32.totalorder %s50, %s51
      %p62 = scmp.eq.s32.totalorder %s42, 0
      %p63 = por %p61, %p62
      %p64 = scmp.ne.s32.totalorder %s50, %s51
      %p65 = scmp.eq.s32.totalorder %s43, 1
      %p66 = por %p64, %p65
      %p68 = scmp.ne.s32.totalorder %s51, %s67
      %p69 = scmp.eq.s32.totalorder %s43, 0
      %p70 = por %p68, %p69
      %s71 = ssub.s32 %s37, %s44
      %p72 = scmp.eq.s32.totalorder %s71, 0
      %s74 = sadd.s32 %s73, 1
      %s75 = scalar_select %p72, %s73, %s74
      %p78 = pneg %p72
      %p79 = scmp.eq.s32.totalorder %s37, 1
      %p80 = por %p78, %p79
      %p81 = scmp.ne.s32.totalorder %s73, %s76
      %p82 = scmp.eq.s32.totalorder %s37, 0
      %p83 = por %p81, %p82
      %p84 = scmp.ne.s32.totalorder %s73, %s76
      %p85 = scmp.eq.s32.totalorder %s42, 1
      %p86 = por %p84, %p85
      %p87 = scmp.ne.s32.totalorder %s76, %s77
      %p88 = scmp.eq.s32.totalorder %s42, 0
      %p89 = por %p87, %p88
      %p90 = scmp.ne.s32.totalorder %s76, %s77
      %p91 = scmp.eq.s32.totalorder %s43, 1
      %p92 = por %p90, %p91
      %p94 = scmp.ne.s32.totalorder %s77, %s93
      %p95 = scmp.eq.s32.totalorder %s43, 0
      %p96 = por %p94, %p95
      %s97 = ssub.s32 %s37, %s44
      %p98 = scmp.eq.s32.totalorder %s97, 0
      %s100 = sadd.s32 %s99, 1
      %s101 = scalar_select %p98, %s99, %s100
      %p104 = pneg %p98
      %p105 = scmp.eq.s32.totalorder %s37, 1
      %p106 = por %p104, %p105
      %p107 = scmp.ne.s32.totalorder %s99, %s102
      %p108 = scmp.eq.s32.totalorder %s37, 0
      %p109 = por %p107, %p108
      %p110 = scmp.ne.s32.totalorder %s99, %s102
      %p111 = scmp.eq.s32.totalorder %s42, 1
      %p112 = por %p110, %p111
      %p113 = scmp.ne.s32.totalorder %s102, %s103
      %p114 = scmp.eq.s32.totalorder %s42, 0
      %p115 = por %p113, %p114
      %p116 = scmp.ne.s32.totalorder %s102, %s103
      %p117 = scmp.eq.s32.totalorder %s43, 1
      %p118 = por %p116, %p117
      %p120 = scmp.ne.s32.totalorder %s103, %s119
      %p121 = scmp.eq.s32.totalorder %s43, 0
      %p122 = por %p120, %p121
      %s123 = ssub.s32 %s37, %s44
      %p124 = scmp.eq.s32.totalorder %s123, 0
      %s126 = sadd.s32 %s125, 1
      %s127 = scalar_select %p124, %s125, %s126
      %p130 = pneg %p124
      %p131 = scmp.eq.s32.totalorder %s37, 1
      %p132 = por %p130, %p131
      %p133 = scmp.ne.s32.totalorder %s125, %s128
      %p134 = scmp.eq.s32.totalorder %s37, 0
      %p135 = por %p133, %p134
      %p136 = scmp.ne.s32.totalorder %s125, %s128
      %p137 = scmp.eq.s32.totalorder %s42, 1
      %p138 = por %p136, %p137
      %p139 = scmp.ne.s32.totalorder %s128, %s129
      %p140 = scmp.eq.s32.totalorder %s42, 0
      %p141 = por %p139, %p140
      %p142 = scmp.ne.s32.totalorder %s128, %s129
      %p143 = scmp.eq.s32.totalorder %s43, 1
      %p144 = por %p142, %p143
      %p146 = scmp.ne.s32.totalorder %s129, %s145
      %p147 = scmp.eq.s32.totalorder %s43, 0
      %p148 = por %p146, %p147
      %s149 = ssub.s32 %s37, %s44
      %p150 = scmp.eq.s32.totalorder %s149, 0
      %s152 = sadd.s32 %s151, 1
      %s153 = scalar_select %p150, %s151, %s152
      %p156 = pneg %p150
      %p157 = scmp.eq.s32.totalorder %s37, 1
      %p158 = por %p156, %p157
      %p159 = scmp.ne.s32.totalorder %s151, %s154
      %p160 = scmp.eq.s32.totalorder %s37, 0
      %p161 = por %p159, %p160
      %p162 = scmp.ne.s32.totalorder %s151, %s154
      %p163 = scmp.eq.s32.totalorder %s42, 1
      %p164 = por %p162, %p163
      %p165 = scmp.ne.s32.totalorder %s154, %s155
      %p166 = scmp.eq.s32.totalorder %s42, 0
      %p167 = por %p165, %p166
      %p168 = scmp.ne.s32.totalorder %s154, %s155
      %p169 = scmp.eq.s32.totalorder %s43, 1
      %p170 = por %p168, %p169
      %p172 = scmp.ne.s32.totalorder %s155, %s171
      %p173 = scmp.eq.s32.totalorder %s43, 0
      %p174 = por %p172, %p173
      %s176 = sadd.s32 %s175, 1
      %p179 = scmp.eq.s32.totalorder %s37, 1
      %p180 = scmp.ne.s32.totalorder %s175, %s177
      %p181 = scmp.eq.s32.totalorder %s37, 0
      %p182 = por %p180, %p181
      %p183 = scmp.ne.s32.totalorder %s175, %s177
      %p184 = scmp.eq.s32.totalorder %s42, 1
      %p185 = por %p183, %p184
      %p186 = scmp.ne.s32.totalorder %s177, %s178
      %p187 = scmp.eq.s32.totalorder %s42, 0
      %p188 = por %p186, %p187
      %p189 = scmp.ne.s32.totalorder %s177, %s178
      %p190 = scmp.eq.s32.totalorder %s43, 1
      %p191 = por %p189, %p190
      %p193 = scmp.ne.s32.totalorder %s178, %s192
      %p194 = scmp.eq.s32.totalorder %s43, 0
      %p195 = por %p193, %p194
      %s197 = sadd.s32 %s196, 1
      %p200 = scmp.eq.s32.totalorder %s37, 1
      %p201 = scmp.ne.s32.totalorder %s196, %s198
      %p202 = scmp.eq.s32.totalorder %s37, 0
      %p203 = por %p201, %p202
      %p204 = scmp.ne.s32.totalorder %s196, %s198
      %p205 = scmp.eq.s32.totalorder %s42, 1
      %p206 = por %p204, %p205
      %p207 = scmp.ne.s32.totalorder %s198, %s199
      %p208 = scmp.eq.s32.totalorder %s42, 0
      %p209 = por %p207, %p208
      %p210 = scmp.ne.s32.totalorder %s198, %s199
      %p211 = scmp.eq.s32.totalorder %s43, 1
      %p212 = por %p210, %p211
      %p214 = scmp.ne.s32.totalorder %s199, %s213
      %p215 = scmp.eq.s32.totalorder %s43, 0
      %p216 = por %p214, %p215
      %s218 = sadd.s32 %s217, 1
      %p221 = scmp.eq.s32.totalorder %s37, 1
      %p222 = scmp.ne.s32.totalorder %s217, %s219
      %p223 = scmp.eq.s32.totalorder %s37, 0
      %p224 = por %p222, %p223
      %p225 = scmp.ne.s32.totalorder %s217, %s219
      %p226 = scmp.eq.s32.totalorder %s42, 1
      %p227 = por %p225, %p226
      %p228 = scmp.ne.s32.totalorder %s219, %s220
      %p229 = scmp.eq.s32.totalorder %s42, 0
      %p230 = por %p228, %p229
      %p231 = scmp.ne.s32.totalorder %s219, %s220
      %p232 = scmp.eq.s32.totalorder %s43, 1
      %p233 = por %p231, %p232
      %p235 = scmp.ne.s32.totalorder %s220, %s234
      %p236 = scmp.eq.s32.totalorder %s43, 0
      %p237 = por %p235, %p236
      %s239 = sadd.s32 %s238, 1
      %p242 = scmp.eq.s32.totalorder %s37, 1
      %p243 = scmp.ne.s32.totalorder %s238, %s240
      %p244 = scmp.eq.s32.totalorder %s37, 0
      %p245 = por %p243, %p244
      %p246 = scmp.ne.s32.totalorder %s238, %s240
      %p247 = scmp.eq.s32.totalorder %s42, 1
      %p248 = por %p246, %p247
      %p249 = scmp.ne.s32.totalorder %s240, %s241
      %p250 = scmp.eq.s32.totalorder %s42, 0
      %p251 = por %p249, %p250
      %p252 = scmp.ne.s32.totalorder %s240, %s241
      %p253 = scmp.eq.s32.totalorder %s43, 1
      %p254 = por %p252, %p253
      %p256 = scmp.ne.s32.totalorder %s241, %s255
      %p257 = scmp.eq.s32.totalorder %s43, 0
      %p258 = por %p256, %p257
      %s260 = sadd.s32 %s259, 1
      %p263 = scmp.eq.s32.totalorder %s37, 1
      %p264 = scmp.ne.s32.totalorder %s259, %s261
      %p265 = scmp.eq.s32.totalorder %s37, 0
      %p266 = por %p264, %p265
      %p267 = scmp.ne.s32.totalorder %s259, %s261
      %p268 = scmp.eq.s32.totalorder %s42, 1
      %p269 = por %p267, %p268
      %p270 = scmp.ne.s32.totalorder %s261, %s262
      %p271 = scmp.eq.s32.totalorder %s42, 0
      %p272 = por %p270, %p271
      %p273 = scmp.ne.s32.totalorder %s261, %s262
      %p274 = scmp.eq.s32.totalorder %s43, 1
      %p275 = por %p273, %p274
      %p277 = scmp.ne.s32.totalorder %s262, %s276
      %p278 = scmp.eq.s32.totalorder %s43, 0
      %p279 = por %p277, %p278
      %s281 = sadd.s32 %s280, 1
      %p284 = scmp.eq.s32.totalorder %s37, 1
      %p285 = scmp.ne.s32.totalorder %s280, %s282
      %p286 = scmp.eq.s32.totalorder %s37, 0
      %p287 = por %p285, %p286
      %p288 = scmp.ne.s32.totalorder %s280, %s282
      %p289 = scmp.eq.s32.totalorder %s42, 1
      %p290 = por %p288, %p289
      %p291 = scmp.ne.s32.totalorder %s282, %s283
      %p292 = scmp.eq.s32.totalorder %s42, 0
      %p293 = por %p291, %p292
      %p294 = scmp.ne.s32.totalorder %s282, %s283
      %p295 = scmp.eq.s32.totalorder %s43, 1
      %p296 = por %p294, %p295
      %p298 = scmp.ne.s32.totalorder %s283, %s297
      %p299 = scmp.eq.s32.totalorder %s43, 0
      %p300 = por %p298, %p299
      %s302 = sadd.s32 %s301, 1
      %p305 = scmp.eq.s32.totalorder %s37, 1
      %p306 = scmp.ne.s32.totalorder %s301, %s303
      %p307 = scmp.eq.s32.totalorder %s37, 0
      %p308 = por %p306, %p307
      %p309 = scmp.ne.s32.totalorder %s301, %s303
      %p310 = scmp.eq.s32.totalorder %s42, 1
      %p311 = por %p309, %p310
      %p312 = scmp.ne.s32.totalorder %s303, %s304
      %p313 = scmp.eq.s32.totalorder %s42, 0
      %p314 = por %p312, %p313
      %p315 = scmp.ne.s32.totalorder %s303, %s304
      %p316 = scmp.eq.s32.totalorder %s43, 1
      %p317 = por %p315, %p316
      %p319 = scmp.ne.s32.totalorder %s304, %s318
      %p320 = scmp.eq.s32.totalorder %s43, 0
      %p321 = por %p319, %p320
      %s323 = sadd.s32 %s322, 1
      %p326 = scmp.eq.s32.totalorder %s37, 1
      %p327 = scmp.ne.s32.totalorder %s322, %s324
      %p328 = scmp.eq.s32.totalorder %s37, 0
      %p329 = por %p327, %p328
      %p330 = scmp.ne.s32.totalorder %s322, %s324
      %p331 = scmp.eq.s32.totalorder %s42, 1
      %p332 = por %p330, %p331
      %p333 = scmp.ne.s32.totalorder %s324, %s325
      %p334 = scmp.eq.s32.totalorder %s42, 0
      %p335 = por %p333, %p334
      %p336 = scmp.ne.s32.totalorder %s324, %s325
      %p337 = scmp.eq.s32.totalorder %s43, 1
      %p338 = por %p336, %p337
      %p340 = scmp.ne.s32.totalorder %s325, %s339
      %p341 = scmp.eq.s32.totalorder %s43, 0
      %p342 = por %p340, %p341
      %s344 = sadd.s32 %s343, 1
      %p347 = scmp.eq.s32.totalorder %s37, 1
      %p348 = scmp.ne.s32.totalorder %s343, %s345
      %p349 = scmp.eq.s32.totalorder %s37, 0
      %p350 = por %p348, %p349
      %p351 = scmp.ne.s32.totalorder %s343, %s345
      %p352 = scmp.eq.s32.totalorder %s42, 1
      %p353 = por %p351, %p352
      %p354 = scmp.ne.s32.totalorder %s345, %s346
      %p355 = scmp.eq.s32.totalorder %s42, 0
      %p356 = por %p354, %p355
      %p357 = scmp.ne.s32.totalorder %s345, %s346
      %p358 = scmp.eq.s32.totalorder %s43, 1
      %p359 = por %p357, %p358
      %p361 = scmp.ne.s32.totalorder %s346, %s360
      %p362 = scmp.eq.s32.totalorder %s43, 0
      %p363 = por %p361, %p362
      %s365 = sadd.s32 %s364, 1
      %p368 = scmp.eq.s32.totalorder %s37, 1
      %p369 = scmp.ne.s32.totalorder %s364, %s366
      %p370 = scmp.eq.s32.totalorder %s37, 0
      %p371 = por %p369, %p370
      %p372 = scmp.ne.s32.totalorder %s364, %s366
      %p373 = scmp.eq.s32.totalorder %s42, 1
      %p374 = por %p372, %p373
      %p375 = scmp.ne.s32.totalorder %s366, %s367
      %p376 = scmp.eq.s32.totalorder %s42, 0
      %p377 = por %p375, %p376
      %p378 = scmp.ne.s32.totalorder %s366, %s367
      %p379 = scmp.eq.s32.totalorder %s43, 1
      %p380 = por %p378, %p379
      %p382 = scmp.ne.s32.totalorder %s367, %s381
      %p383 = scmp.eq.s32.totalorder %s43, 0
      %p384 = por %p382, %p383
      %s385 = ssub.s32 %s37, %s44
      %p386 = scmp.eq.s32.totalorder %s385, 0
      %s388 = sadd.s32 %s387, 1
      %s389 = scalar_select %p386, %s387, %s388
      %p392 = pneg %p386
      %p393 = scmp.eq.s32.totalorder %s37, 1
      %p394 = por %p392, %p393
      %p395 = scmp.ne.s32.totalorder %s387, %s390
      %p396 = scmp.eq.s32.totalorder %s37, 0
      %p397 = por %p395, %p396
      %p398 = scmp.ne.s32.totalorder %s387, %s390
      %p399 = scmp.eq.s32.totalorder %s42, 1
      %p400 = por %p398, %p399
      %p401 = scmp.ne.s32.totalorder %s390, %s391
      %p402 = scmp.eq.s32.totalorder %s42, 0
      %p403 = por %p401, %p402
      %p404 = scmp.ne.s32.totalorder %s390, %s391
      %p405 = scmp.eq.s32.totalorder %s43, 1
      %p406 = por %p404, %p405
      %p408 = scmp.ne.s32.totalorder %s391, %s407
      %p409 = scmp.eq.s32.totalorder %s43, 0
      %p410 = por %p408, %p409
      %p411 = scmp.le.s32.totalorder 1, %s37
      %p412 = scmp.lt.s32.totalorder %s37, 3
      %p413 = pnand %p411, %p412
      %p414 = pneg %p413
      // Predicated region
      $region9: #{tpu_custom_call.1} parent=5 // pred_check
        _
      $region10: #{tpu_custom_call.1} parent=5 // pred_check_branch
        %416 = sbr.rel (%p413) target = $region12
      $region11: #{tpu_custom_call.1} parent=5 // pred_region
        %s417 = ssub.s32 %s37, 1
        // Predicated region
        $region13: #{tpu_custom_call.1} parent=11 // pred_check
          %p418 = pneg %p188
        $region14: #{tpu_custom_call.1} parent=11 // pred_check_branch
          %420 = sbr.rel (%p418) target = $region16
        $region15: #{tpu_custom_call.1} parent=11 // pred_region
          %s422 = ssub.s32 2048, 2048
          %423 = vsyncadd [#allocation12], %s422
          %s424 = sshll.u32 [#allocation11], 4
          %s425 = int_to_ptr.vmem [resolvable:$true] %s424
          %430 = dma.hbm_to_vmem [thread:$0]  %s5, 2048, %s425, [#allocation12], 128, 128, 8
        $region16: #{tpu_custom_call.1} parent=11 // pred_fallthru
          _
        // Predicated region
        $region17: #{tpu_custom_call.1} parent=11 // pred_check
          %p431 = pneg %p209
        $region18: #{tpu_custom_call.1} parent=11 // pred_check_branch
          %433 = sbr.rel (%p431) target = $region20
        $region19: #{tpu_custom_call.1} parent=11 // pred_region
          %s435 = ssub.s32 2048, 2048
          %436 = vsyncadd [#allocation12], %s435
          %s437 = sshll.u32 [#allocation13], 4
          %s438 = int_to_ptr.vmem [resolvable:$true] %s437
          %443 = dma.hbm_to_vmem [thread:$0]  %s6, 2048, %s438, [#allocation12], 128, 128, 8
        $region20: #{tpu_custom_call.1} parent=11 // pred_fallthru
          _
        // Predicated region
        $region21: #{tpu_custom_call.1} parent=11 // pred_check
          %p444 = pneg %p230
        $region22: #{tpu_custom_call.1} parent=11 // pred_check_branch
          %446 = sbr.rel (%p444) target = $region24
        $region23: #{tpu_custom_call.1} parent=11 // pred_region
          %s448 = ssub.s32 1024, 1024
          %449 = vsyncadd [#allocation15], %s448
          %s450 = sshll.u32 [#allocation14], 4
          %s451 = int_to_ptr.vmem [resolvable:$true] %s450
          %456 = dma.hbm_to_vmem [thread:$0]  %s7, 1024, %s451, [#allocation15], 64, 64, 4
        $region24: #{tpu_custom_call.1} parent=11 // pred_fallthru
          _
        // Predicated region
        $region25: #{tpu_custom_call.1} parent=11 // pred_check
          %p457 = pneg %p251
        $region26: #{tpu_custom_call.1} parent=11 // pred_check_branch
          %459 = sbr.rel (%p457) target = $region28
        $region27: #{tpu_custom_call.1} parent=11 // pred_region
          %s461 = ssub.s32 2048, 2048
          %462 = vsyncadd [#allocation15], %s461
          %s463 = sshll.u32 [#allocation16], 4
          %s464 = int_to_ptr.vmem [resolvable:$true] %s463
          %469 = dma.hbm_to_vmem [thread:$0]  %s8, 2048, %s464, [#allocation15], 64, 64, 4
        $region28: #{tpu_custom_call.1} parent=11 // pred_fallthru
          _
        // Predicated region
        $region29: #{tpu_custom_call.1} parent=11 // pred_check
          %p470 = pneg %p272
        $region30: #{tpu_custom_call.1} parent=11 // pred_check_branch
          %472 = sbr.rel (%p470) target = $region32
        $region31: #{tpu_custom_call.1} parent=11 // pred_region
          _
        $region32: #{tpu_custom_call.1} parent=11 // pred_fallthru
          _
        // Predicated region
        $region33: #{tpu_custom_call.1} parent=11 // pred_check
          %p473 = pneg %p293
        $region34: #{tpu_custom_call.1} parent=11 // pred_check_branch
          %475 = sbr.rel (%p473) target = $region36
        $region35: #{tpu_custom_call.1} parent=11 // pred_region
          %s477 = ssub.s32 1024, 1024
          %478 = vsyncadd [#allocation18], %s477
          %s479 = sshll.u32 [#allocation17], 4
          %s480 = int_to_ptr.vmem [resolvable:$true] %s479
          %485 = dma.hbm_to_vmem [thread:$0]  %s10, 1024, %s480, [#allocation18], 64, 64, 4
        $region36: #{tpu_custom_call.1} parent=11 // pred_fallthru
          _
        // Predicated region
        $region37: #{tpu_custom_call.1} parent=11 // pred_check
          %p486 = pneg %p314
        $region38: #{tpu_custom_call.1} parent=11 // pred_check_branch
          %488 = sbr.rel (%p486) target = $region40
        $region39: #{tpu_custom_call.1} parent=11 // pred_region
          %s490 = ssub.s32 2048, 2048
          %491 = vsyncadd [#allocation18], %s490
          %s492 = sshll.u32 [#allocation19], 4
          %s493 = int_to_ptr.vmem [resolvable:$true] %s492
          %498 = dma.hbm_to_vmem [thread:$0]  %s11, 2048, %s493, [#allocation18], 64, 64, 4
        $region40: #{tpu_custom_call.1} parent=11 // pred_fallthru
          _
        // Predicated region
        $region41: #{tpu_custom_call.1} parent=11 // pred_check
          %p499 = pneg %p335
        $region42: #{tpu_custom_call.1} parent=11 // pred_check_branch
          %501 = sbr.rel (%p499) target = $region44
        $region43: #{tpu_custom_call.1} parent=11 // pred_region
          _
        $region44: #{tpu_custom_call.1} parent=11 // pred_fallthru
          _
        // Predicated region
        $region45: #{tpu_custom_call.1} parent=11 // pred_check
          %p502 = pneg %p356
        $region46: #{tpu_custom_call.1} parent=11 // pred_check_branch
          %504 = sbr.rel (%p502) target = $region48
        $region47: #{tpu_custom_call.1} parent=11 // pred_region
          %s506 = ssub.s32 2048, 2048
          %507 = vsyncadd [#allocation21], %s506
          %s508 = sshll.u32 [#allocation20], 4
          %s509 = int_to_ptr.vmem [resolvable:$true] %s508
          %514 = dma.hbm_to_vmem [thread:$0]  %s13, 2048, %s509, [#allocation21], 128, 128, 8
        $region48: #{tpu_custom_call.1} parent=11 // pred_fallthru
          _
        // Predicated region
        $region49: #{tpu_custom_call.1} parent=11 // pred_check
          %p515 = pneg %p377
        $region50: #{tpu_custom_call.1} parent=11 // pred_check_branch
          %517 = sbr.rel (%p515) target = $region52
        $region51: #{tpu_custom_call.1} parent=11 // pred_region
          _
        $region52: #{tpu_custom_call.1} parent=11 // pred_fallthru
          _
      $region12: #{tpu_custom_call.1} parent=5 // pred_fallthru
        _
      %p518 = scmp.lt.s32.totalorder %s37, 2
      // Predicated region
      $region53: #{tpu_custom_call.1} parent=5 // pred_check
        %p519 = pneg %p518
      $region54: #{tpu_custom_call.1} parent=5 // pred_check_branch
        %521 = sbr.rel (%p519) target = $region56
      $region55: #{tpu_custom_call.1} parent=5 // pred_region
        // Predicated region
        $region57: #{tpu_custom_call.1} parent=55 // pred_check
          %p522 = pneg %p57
        $region58: #{tpu_custom_call.1} parent=55 // pred_check_branch
          %524 = sbr.rel (%p522) target = $region60
        $region59: #{tpu_custom_call.1} parent=55 // pred_region
          %s525 = sand.u32 %s47, 1
          %s526 = scalar_lea.sflag [#allocation3], %s525
          %s527 = sand.u32 %s47, 1
          %s528 = smul.addr %s527, 8
          %s529 = scalar_lea.vmem [#allocation2], %s528
          %s530 = smul.u32 8, %s37
          %s532 = ssub.s32 128, 128
          %533 = vsyncadd %s526, %s532
          %s534 = smul.addr %s530, 16
          %s535 = scalar_lea.hbm %s0, %s534
          %s536 = sshll.u32 %s529, 4
          %s537 = int_to_ptr.vmem [resolvable:$true] %s536
          %542 = dma.hbm_to_vmem [thread:$0]  %s535, 128, %s537, %s526, 16, 16, 1
        $region60: #{tpu_custom_call.1} parent=55 // pred_fallthru
          _
        // Predicated region
        $region61: #{tpu_custom_call.1} parent=55 // pred_check
          %p543 = pneg %p83
        $region62: #{tpu_custom_call.1} parent=55 // pred_check_branch
          %545 = sbr.rel (%p543) target = $region64
        $region63: #{tpu_custom_call.1} parent=55 // pred_region
          %s546 = sand.u32 %s37, 1
          %s547 = scalar_lea.sflag [#allocation6], %s546
          %s548 = sand.u32 %s73, 1
          %s549 = smul.addr %s548, 128
          %s550 = scalar_lea.vmem [#allocation5], %s549
          %s551 = smul.u32 8, %s37
          %s553 = ssub.s32 2048, 2048
          %554 = vsyncadd %s547, %s553
          %s555 = smul.addr %s551, 4
          %s556 = smul.addr %s555, 64
          %s557 = scalar_lea.hbm %s1, %s556
          %s558 = sshll.u32 %s550, 4
          %s559 = int_to_ptr.vmem [resolvable:$true] %s558
          %564 = dma.hbm_to_vmem [thread:$0]  %s557, 2048, %s559, %s547, 64, 64, 4
        $region64: #{tpu_custom_call.1} parent=55 // pred_fallthru
          _
        // Predicated region
        $region65: #{tpu_custom_call.1} parent=55 // pred_check
          %p565 = pneg %p109
        $region66: #{tpu_custom_call.1} parent=55 // pred_check_branch
          %567 = sbr.rel (%p565) target = $region68
        $region67: #{tpu_custom_call.1} parent=55 // pred_region
          %s568 = sand.u32 %s37, 1
          %s569 = scalar_lea.sflag [#allocation6], %s568
          %s570 = sand.u32 %s99, 1
          %s571 = smul.addr %s570, 128
          %s572 = scalar_lea.vmem [#allocation7], %s571
          %s573 = smul.u32 8, %s37
          %s575 = ssub.s32 2048, 2048
          %576 = vsyncadd %s569, %s575
          %s577 = smul.addr %s573, 4
          %s578 = smul.addr %s577, 64
          %s579 = scalar_lea.hbm %s2, %s578
          %s580 = sshll.u32 %s572, 4
          %s581 = int_to_ptr.vmem [resolvable:$true] %s580
          %586 = dma.hbm_to_vmem [thread:$0]  %s579, 2048, %s581, %s569, 64, 64, 4
        $region68: #{tpu_custom_call.1} parent=55 // pred_fallthru
          _
        // Predicated region
        $region69: #{tpu_custom_call.1} parent=55 // pred_check
          %p587 = pneg %p135
        $region70: #{tpu_custom_call.1} parent=55 // pred_check_branch
          %589 = sbr.rel (%p587) target = $region72
        $region71: #{tpu_custom_call.1} parent=55 // pred_region
          %s590 = sand.u32 %s37, 1
          %s591 = scalar_lea.sflag [#allocation9], %s590
          %s592 = sand.u32 %s125, 1
          %s593 = smul.addr %s592, 128
          %s594 = scalar_lea.vmem [#allocation8], %s593
          %s595 = smul.u32 8, %s37
          %s597 = ssub.s32 2048, 2048
          %598 = vsyncadd %s591, %s597
          %s599 = smul.addr %s595, 4
          %s600 = smul.addr %s599, 64
          %s601 = scalar_lea.hbm %s3, %s600
          %s602 = sshll.u32 %s594, 4
          %s603 = int_to_ptr.vmem [resolvable:$true] %s602
          %608 = dma.hbm_to_vmem [thread:$0]  %s601, 2048, %s603, %s591, 64, 64, 4
        $region72: #{tpu_custom_call.1} parent=55 // pred_fallthru
          _
        // Predicated region
        $region73: #{tpu_custom_call.1} parent=55 // pred_check
          %p609 = pneg %p161
        $region74: #{tpu_custom_call.1} parent=55 // pred_check_branch
          %611 = sbr.rel (%p609) target = $region76
        $region75: #{tpu_custom_call.1} parent=55 // pred_region
          %s612 = sand.u32 %s37, 1
          %s613 = scalar_lea.sflag [#allocation9], %s612
          %s614 = sand.u32 %s151, 1
          %s615 = smul.addr %s614, 128
          %s616 = scalar_lea.vmem [#allocation10], %s615
          %s617 = smul.u32 8, %s37
          %s619 = ssub.s32 2048, 2048
          %620 = vsyncadd %s613, %s619
          %s621 = smul.addr %s617, 4
          %s622 = smul.addr %s621, 64
          %s623 = scalar_lea.hbm %s4, %s622
          %s624 = sshll.u32 %s616, 4
          %s625 = int_to_ptr.vmem [resolvable:$true] %s624
          %630 = dma.hbm_to_vmem [thread:$0]  %s623, 2048, %s625, %s613, 64, 64, 4
        $region76: #{tpu_custom_call.1} parent=55 // pred_fallthru
          _
      $region56: #{tpu_custom_call.1} parent=5 // pred_fallthru
        _
      %p631 = scmp.le.s32.totalorder 1, %s37
      %p632 = scmp.lt.s32.totalorder %s37, 3
      %p633 = pnand %p631, %p632
      %p634 = pneg %p633
      // Predicated region
      $region77: #{tpu_custom_call.1} parent=5 // pred_check
        _
      $region78: #{tpu_custom_call.1} parent=5 // pred_check_branch
        %636 = sbr.rel (%p633) target = $region80
      $region79: #{tpu_custom_call.1} parent=5 // pred_region
        %s637 = ssub.s32 %s37, 1
        %s638 = sand.u32 %s50, 1
        %s639 = scalar_lea.sflag [#allocation3], %s638
        %s640 = sand.u32 %s50, 1
        %s641 = smul.addr %s640, 8
        %s642 = scalar_lea.vmem [#allocation2], %s641
        // Predicated region
        $region81: #{tpu_custom_call.1} parent=79 // pred_check
          %p643 = pneg %p63
        $region82: #{tpu_custom_call.1} parent=79 // pred_check_branch
          %645 = sbr.rel (%p643) target = $region84
        $region83: #{tpu_custom_call.1} parent=79 // pred_region
          %646 = dma.done %s639, 128
        $region84: #{tpu_custom_call.1} parent=79 // pred_fallthru
          _
        %s647 = sand.u32 %s42, 1
        %s648 = scalar_lea.sflag [#allocation6], %s647
        %s649 = sand.u32 %s76, 1
        %s650 = smul.addr %s649, 128
        %s651 = scalar_lea.vmem [#allocation5], %s650
        // Predicated region
        $region85: #{tpu_custom_call.1} parent=79 // pred_check
          %p652 = pneg %p89
        $region86: #{tpu_custom_call.1} parent=79 // pred_check_branch
          %654 = sbr.rel (%p652) target = $region88
        $region87: #{tpu_custom_call.1} parent=79 // pred_region
          %655 = dma.done %s648, 2048
        $region88: #{tpu_custom_call.1} parent=79 // pred_fallthru
          _
        %s656 = sand.u32 %s42, 1
        %s657 = scalar_lea.sflag [#allocation6], %s656
        %s658 = sand.u32 %s102, 1
        %s659 = smul.addr %s658, 128
        %s660 = scalar_lea.vmem [#allocation7], %s659
        // Predicated region
        $region89: #{tpu_custom_call.1} parent=79 // pred_check
          %p661 = pneg %p115
        $region90: #{tpu_custom_call.1} parent=79 // pred_check_branch
          %663 = sbr.rel (%p661) target = $region92
        $region91: #{tpu_custom_call.1} parent=79 // pred_region
          %664 = dma.done %s657, 2048
        $region92: #{tpu_custom_call.1} parent=79 // pred_fallthru
          _
        %s665 = sand.u32 %s42, 1
        %s666 = scalar_lea.sflag [#allocation9], %s665
        %s667 = sand.u32 %s128, 1
        %s668 = smul.addr %s667, 128
        %s669 = scalar_lea.vmem [#allocation8], %s668
        // Predicated region
        $region93: #{tpu_custom_call.1} parent=79 // pred_check
          %p670 = pneg %p141
        $region94: #{tpu_custom_call.1} parent=79 // pred_check_branch
          %672 = sbr.rel (%p670) target = $region96
        $region95: #{tpu_custom_call.1} parent=79 // pred_region
          %673 = dma.done %s666, 2048
        $region96: #{tpu_custom_call.1} parent=79 // pred_fallthru
          _
        %s674 = sand.u32 %s42, 1
        %s675 = scalar_lea.sflag [#allocation9], %s674
        %s676 = sand.u32 %s154, 1
        %s677 = smul.addr %s676, 128
        %s678 = scalar_lea.vmem [#allocation10], %s677
        // Predicated region
        $region97: #{tpu_custom_call.1} parent=79 // pred_check
          %p679 = pneg %p167
        $region98: #{tpu_custom_call.1} parent=79 // pred_check_branch
          %681 = sbr.rel (%p679) target = $region100
        $region99: #{tpu_custom_call.1} parent=79 // pred_region
          %682 = dma.done %s675, 2048
        $region100: #{tpu_custom_call.1} parent=79 // pred_fallthru
          _
        // Predicated region
        $region101: #{tpu_custom_call.1} parent=79 // pred_check
          %p683 = pneg %p188
        $region102: #{tpu_custom_call.1} parent=79 // pred_check_branch
          %685 = sbr.rel (%p683) target = $region104
        $region103: #{tpu_custom_call.1} parent=79 // pred_region
          %686 = dma.done [#allocation12], 2048
        $region104: #{tpu_custom_call.1} parent=79 // pred_fallthru
          _
        // Predicated region
        $region105: #{tpu_custom_call.1} parent=79 // pred_check
          %p687 = pneg %p209
        $region106: #{tpu_custom_call.1} parent=79 // pred_check_branch
          %689 = sbr.rel (%p687) target = $region108
        $region107: #{tpu_custom_call.1} parent=79 // pred_region
          %690 = dma.done [#allocation12], 2048
        $region108: #{tpu_custom_call.1} parent=79 // pred_fallthru
          _
        // Predicated region
        $region109: #{tpu_custom_call.1} parent=79 // pred_check
          %p691 = pneg %p230
        $region110: #{tpu_custom_call.1} parent=79 // pred_check_branch
          %693 = sbr.rel (%p691) target = $region112
        $region111: #{tpu_custom_call.1} parent=79 // pred_region
          %694 = dma.done [#allocation15], 1024
        $region112: #{tpu_custom_call.1} parent=79 // pred_fallthru
          _
        // Predicated region
        $region113: #{tpu_custom_call.1} parent=79 // pred_check
          %p695 = pneg %p251
        $region114: #{tpu_custom_call.1} parent=79 // pred_check_branch
          %697 = sbr.rel (%p695) target = $region116
        $region115: #{tpu_custom_call.1} parent=79 // pred_region
          %698 = dma.done [#allocation15], 2048
        $region116: #{tpu_custom_call.1} parent=79 // pred_fallthru
          _
        // Predicated region
        $region117: #{tpu_custom_call.1} parent=79 // pred_check
          %p699 = pneg %p293
        $region118: #{tpu_custom_call.1} parent=79 // pred_check_branch
          %701 = sbr.rel (%p699) target = $region120
        $region119: #{tpu_custom_call.1} parent=79 // pred_region
          %702 = dma.done [#allocation18], 1024
        $region120: #{tpu_custom_call.1} parent=79 // pred_fallthru
          _
        // Predicated region
        $region121: #{tpu_custom_call.1} parent=79 // pred_check
          %p703 = pneg %p314
        $region122: #{tpu_custom_call.1} parent=79 // pred_check_branch
          %705 = sbr.rel (%p703) target = $region124
        $region123: #{tpu_custom_call.1} parent=79 // pred_region
          %706 = dma.done [#allocation18], 2048
        $region124: #{tpu_custom_call.1} parent=79 // pred_fallthru
          _
        // Predicated region
        $region125: #{tpu_custom_call.1} parent=79 // pred_check
          %p707 = pneg %p356
        $region126: #{tpu_custom_call.1} parent=79 // pred_check_branch
          %709 = sbr.rel (%p707) target = $region128
        $region127: #{tpu_custom_call.1} parent=79 // pred_region
          %710 = dma.done [#allocation21], 2048
        $region128: #{tpu_custom_call.1} parent=79 // pred_fallthru
          _
        %s711 = sand.u32 %s50, 1
        %s712 = scalar_lea.sflag [#allocation3], %s711
        %s713 = sand.u32 %s50, 1
        %s714 = smul.addr %s713, 8
        %s715 = scalar_lea.vmem [#allocation2], %s714
        %p716 = pneg %p63
        %p717 = pneg %p60
        %s718 = sand.u32 %s42, 1
        %s719 = scalar_lea.sflag [#allocation6], %s718
        %s720 = sand.u32 %s76, 1
        %s721 = smul.addr %s720, 128
        %s722 = scalar_lea.vmem [#allocation5], %s721
        %p723 = pneg %p89
        %p724 = pneg %p86
        %s725 = sand.u32 %s42, 1
        %s726 = scalar_lea.sflag [#allocation6], %s725
        %s727 = sand.u32 %s102, 1
        %s728 = smul.addr %s727, 128
        %s729 = scalar_lea.vmem [#allocation7], %s728
        %p730 = pneg %p115
        %p731 = pneg %p112
        %s732 = sand.u32 %s42, 1
        %s733 = scalar_lea.sflag [#allocation9], %s732
        %s734 = sand.u32 %s128, 1
        %s735 = smul.addr %s734, 128
        %s736 = scalar_lea.vmem [#allocation8], %s735
        %p737 = pneg %p141
        %p738 = pneg %p138
        %s739 = sand.u32 %s42, 1
        %s740 = scalar_lea.sflag [#allocation9], %s739
        %s741 = sand.u32 %s154, 1
        %s742 = smul.addr %s741, 128
        %s743 = scalar_lea.vmem [#allocation10], %s742
        %p744 = pneg %p167
        %p745 = pneg %p164
        %p746 = pneg %p188
        %p747 = pneg %p185
        %p748 = pneg %p209
        %p749 = pneg %p206
        %p750 = pneg %p230
        %p751 = pneg %p227
        %p752 = pneg %p251
        %p753 = pneg %p248
        %p754 = pneg %p272
        %p755 = pneg %p269
        %p756 = pneg %p293
        %p757 = pneg %p290
        %p758 = pneg %p314
        %p759 = pneg %p311
        %p760 = pneg %p335
        %p761 = pneg %p332
        %p762 = pneg %p356
        %p763 = pneg %p353
        %p764 = pneg %p377
        %p765 = pneg %p374
        %p766 = pneg %p403
        %p767 = pneg %p400
        %s768 = sand.u32 %s390, 1
        %s769 = scalar_lea.sflag [#allocation4], %s768
        %s770 = sand.u32 %s390, 1
        %s771 = smul.addr %s770, 512
        %s772 = scalar_lea.vmem [#allocation22], %s771
        %s773 = smul.u32 8, %s42
        %s774 = smul.u32 8, %s42
        %s775 = smul.u32 8, %s42
        %s776 = smul.u32 8, %s42
        %s777 = smul.u32 8, %s42
        %s778 = smul.u32 8, %s42
        %v780 = vld [vmem:[%s651] sm:$0xf]
        %v781 = vld [vmem:[%s651 + $0x4] sm:$0xf]
        %v782 = vld [vmem:[%s651 + $0x8] sm:$0xf]
        %v783 = vld [vmem:[%s651 + $0xc] sm:$0xf]
        %v784 = vld [vmem:[%s651 + $0x10] sm:$0xf]
        %v785 = vld [vmem:[%s651 + $0x14] sm:$0xf]
        %v786 = vld [vmem:[%s651 + $0x18] sm:$0xf]
        %v787 = vld [vmem:[%s651 + $0x1c] sm:$0xf]
        %v788 = vld [vmem:[%s651 + $0x20] sm:$0xf]
        %v789 = vld [vmem:[%s651 + $0x24] sm:$0xf]
        %v790 = vld [vmem:[%s651 + $0x28] sm:$0xf]
        %v791 = vld [vmem:[%s651 + $0x2c] sm:$0xf]
        %v792 = vld [vmem:[%s651 + $0x30] sm:$0xf]
        %v793 = vld [vmem:[%s651 + $0x34] sm:$0xf]
        %v794 = vld [vmem:[%s651 + $0x38] sm:$0xf]
        %v795 = vld [vmem:[%s651 + $0x3c] sm:$0xf]
        %v796 = vld [vmem:[%s651 + $0x40] sm:$0xf]
        %v797 = vld [vmem:[%s651 + $0x44] sm:$0xf]
        %v798 = vld [vmem:[%s651 + $0x48] sm:$0xf]
        %v799 = vld [vmem:[%s651 + $0x4c] sm:$0xf]
        %v800 = vld [vmem:[%s651 + $0x50] sm:$0xf]
        %v801 = vld [vmem:[%s651 + $0x54] sm:$0xf]
        %v802 = vld [vmem:[%s651 + $0x58] sm:$0xf]
        %v803 = vld [vmem:[%s651 + $0x5c] sm:$0xf]
        %v804 = vld [vmem:[%s651 + $0x60] sm:$0xf]
        %v805 = vld [vmem:[%s651 + $0x64] sm:$0xf]
        %v806 = vld [vmem:[%s651 + $0x68] sm:$0xf]
        %v807 = vld [vmem:[%s651 + $0x6c] sm:$0xf]
        %v808 = vld [vmem:[%s651 + $0x70] sm:$0xf]
        %v809 = vld [vmem:[%s651 + $0x74] sm:$0xf]
        %v810 = vld [vmem:[%s651 + $0x78] sm:$0xf]
        %v811 = vld [vmem:[%s651 + $0x7c] sm:$0xf]
        %v812 = vld [vmem:[%s660] sm:$0xf]
        %v813 = vld [vmem:[%s660 + $0x4] sm:$0xf]
        %v814 = vld [vmem:[%s660 + $0x8] sm:$0xf]
        %v815 = vld [vmem:[%s660 + $0xc] sm:$0xf]
        %v816 = vld [vmem:[%s660 + $0x10] sm:$0xf]
        %v817 = vld [vmem:[%s660 + $0x14] sm:$0xf]
        %v818 = vld [vmem:[%s660 + $0x18] sm:$0xf]
        %v819 = vld [vmem:[%s660 + $0x1c] sm:$0xf]
        %v820 = vld [vmem:[%s660 + $0x20] sm:$0xf]
        %v821 = vld [vmem:[%s660 + $0x24] sm:$0xf]
        %v822 = vld [vmem:[%s660 + $0x28] sm:$0xf]
        %v823 = vld [vmem:[%s660 + $0x2c] sm:$0xf]
        %v824 = vld [vmem:[%s660 + $0x30] sm:$0xf]
        %v825 = vld [vmem:[%s660 + $0x34] sm:$0xf]
        %v826 = vld [vmem:[%s660 + $0x38] sm:$0xf]
        %v827 = vld [vmem:[%s660 + $0x3c] sm:$0xf]
        %v828 = vld [vmem:[%s660 + $0x40] sm:$0xf]
        %v829 = vld [vmem:[%s660 + $0x44] sm:$0xf]
        %v830 = vld [vmem:[%s660 + $0x48] sm:$0xf]
        %v831 = vld [vmem:[%s660 + $0x4c] sm:$0xf]
        %v832 = vld [vmem:[%s660 + $0x50] sm:$0xf]
        %v833 = vld [vmem:[%s660 + $0x54] sm:$0xf]
        %v834 = vld [vmem:[%s660 + $0x58] sm:$0xf]
        %v835 = vld [vmem:[%s660 + $0x5c] sm:$0xf]
        %v836 = vld [vmem:[%s660 + $0x60] sm:$0xf]
        %v837 = vld [vmem:[%s660 + $0x64] sm:$0xf]
        %v838 = vld [vmem:[%s660 + $0x68] sm:$0xf]
        %v839 = vld [vmem:[%s660 + $0x6c] sm:$0xf]
        %v840 = vld [vmem:[%s660 + $0x70] sm:$0xf]
        %v841 = vld [vmem:[%s660 + $0x74] sm:$0xf]
        %v842 = vld [vmem:[%s660 + $0x78] sm:$0xf]
        %v843 = vld [vmem:[%s660 + $0x7c] sm:$0xf]
        %v844 = vld [vmem:[%s669] sm:$0xf]
        %v845 = vld [vmem:[%s669 + $0x4] sm:$0xf]
        %v846 = vld [vmem:[%s669 + $0x8] sm:$0xf]
        %v847 = vld [vmem:[%s669 + $0xc] sm:$0xf]
        %v848 = vld [vmem:[%s669 + $0x10] sm:$0xf]
        %v849 = vld [vmem:[%s669 + $0x14] sm:$0xf]
        %v850 = vld [vmem:[%s669 + $0x18] sm:$0xf]
        %v851 = vld [vmem:[%s669 + $0x1c] sm:$0xf]
        %v852 = vld [vmem:[%s669 + $0x20] sm:$0xf]
        %v853 = vld [vmem:[%s669 + $0x24] sm:$0xf]
        %v854 = vld [vmem:[%s669 + $0x28] sm:$0xf]
        %v855 = vld [vmem:[%s669 + $0x2c] sm:$0xf]
        %v856 = vld [vmem:[%s669 + $0x30] sm:$0xf]
        %v857 = vld [vmem:[%s669 + $0x34] sm:$0xf]
        %v858 = vld [vmem:[%s669 + $0x38] sm:$0xf]
        %v859 = vld [vmem:[%s669 + $0x3c] sm:$0xf]
        %v860 = vld [vmem:[%s669 + $0x40] sm:$0xf]
        %v861 = vld [vmem:[%s669 + $0x44] sm:$0xf]
        %v862 = vld [vmem:[%s669 + $0x48] sm:$0xf]
        %v863 = vld [vmem:[%s669 + $0x4c] sm:$0xf]
        %v864 = vld [vmem:[%s669 + $0x50] sm:$0xf]
        %v865 = vld [vmem:[%s669 + $0x54] sm:$0xf]
        %v866 = vld [vmem:[%s669 + $0x58] sm:$0xf]
        %v867 = vld [vmem:[%s669 + $0x5c] sm:$0xf]
        %v868 = vld [vmem:[%s669 + $0x60] sm:$0xf]
        %v869 = vld [vmem:[%s669 + $0x64] sm:$0xf]
        %v870 = vld [vmem:[%s669 + $0x68] sm:$0xf]
        %v871 = vld [vmem:[%s669 + $0x6c] sm:$0xf]
        %v872 = vld [vmem:[%s669 + $0x70] sm:$0xf]
        %v873 = vld [vmem:[%s669 + $0x74] sm:$0xf]
        %v874 = vld [vmem:[%s669 + $0x78] sm:$0xf]
        %v875 = vld [vmem:[%s669 + $0x7c] sm:$0xf]
        %v876 = vld [vmem:[%s678] sm:$0xf]
        %v877 = vld [vmem:[%s678 + $0x4] sm:$0xf]
        %v878 = vld [vmem:[%s678 + $0x8] sm:$0xf]
        %v879 = vld [vmem:[%s678 + $0xc] sm:$0xf]
        %v880 = vld [vmem:[%s678 + $0x10] sm:$0xf]
        %v881 = vld [vmem:[%s678 + $0x14] sm:$0xf]
        %v882 = vld [vmem:[%s678 + $0x18] sm:$0xf]
        %v883 = vld [vmem:[%s678 + $0x1c] sm:$0xf]
        %v884 = vld [vmem:[%s678 + $0x20] sm:$0xf]
        %v885 = vld [vmem:[%s678 + $0x24] sm:$0xf]
        %v886 = vld [vmem:[%s678 + $0x28] sm:$0xf]
        %v887 = vld [vmem:[%s678 + $0x2c] sm:$0xf]
        %v888 = vld [vmem:[%s678 + $0x30] sm:$0xf]
        %v889 = vld [vmem:[%s678 + $0x34] sm:$0xf]
        %v890 = vld [vmem:[%s678 + $0x38] sm:$0xf]
        %v891 = vld [vmem:[%s678 + $0x3c] sm:$0xf]
        %v892 = vld [vmem:[%s678 + $0x40] sm:$0xf]
        %v893 = vld [vmem:[%s678 + $0x44] sm:$0xf]
        %v894 = vld [vmem:[%s678 + $0x48] sm:$0xf]
        %v895 = vld [vmem:[%s678 + $0x4c] sm:$0xf]
        %v896 = vld [vmem:[%s678 + $0x50] sm:$0xf]
        %v897 = vld [vmem:[%s678 + $0x54] sm:$0xf]
        %v898 = vld [vmem:[%s678 + $0x58] sm:$0xf]
        %v899 = vld [vmem:[%s678 + $0x5c] sm:$0xf]
        %v900 = vld [vmem:[%s678 + $0x60] sm:$0xf]
        %v901 = vld [vmem:[%s678 + $0x64] sm:$0xf]
        %v902 = vld [vmem:[%s678 + $0x68] sm:$0xf]
        %v903 = vld [vmem:[%s678 + $0x6c] sm:$0xf]
        %v904 = vld [vmem:[%s678 + $0x70] sm:$0xf]
        %v905 = vld [vmem:[%s678 + $0x74] sm:$0xf]
        %v906 = vld [vmem:[%s678 + $0x78] sm:$0xf]
        %v907 = vld [vmem:[%s678 + $0x7c] sm:$0xf]
        %v908 = vld [vmem:[#allocation11] sm:$0xff]
        %v909 = vld [vmem:[#allocation11 + $0x8] sm:$0xff]
        %v910 = vld [vmem:[#allocation11 + $0x10] sm:$0xff]
        %v911 = vld [vmem:[#allocation11 + $0x18] sm:$0xff]
        %v912 = vld [vmem:[#allocation11 + $0x20] sm:$0xff]
        %v913 = vld [vmem:[#allocation11 + $0x28] sm:$0xff]
        %v914 = vld [vmem:[#allocation11 + $0x30] sm:$0xff]
        %v915 = vld [vmem:[#allocation11 + $0x38] sm:$0xff]
        %v916 = vld [vmem:[#allocation11 + $0x40] sm:$0xff]
        %v917 = vld [vmem:[#allocation11 + $0x48] sm:$0xff]
        %v918 = vld [vmem:[#allocation11 + $0x50] sm:$0xff]
        %v919 = vld [vmem:[#allocation11 + $0x58] sm:$0xff]
        %v920 = vld [vmem:[#allocation11 + $0x60] sm:$0xff]
        %v921 = vld [vmem:[#allocation11 + $0x68] sm:$0xff]
        %v922 = vld [vmem:[#allocation11 + $0x70] sm:$0xff]
        %v923 = vld [vmem:[#allocation11 + $0x78] sm:$0xff]
        %v956 = vunpack.c.l.b16 %v780
        %v957 = vunpack.c.l.b16 %v781
        %v958 = vunpack.c.l.b16 %v782
        %v959 = vunpack.c.l.b16 %v783
        %v960 = vunpack.c.l.b16 %v784
        %v961 = vunpack.c.l.b16 %v785
        %v962 = vunpack.c.l.b16 %v786
        %v963 = vunpack.c.l.b16 %v787
        %v964 = vunpack.c.l.b16 %v788
        %v965 = vunpack.c.l.b16 %v789
        %v966 = vunpack.c.l.b16 %v790
        %v967 = vunpack.c.l.b16 %v791
        %v968 = vunpack.c.l.b16 %v792
        %v969 = vunpack.c.l.b16 %v793
        %v970 = vunpack.c.l.b16 %v794
        %v971 = vunpack.c.l.b16 %v795
        %v972 = vunpack.c.l.b16 %v796
        %v973 = vunpack.c.l.b16 %v797
        %v974 = vunpack.c.l.b16 %v798
        %v975 = vunpack.c.l.b16 %v799
        %v976 = vunpack.c.l.b16 %v800
        %v977 = vunpack.c.l.b16 %v801
        %v978 = vunpack.c.l.b16 %v802
        %v979 = vunpack.c.l.b16 %v803
        %v980 = vunpack.c.l.b16 %v804
        %v981 = vunpack.c.l.b16 %v805
        %v982 = vunpack.c.l.b16 %v806
        %v983 = vunpack.c.l.b16 %v807
        %v984 = vunpack.c.l.b16 %v808
        %v985 = vunpack.c.l.b16 %v809
        %v986 = vunpack.c.l.b16 %v810
        %v987 = vunpack.c.l.b16 %v811
        %v988 = vpack.c.b16 %v957, %v956
        %v989 = vpack.c.b16 %v959, %v958
        %v990 = vpack.c.b16 %v961, %v960
        %v991 = vpack.c.b16 %v963, %v962
        %v992 = vpack.c.b16 %v965, %v964
        %v993 = vpack.c.b16 %v967, %v966
        %v994 = vpack.c.b16 %v969, %v968
        %v995 = vpack.c.b16 %v971, %v970
        %v996 = vpack.c.b16 %v973, %v972
        %v997 = vpack.c.b16 %v975, %v974
        %v998 = vpack.c.b16 %v977, %v976
        %v999 = vpack.c.b16 %v979, %v978
        %v1000 = vpack.c.b16 %v981, %v980
        %v1001 = vpack.c.b16 %v983, %v982
        %v1002 = vpack.c.b16 %v985, %v984
        %v1003 = vpack.c.b16 %v987, %v986
        %v1036 = vunpack.c.l.b16 %v908
        %v1037 = vunpack.c.h.b16 %v908
        %v1038 = vunpack.c.l.b16 %v909
        %v1039 = vunpack.c.h.b16 %v909
        %v1040 = vunpack.c.l.b16 %v910
        %v1041 = vunpack.c.h.b16 %v910
        %v1042 = vunpack.c.l.b16 %v911
        %v1043 = vunpack.c.h.b16 %v911
        %v1044 = vunpack.c.l.b16 %v912
        %v1045 = vunpack.c.h.b16 %v912
        %v1046 = vunpack.c.l.b16 %v913
        %v1047 = vunpack.c.h.b16 %v913
        %v1048 = vunpack.c.l.b16 %v914
        %v1049 = vunpack.c.h.b16 %v914
        %v1050 = vunpack.c.l.b16 %v915
        %v1051 = vunpack.c.h.b16 %v915
        %v1052 = vunpack.c.l.b16 %v916
        %v1053 = vunpack.c.h.b16 %v916
        %v1054 = vunpack.c.l.b16 %v917
        %v1055 = vunpack.c.h.b16 %v917
        %v1056 = vunpack.c.l.b16 %v918
        %v1057 = vunpack.c.h.b16 %v918
        %v1058 = vunpack.c.l.b16 %v919
        %v1059 = vunpack.c.h.b16 %v919
        %v1060 = vunpack.c.l.b16 %v920
        %v1061 = vunpack.c.h.b16 %v920
        %v1062 = vunpack.c.l.b16 %v921
        %v1063 = vunpack.c.h.b16 %v921
        %v1064 = vunpack.c.l.b16 %v922
        %v1065 = vunpack.c.h.b16 %v922
        %v1066 = vunpack.c.l.b16 %v923
        %v1067 = vunpack.c.h.b16 %v923
        %v1068 = vpack.c.b16 %v1038, %v1036
        %v1069 = vpack.c.b16 %v1039, %v1037
        %v1070 = vpack.c.b16 %v1042, %v1040
        %v1071 = vpack.c.b16 %v1043, %v1041
        %v1072 = vpack.c.b16 %v1046, %v1044
        %v1073 = vpack.c.b16 %v1047, %v1045
        %v1074 = vpack.c.b16 %v1050, %v1048
        %v1075 = vpack.c.b16 %v1051, %v1049
        %v1076 = vpack.c.b16 %v1054, %v1052
        %v1077 = vpack.c.b16 %v1055, %v1053
        %v1078 = vpack.c.b16 %v1058, %v1056
        %v1079 = vpack.c.b16 %v1059, %v1057
        %v1080 = vpack.c.b16 %v1062, %v1060
        %v1081 = vpack.c.b16 %v1063, %v1061
        %v1082 = vpack.c.b16 %v1066, %v1064
        %v1083 = vpack.c.b16 %v1067, %v1065
        %1100 = vmatprep.subr.bf16.mxu0 %v1083
        %1101 = vmatpush1.bf16.msra.mxu0 %v1082
        %1102 = vmatprep.subr.bf16.mxu0 %v1081
        %1103 = vmatpush1.bf16.msra.mxu0 %v1080
        %1104 = vmatprep.subr.bf16.mxu0 %v1079
        %1105 = vmatpush1.bf16.msra.mxu0 %v1078
        %1106 = vmatprep.subr.bf16.mxu0 %v1077
        %1107 = vmatpush1.bf16.msra.mxu0 %v1076
        %1108 = vmatprep.subr.bf16.mxu0 %v1075
        %1109 = vmatpush1.bf16.msra.mxu0 %v1074
        %1110 = vmatprep.subr.bf16.mxu0 %v1073
        %1111 = vmatpush1.bf16.msra.mxu0 %v1072
        %1112 = vmatprep.subr.bf16.mxu0 %v1071
        %1113 = vmatpush1.bf16.msra.mxu0 %v1070
        %1114 = vmatprep.subr.bf16.mxu0 %v1069
        %1115 = vmatpush1.bf16.msra.mxu0 %v1068
        %1116 = vmatprep.subr.bf16.mxu0 0
        %1117 = vmatpush2.bf16.msra.mxu0 0
        %1118 = vmatprep.subr.bf16.mxu0 0
        %1119 = vmatpush2.bf16.msra.mxu0 0
        %1120 = vmatprep.subr.bf16.mxu0 0
        %1121 = vmatpush2.bf16.msra.mxu0 0
        %1122 = vmatprep.subr.bf16.mxu0 0
        %1123 = vmatpush2.bf16.msra.mxu0 0
        %1124 = vmatprep.subr.bf16.mxu0 0
        %1125 = vmatpush2.bf16.msra.mxu0 0
        %1126 = vmatprep.subr.bf16.mxu0 0
        %1127 = vmatpush2.bf16.msra.mxu0 0
        %1128 = vmatprep.subr.bf16.mxu0 0
        %1129 = vmatpush2.bf16.msra.mxu0 0
        %1130 = vmatprep.subr.bf16.mxu0 0
        %1131 = vmatpush2.bf16.msra.mxu0 0
        %1132 = vmatprep.mubr.bf16.mxu0 0
        %1133 = vmatmul.mubr.bf16.gmra.mxu0 %v988
        %v1134 = vpop.f32.mrf.mxu0
        %v1135 = vadd.f32 0.0, %v1134
        %v1136 = vpop.f32.mrf.mxu0
        %v1137 = vadd.f32 0.0, %v1136
        %v1138 = vpop.f32.mrf.mxu0
        %v1139 = vadd.f32 0.0, %v1138
        %v1140 = vpop.f32.mrf.mxu0
        %v1141 = vadd.f32 0.0, %v1140
        %1142 = vmatprep.mubr.bf16.mxu0 0
        %1143 = vmatmul.mubr.bf16.gmra.mxu0 %v989
        %v1144 = vpop.f32.mrf.mxu0
        %v1145 = vadd.f32 0.0, %v1144
        %v1146 = vpop.f32.mrf.mxu0
        %v1147 = vadd.f32 0.0, %v1146
        %v1148 = vpop.f32.mrf.mxu0
        %v1149 = vadd.f32 0.0, %v1148
        %v1150 = vpop.f32.mrf.mxu0
        %v1151 = vadd.f32 0.0, %v1150
        %1152 = vmatprep.mubr.bf16.mxu0 0
        %1153 = vmatmul.mubr.bf16.gmra.mxu0 %v990
        %v1154 = vpop.f32.mrf.mxu0
        %v1155 = vadd.f32 0.0, %v1154
        %v1156 = vpop.f32.mrf.mxu0
        %v1157 = vadd.f32 0.0, %v1156
        %v1158 = vpop.f32.mrf.mxu0
        %v1159 = vadd.f32 0.0, %v1158
        %v1160 = vpop.f32.mrf.mxu0
        %v1161 = vadd.f32 0.0, %v1160
        %1162 = vmatprep.mubr.bf16.mxu0 0
        %1163 = vmatmul.mubr.bf16.gmra.mxu0 %v991
        %v1164 = vpop.f32.mrf.mxu0
        %v1165 = vadd.f32 0.0, %v1164
        %v1166 = vpop.f32.mrf.mxu0
        %v1167 = vadd.f32 0.0, %v1166
        %v1168 = vpop.f32.mrf.mxu0
        %v1169 = vadd.f32 0.0, %v1168
        %v1170 = vpop.f32.mrf.mxu0
        %v1171 = vadd.f32 0.0, %v1170
        %1172 = vmatprep.mubr.bf16.mxu0 0
        %1173 = vmatmul.mubr.bf16.gmra.mxu0 %v992
        %v1174 = vpop.f32.mrf.mxu0
        %v1175 = vadd.f32 0.0, %v1174
        %v1176 = vpop.f32.mrf.mxu0
        %v1177 = vadd.f32 0.0, %v1176
        %v1178 = vpop.f32.mrf.mxu0
        %v1179 = vadd.f32 0.0, %v1178
        %v1180 = vpop.f32.mrf.mxu0
        %v1181 = vadd.f32 0.0, %v1180
        %1182 = vmatprep.mubr.bf16.mxu0 0
        %1183 = vmatmul.mubr.bf16.gmra.mxu0 %v993
        %v1184 = vpop.f32.mrf.mxu0
        %v1185 = vadd.f32 0.0, %v1184
        %v1186 = vpop.f32.mrf.mxu0
        %v1187 = vadd.f32 0.0, %v1186
        %v1188 = vpop.f32.mrf.mxu0
        %v1189 = vadd.f32 0.0, %v1188
        %v1190 = vpop.f32.mrf.mxu0
        %v1191 = vadd.f32 0.0, %v1190
        %1192 = vmatprep.mubr.bf16.mxu0 0
        %1193 = vmatmul.mubr.bf16.gmra.mxu0 %v994
        %v1194 = vpop.f32.mrf.mxu0
        %v1195 = vadd.f32 0.0, %v1194
        %v1196 = vpop.f32.mrf.mxu0
        %v1197 = vadd.f32 0.0, %v1196
        %v1198 = vpop.f32.mrf.mxu0
        %v1199 = vadd.f32 0.0, %v1198
        %v1200 = vpop.f32.mrf.mxu0
        %v1201 = vadd.f32 0.0, %v1200
        %1202 = vmatprep.mubr.bf16.mxu0 0
        %1203 = vmatmul.mubr.bf16.gmra.mxu0 %v995
        %v1204 = vpop.f32.mrf.mxu0
        %v1205 = vadd.f32 0.0, %v1204
        %v1206 = vpop.f32.mrf.mxu0
        %v1207 = vadd.f32 0.0, %v1206
        %v1208 = vpop.f32.mrf.mxu0
        %v1209 = vadd.f32 0.0, %v1208
        %v1210 = vpop.f32.mrf.mxu0
        %v1211 = vadd.f32 0.0, %v1210
        %1212 = vmatprep.mubr.bf16.mxu0 0
        %1213 = vmatmul.mubr.bf16.gmra.mxu0 %v996
        %v1214 = vpop.f32.mrf.mxu0
        %v1215 = vadd.f32 0.0, %v1214
        %v1216 = vpop.f32.mrf.mxu0
        %v1217 = vadd.f32 0.0, %v1216
        %v1218 = vpop.f32.mrf.mxu0
        %v1219 = vadd.f32 0.0, %v1218
        %v1220 = vpop.f32.mrf.mxu0
        %v1221 = vadd.f32 0.0, %v1220
        %1222 = vmatprep.mubr.bf16.mxu0 0
        %1223 = vmatmul.mubr.bf16.gmra.mxu0 %v997
        %v1224 = vpop.f32.mrf.mxu0
        %v1225 = vadd.f32 0.0, %v1224
        %v1226 = vpop.f32.mrf.mxu0
        %v1227 = vadd.f32 0.0, %v1226
        %v1228 = vpop.f32.mrf.mxu0
        %v1229 = vadd.f32 0.0, %v1228
        %v1230 = vpop.f32.mrf.mxu0
        %v1231 = vadd.f32 0.0, %v1230
        %1232 = vmatprep.mubr.bf16.mxu0 0
        %1233 = vmatmul.mubr.bf16.gmra.mxu0 %v998
        %v1234 = vpop.f32.mrf.mxu0
        %v1235 = vadd.f32 0.0, %v1234
        %v1236 = vpop.f32.mrf.mxu0
        %v1237 = vadd.f32 0.0, %v1236
        %v1238 = vpop.f32.mrf.mxu0
        %v1239 = vadd.f32 0.0, %v1238
        %v1240 = vpop.f32.mrf.mxu0
        %v1241 = vadd.f32 0.0, %v1240
        %1242 = vmatprep.mubr.bf16.mxu0 0
        %1243 = vmatmul.mubr.bf16.gmra.mxu0 %v999
        %v1244 = vpop.f32.mrf.mxu0
        %v1245 = vadd.f32 0.0, %v1244
        %v1246 = vpop.f32.mrf.mxu0
        %v1247 = vadd.f32 0.0, %v1246
        %v1248 = vpop.f32.mrf.mxu0
        %v1249 = vadd.f32 0.0, %v1248
        %v1250 = vpop.f32.mrf.mxu0
        %v1251 = vadd.f32 0.0, %v1250
        %1252 = vmatprep.mubr.bf16.mxu0 0
        %1253 = vmatmul.mubr.bf16.gmra.mxu0 %v1000
        %v1254 = vpop.f32.mrf.mxu0
        %v1255 = vadd.f32 0.0, %v1254
        %v1256 = vpop.f32.mrf.mxu0
        %v1257 = vadd.f32 0.0, %v1256
        %v1258 = vpop.f32.mrf.mxu0
        %v1259 = vadd.f32 0.0, %v1258
        %v1260 = vpop.f32.mrf.mxu0
        %v1261 = vadd.f32 0.0, %v1260
        %1262 = vmatprep.mubr.bf16.mxu0 0
        %1263 = vmatmul.mubr.bf16.gmra.mxu0 %v1001
        %v1264 = vpop.f32.mrf.mxu0
        %v1265 = vadd.f32 0.0, %v1264
        %v1266 = vpop.f32.mrf.mxu0
        %v1267 = vadd.f32 0.0, %v1266
        %v1268 = vpop.f32.mrf.mxu0
        %v1269 = vadd.f32 0.0, %v1268
        %v1270 = vpop.f32.mrf.mxu0
        %v1271 = vadd.f32 0.0, %v1270
        %1272 = vmatprep.mubr.bf16.mxu0 0
        %1273 = vmatmul.mubr.bf16.gmra.mxu0 %v1002
        %v1274 = vpop.f32.mrf.mxu0
        %v1275 = vadd.f32 0.0, %v1274
        %v1276 = vpop.f32.mrf.mxu0
        %v1277 = vadd.f32 0.0, %v1276
        %v1278 = vpop.f32.mrf.mxu0
        %v1279 = vadd.f32 0.0, %v1278
        %v1280 = vpop.f32.mrf.mxu0
        %v1281 = vadd.f32 0.0, %v1280
        %1282 = vmatprep.mubr.bf16.mxu0 0
        %1283 = vmatmul.mubr.bf16.gmra.mxu0 %v1003
        %v1284 = vpop.f32.mrf.mxu0
        %v1285 = vadd.f32 0.0, %v1284
        %v1286 = vpop.f32.mrf.mxu0
        %v1287 = vadd.f32 0.0, %v1286
        %v1288 = vpop.f32.mrf.mxu0
        %v1289 = vadd.f32 0.0, %v1288
        %v1290 = vpop.f32.mrf.mxu0
        %v1291 = vadd.f32 0.0, %v1290
        %1292 = vdwg.mxu0
        %v1293 = vmax.f32 %v1135, %v1137
        %1294 = vmax.xlane.f32.xlu0 %v1293
        %v1295 = vpop.xlane.xlu0 %1294
        %v1296 = vmax.f32 %v1139, %v1141
        %1297 = vmax.xlane.f32.xlu0 %v1296
        %v1298 = vpop.xlane.xlu0 %1297
        %v1299 = vmax.f32 %v1145, %v1147
        %1300 = vmax.xlane.f32.xlu0 %v1299
        %v1301 = vpop.xlane.xlu0 %1300
        %v1302 = vmax.f32 %v1149, %v1151
        %1303 = vmax.xlane.f32.xlu0 %v1302
        %v1304 = vpop.xlane.xlu0 %1303
        %v1305 = vmax.f32 %v1155, %v1157
        %1306 = vmax.xlane.f32.xlu0 %v1305
        %v1307 = vpop.xlane.xlu0 %1306
        %v1308 = vmax.f32 %v1159, %v1161
        %1309 = vmax.xlane.f32.xlu0 %v1308
        %v1310 = vpop.xlane.xlu0 %1309
        %v1311 = vmax.f32 %v1165, %v1167
        %1312 = vmax.xlane.f32.xlu0 %v1311
        %v1313 = vpop.xlane.xlu0 %1312
        %v1314 = vmax.f32 %v1169, %v1171
        %1315 = vmax.xlane.f32.xlu0 %v1314
        %v1316 = vpop.xlane.xlu0 %1315
        %v1317 = vmax.f32 %v1175, %v1177
        %1318 = vmax.xlane.f32.xlu0 %v1317
        %v1319 = vpop.xlane.xlu0 %1318
        %v1320 = vmax.f32 %v1179, %v1181
        %1321 = vmax.xlane.f32.xlu0 %v1320
        %v1322 = vpop.xlane.xlu0 %1321
        %v1323 = vmax.f32 %v1185, %v1187
        %1324 = vmax.xlane.f32.xlu0 %v1323
        %v1325 = vpop.xlane.xlu0 %1324
        %v1326 = vmax.f32 %v1189, %v1191
        %1327 = vmax.xlane.f32.xlu0 %v1326
        %v1328 = vpop.xlane.xlu0 %1327
        %v1329 = vmax.f32 %v1195, %v1197
        %1330 = vmax.xlane.f32.xlu0 %v1329
        %v1331 = vpop.xlane.xlu0 %1330
        %v1332 = vmax.f32 %v1199, %v1201
        %1333 = vmax.xlane.f32.xlu0 %v1332
        %v1334 = vpop.xlane.xlu0 %1333
        %v1335 = vmax.f32 %v1205, %v1207
        %1336 = vmax.xlane.f32.xlu0 %v1335
        %v1337 = vpop.xlane.xlu0 %1336
        %v1338 = vmax.f32 %v1209, %v1211
        %1339 = vmax.xlane.f32.xlu0 %v1338
        %v1340 = vpop.xlane.xlu0 %1339
        %v1341 = vmax.f32 %v1215, %v1217
        %1342 = vmax.xlane.f32.xlu0 %v1341
        %v1343 = vpop.xlane.xlu0 %1342
        %v1344 = vmax.f32 %v1219, %v1221
        %1345 = vmax.xlane.f32.xlu0 %v1344
        %v1346 = vpop.xlane.xlu0 %1345
        %v1347 = vmax.f32 %v1225, %v1227
        %1348 = vmax.xlane.f32.xlu0 %v1347
        %v1349 = vpop.xlane.xlu0 %1348
        %v1350 = vmax.f32 %v1229, %v1231
        %1351 = vmax.xlane.f32.xlu0 %v1350
        %v1352 = vpop.xlane.xlu0 %1351
        %v1353 = vmax.f32 %v1235, %v1237
        %1354 = vmax.xlane.f32.xlu0 %v1353
        %v1355 = vpop.xlane.xlu0 %1354
        %v1356 = vmax.f32 %v1239, %v1241
        %1357 = vmax.xlane.f32.xlu0 %v1356
        %v1358 = vpop.xlane.xlu0 %1357
        %v1359 = vmax.f32 %v1245, %v1247
        %1360 = vmax.xlane.f32.xlu0 %v1359
        %v1361 = vpop.xlane.xlu0 %1360
        %v1362 = vmax.f32 %v1249, %v1251
        %1363 = vmax.xlane.f32.xlu0 %v1362
        %v1364 = vpop.xlane.xlu0 %1363
        %v1365 = vmax.f32 %v1255, %v1257
        %1366 = vmax.xlane.f32.xlu0 %v1365
        %v1367 = vpop.xlane.xlu0 %1366
        %v1368 = vmax.f32 %v1259, %v1261
        %1369 = vmax.xlane.f32.xlu0 %v1368
        %v1370 = vpop.xlane.xlu0 %1369
        %v1371 = vmax.f32 %v1265, %v1267
        %1372 = vmax.xlane.f32.xlu0 %v1371
        %v1373 = vpop.xlane.xlu0 %1372
        %v1374 = vmax.f32 %v1269, %v1271
        %1375 = vmax.xlane.f32.xlu0 %v1374
        %v1376 = vpop.xlane.xlu0 %1375
        %v1377 = vmax.f32 %v1275, %v1277
        %1378 = vmax.xlane.f32.xlu0 %v1377
        %v1379 = vpop.xlane.xlu0 %1378
        %v1380 = vmax.f32 %v1279, %v1281
        %1381 = vmax.xlane.f32.xlu0 %v1380
        %v1382 = vpop.xlane.xlu0 %1381
        %v1383 = vmax.f32 %v1285, %v1287
        %1384 = vmax.xlane.f32.xlu0 %v1383
        %v1385 = vpop.xlane.xlu0 %1384
        %v1386 = vmax.f32 %v1289, %v1291
        %1387 = vmax.xlane.f32.xlu0 %v1386
        %v1388 = vpop.xlane.xlu0 %1387
        %v1389 = vsub.f32 %v1135, %v1295
        %v1390 = vsub.f32 %v1137, %v1295
        %v1391 = vsub.f32 %v1139, %v1298
        %v1392 = vsub.f32 %v1141, %v1298
        %v1393 = vsub.f32 %v1145, %v1301
        %v1394 = vsub.f32 %v1147, %v1301
        %v1395 = vsub.f32 %v1149, %v1304
        %v1396 = vsub.f32 %v1151, %v1304
        %v1397 = vsub.f32 %v1155, %v1307
        %v1398 = vsub.f32 %v1157, %v1307
        %v1399 = vsub.f32 %v1159, %v1310
        %v1400 = vsub.f32 %v1161, %v1310
        %v1401 = vsub.f32 %v1165, %v1313
        %v1402 = vsub.f32 %v1167, %v1313
        %v1403 = vsub.f32 %v1169, %v1316
        %v1404 = vsub.f32 %v1171, %v1316
        %v1405 = vsub.f32 %v1175, %v1319
        %v1406 = vsub.f32 %v1177, %v1319
        %v1407 = vsub.f32 %v1179, %v1322
        %v1408 = vsub.f32 %v1181, %v1322
        %v1409 = vsub.f32 %v1185, %v1325
        %v1410 = vsub.f32 %v1187, %v1325
        %v1411 = vsub.f32 %v1189, %v1328
        %v1412 = vsub.f32 %v1191, %v1328
        %v1413 = vsub.f32 %v1195, %v1331
        %v1414 = vsub.f32 %v1197, %v1331
        %v1415 = vsub.f32 %v1199, %v1334
        %v1416 = vsub.f32 %v1201, %v1334
        %v1417 = vsub.f32 %v1205, %v1337
        %v1418 = vsub.f32 %v1207, %v1337
        %v1419 = vsub.f32 %v1209, %v1340
        %v1420 = vsub.f32 %v1211, %v1340
        %v1421 = vsub.f32 %v1215, %v1343
        %v1422 = vsub.f32 %v1217, %v1343
        %v1423 = vsub.f32 %v1219, %v1346
        %v1424 = vsub.f32 %v1221, %v1346
        %v1425 = vsub.f32 %v1225, %v1349
        %v1426 = vsub.f32 %v1227, %v1349
        %v1427 = vsub.f32 %v1229, %v1352
        %v1428 = vsub.f32 %v1231, %v1352
        %v1429 = vsub.f32 %v1235, %v1355
        %v1430 = vsub.f32 %v1237, %v1355
        %v1431 = vsub.f32 %v1239, %v1358
        %v1432 = vsub.f32 %v1241, %v1358
        %v1433 = vsub.f32 %v1245, %v1361
        %v1434 = vsub.f32 %v1247, %v1361
        %v1435 = vsub.f32 %v1249, %v1364
        %v1436 = vsub.f32 %v1251, %v1364
        %v1437 = vsub.f32 %v1255, %v1367
        %v1438 = vsub.f32 %v1257, %v1367
        %v1439 = vsub.f32 %v1259, %v1370
        %v1440 = vsub.f32 %v1261, %v1370
        %v1441 = vsub.f32 %v1265, %v1373
        %v1442 = vsub.f32 %v1267, %v1373
        %v1443 = vsub.f32 %v1269, %v1376
        %v1444 = vsub.f32 %v1271, %v1376
        %v1445 = vsub.f32 %v1275, %v1379
        %v1446 = vsub.f32 %v1277, %v1379
        %v1447 = vsub.f32 %v1279, %v1382
        %v1448 = vsub.f32 %v1281, %v1382
        %v1449 = vsub.f32 %v1285, %v1385
        %v1450 = vsub.f32 %v1287, %v1385
        %v1451 = vsub.f32 %v1289, %v1388
        %v1452 = vsub.f32 %v1291, %v1388
        %v1453 = vmul.f32 %v1389, 1.442695
        %v1454 = vpow.pop %v1453
        %v1455 = vmul.f32 %v1390, 1.442695
        %v1456 = vpow.pop %v1455
        %v1457 = vmul.f32 %v1391, 1.442695
        %v1458 = vpow.pop %v1457
        %v1459 = vmul.f32 %v1392, 1.442695
        %v1460 = vpow.pop %v1459
        %v1461 = vmul.f32 %v1393, 1.442695
        %v1462 = vpow.pop %v1461
        %v1463 = vmul.f32 %v1394, 1.442695
        %v1464 = vpow.pop %v1463
        %v1465 = vmul.f32 %v1395, 1.442695
        %v1466 = vpow.pop %v1465
        %v1467 = vmul.f32 %v1396, 1.442695
        %v1468 = vpow.pop %v1467
        %v1469 = vmul.f32 %v1397, 1.442695
        %v1470 = vpow.pop %v1469
        %v1471 = vmul.f32 %v1398, 1.442695
        %v1472 = vpow.pop %v1471
        %v1473 = vmul.f32 %v1399, 1.442695
        %v1474 = vpow.pop %v1473
        %v1475 = vmul.f32 %v1400, 1.442695
        %v1476 = vpow.pop %v1475
        %v1477 = vmul.f32 %v1401, 1.442695
        %v1478 = vpow.pop %v1477
        %v1479 = vmul.f32 %v1402, 1.442695
        %v1480 = vpow.pop %v1479
        %v1481 = vmul.f32 %v1403, 1.442695
        %v1482 = vpow.pop %v1481
        %v1483 = vmul.f32 %v1404, 1.442695
        %v1484 = vpow.pop %v1483
        %v1485 = vmul.f32 %v1405, 1.442695
        %v1486 = vpow.pop %v1485
        %v1487 = vmul.f32 %v1406, 1.442695
        %v1488 = vpow.pop %v1487
        %v1489 = vmul.f32 %v1407, 1.442695
        %v1490 = vpow.pop %v1489
        %v1491 = vmul.f32 %v1408, 1.442695
        %v1492 = vpow.pop %v1491
        %v1493 = vmul.f32 %v1409, 1.442695
        %v1494 = vpow.pop %v1493
        %v1495 = vmul.f32 %v1410, 1.442695
        %v1496 = vpow.pop %v1495
        %v1497 = vmul.f32 %v1411, 1.442695
        %v1498 = vpow.pop %v1497
        %v1499 = vmul.f32 %v1412, 1.442695
        %v1500 = vpow.pop %v1499
        %v1501 = vmul.f32 %v1413, 1.442695
        %v1502 = vpow.pop %v1501
        %v1503 = vmul.f32 %v1414, 1.442695
        %v1504 = vpow.pop %v1503
        %v1505 = vmul.f32 %v1415, 1.442695
        %v1506 = vpow.pop %v1505
        %v1507 = vmul.f32 %v1416, 1.442695
        %v1508 = vpow.pop %v1507
        %v1509 = vmul.f32 %v1417, 1.442695
        %v1510 = vpow.pop %v1509
        %v1511 = vmul.f32 %v1418, 1.442695
        %v1512 = vpow.pop %v1511
        %v1513 = vmul.f32 %v1419, 1.442695
        %v1514 = vpow.pop %v1513
        %v1515 = vmul.f32 %v1420, 1.442695
        %v1516 = vpow.pop %v1515
        %v1517 = vmul.f32 %v1421, 1.442695
        %v1518 = vpow.pop %v1517
        %v1519 = vmul.f32 %v1422, 1.442695
        %v1520 = vpow.pop %v1519
        %v1521 = vmul.f32 %v1423, 1.442695
        %v1522 = vpow.pop %v1521
        %v1523 = vmul.f32 %v1424, 1.442695
        %v1524 = vpow.pop %v1523
        %v1525 = vmul.f32 %v1425, 1.442695
        %v1526 = vpow.pop %v1525
        %v1527 = vmul.f32 %v1426, 1.442695
        %v1528 = vpow.pop %v1527
        %v1529 = vmul.f32 %v1427, 1.442695
        %v1530 = vpow.pop %v1529
        %v1531 = vmul.f32 %v1428, 1.442695
        %v1532 = vpow.pop %v1531
        %v1533 = vmul.f32 %v1429, 1.442695
        %v1534 = vpow.pop %v1533
        %v1535 = vmul.f32 %v1430, 1.442695
        %v1536 = vpow.pop %v1535
        %v1537 = vmul.f32 %v1431, 1.442695
        %v1538 = vpow.pop %v1537
        %v1539 = vmul.f32 %v1432, 1.442695
        %v1540 = vpow.pop %v1539
        %v1541 = vmul.f32 %v1433, 1.442695
        %v1542 = vpow.pop %v1541
        %v1543 = vmul.f32 %v1434, 1.442695
        %v1544 = vpow.pop %v1543
        %v1545 = vmul.f32 %v1435, 1.442695
        %v1546 = vpow.pop %v1545
        %v1547 = vmul.f32 %v1436, 1.442695
        %v1548 = vpow.pop %v1547
        %v1549 = vmul.f32 %v1437, 1.442695
        %v1550 = vpow.pop %v1549
        %v1551 = vmul.f32 %v1438, 1.442695
        %v1552 = vpow.pop %v1551
        %v1553 = vmul.f32 %v1439, 1.442695
        %v1554 = vpow.pop %v1553
        %v1555 = vmul.f32 %v1440, 1.442695
        %v1556 = vpow.pop %v1555
        %v1557 = vmul.f32 %v1441, 1.442695
        %v1558 = vpow.pop %v1557
        %v1559 = vmul.f32 %v1442, 1.442695
        %v1560 = vpow.pop %v1559
        %v1561 = vmul.f32 %v1443, 1.442695
        %v1562 = vpow.pop %v1561
        %v1563 = vmul.f32 %v1444, 1.442695
        %v1564 = vpow.pop %v1563
        %v1565 = vmul.f32 %v1445, 1.442695
        %v1566 = vpow.pop %v1565
        %v1567 = vmul.f32 %v1446, 1.442695
        %v1568 = vpow.pop %v1567
        %v1569 = vmul.f32 %v1447, 1.442695
        %v1570 = vpow.pop %v1569
        %v1571 = vmul.f32 %v1448, 1.442695
        %v1572 = vpow.pop %v1571
        %v1573 = vmul.f32 %v1449, 1.442695
        %v1574 = vpow.pop %v1573
        %v1575 = vmul.f32 %v1450, 1.442695
        %v1576 = vpow.pop %v1575
        %v1577 = vmul.f32 %v1451, 1.442695
        %v1578 = vpow.pop %v1577
        %v1579 = vmul.f32 %v1452, 1.442695
        %v1580 = vpow.pop %v1579
        %v1581 = vadd.f32 %v1454, %v1456
        %1582 = vadd.xlane.f32.xlu0 %v1581
        %v1583 = vpop.xlane.xlu0 %1582
        %v1584 = vadd.f32 %v1458, %v1460
        %1585 = vadd.xlane.f32.xlu0 %v1584
        %v1586 = vpop.xlane.xlu0 %1585
        %v1587 = vadd.f32 %v1462, %v1464
        %1588 = vadd.xlane.f32.xlu0 %v1587
        %v1589 = vpop.xlane.xlu0 %1588
        %v1590 = vadd.f32 %v1466, %v1468
        %1591 = vadd.xlane.f32.xlu0 %v1590
        %v1592 = vpop.xlane.xlu0 %1591
        %v1593 = vadd.f32 %v1470, %v1472
        %1594 = vadd.xlane.f32.xlu0 %v1593
        %v1595 = vpop.xlane.xlu0 %1594
        %v1596 = vadd.f32 %v1474, %v1476
        %1597 = vadd.xlane.f32.xlu0 %v1596
        %v1598 = vpop.xlane.xlu0 %1597
        %v1599 = vadd.f32 %v1478, %v1480
        %1600 = vadd.xlane.f32.xlu0 %v1599
        %v1601 = vpop.xlane.xlu0 %1600
        %v1602 = vadd.f32 %v1482, %v1484
        %1603 = vadd.xlane.f32.xlu0 %v1602
        %v1604 = vpop.xlane.xlu0 %1603
        %v1605 = vadd.f32 %v1486, %v1488
        %1606 = vadd.xlane.f32.xlu0 %v1605
        %v1607 = vpop.xlane.xlu0 %1606
        %v1608 = vadd.f32 %v1490, %v1492
        %1609 = vadd.xlane.f32.xlu0 %v1608
        %v1610 = vpop.xlane.xlu0 %1609
        %v1611 = vadd.f32 %v1494, %v1496
        %1612 = vadd.xlane.f32.xlu0 %v1611
        %v1613 = vpop.xlane.xlu0 %1612
        %v1614 = vadd.f32 %v1498, %v1500
        %1615 = vadd.xlane.f32.xlu0 %v1614
        %v1616 = vpop.xlane.xlu0 %1615
        %v1617 = vadd.f32 %v1502, %v1504
        %1618 = vadd.xlane.f32.xlu0 %v1617
        %v1619 = vpop.xlane.xlu0 %1618
        %v1620 = vadd.f32 %v1506, %v1508
        %1621 = vadd.xlane.f32.xlu0 %v1620
        %v1622 = vpop.xlane.xlu0 %1621
        %v1623 = vadd.f32 %v1510, %v1512
        %1624 = vadd.xlane.f32.xlu0 %v1623
        %v1625 = vpop.xlane.xlu0 %1624
        %v1626 = vadd.f32 %v1514, %v1516
        %1627 = vadd.xlane.f32.xlu0 %v1626
        %v1628 = vpop.xlane.xlu0 %1627
        %v1629 = vadd.f32 %v1518, %v1520
        %1630 = vadd.xlane.f32.xlu0 %v1629
        %v1631 = vpop.xlane.xlu0 %1630
        %v1632 = vadd.f32 %v1522, %v1524
        %1633 = vadd.xlane.f32.xlu0 %v1632
        %v1634 = vpop.xlane.xlu0 %1633
        %v1635 = vadd.f32 %v1526, %v1528
        %1636 = vadd.xlane.f32.xlu0 %v1635
        %v1637 = vpop.xlane.xlu0 %1636
        %v1638 = vadd.f32 %v1530, %v1532
        %1639 = vadd.xlane.f32.xlu0 %v1638
        %v1640 = vpop.xlane.xlu0 %1639
        %v1641 = vadd.f32 %v1534, %v1536
        %1642 = vadd.xlane.f32.xlu0 %v1641
        %v1643 = vpop.xlane.xlu0 %1642
        %v1644 = vadd.f32 %v1538, %v1540
        %1645 = vadd.xlane.f32.xlu0 %v1644
        %v1646 = vpop.xlane.xlu0 %1645
        %v1647 = vadd.f32 %v1542, %v1544
        %1648 = vadd.xlane.f32.xlu0 %v1647
        %v1649 = vpop.xlane.xlu0 %1648
        %v1650 = vadd.f32 %v1546, %v1548
        %1651 = vadd.xlane.f32.xlu0 %v1650
        %v1652 = vpop.xlane.xlu0 %1651
        %v1653 = vadd.f32 %v1550, %v1552
        %1654 = vadd.xlane.f32.xlu0 %v1653
        %v1655 = vpop.xlane.xlu0 %1654
        %v1656 = vadd.f32 %v1554, %v1556
        %1657 = vadd.xlane.f32.xlu0 %v1656
        %v1658 = vpop.xlane.xlu0 %1657
        %v1659 = vadd.f32 %v1558, %v1560
        %1660 = vadd.xlane.f32.xlu0 %v1659
        %v1661 = vpop.xlane.xlu0 %1660
        %v1662 = vadd.f32 %v1562, %v1564
        %1663 = vadd.xlane.f32.xlu0 %v1662
        %v1664 = vpop.xlane.xlu0 %1663
        %v1665 = vadd.f32 %v1566, %v1568
        %1666 = vadd.xlane.f32.xlu0 %v1665
        %v1667 = vpop.xlane.xlu0 %1666
        %v1668 = vadd.f32 %v1570, %v1572
        %1669 = vadd.xlane.f32.xlu0 %v1668
        %v1670 = vpop.xlane.xlu0 %1669
        %v1671 = vadd.f32 %v1574, %v1576
        %1672 = vadd.xlane.f32.xlu0 %v1671
        %v1673 = vpop.xlane.xlu0 %1672
        %v1674 = vadd.f32 %v1578, %v1580
        %1675 = vadd.xlane.f32.xlu0 %v1674
        %v1676 = vpop.xlane.xlu0 %1675
        %v1677 = vrcp.pop %v1583
        %v1678 = vrcp.pop %v1586
        %v1679 = vrcp.pop %v1589
        %v1680 = vrcp.pop %v1592
        %v1681 = vrcp.pop %v1595
        %v1682 = vrcp.pop %v1598
        %v1683 = vrcp.pop %v1601
        %v1684 = vrcp.pop %v1604
        %v1685 = vrcp.pop %v1607
        %v1686 = vrcp.pop %v1610
        %v1687 = vrcp.pop %v1613
        %v1688 = vrcp.pop %v1616
        %v1689 = vrcp.pop %v1619
        %v1690 = vrcp.pop %v1622
        %v1691 = vrcp.pop %v1625
        %v1692 = vrcp.pop %v1628
        %v1693 = vrcp.pop %v1631
        %v1694 = vrcp.pop %v1634
        %v1695 = vrcp.pop %v1637
        %v1696 = vrcp.pop %v1640
        %v1697 = vrcp.pop %v1643
        %v1698 = vrcp.pop %v1646
        %v1699 = vrcp.pop %v1649
        %v1700 = vrcp.pop %v1652
        %v1701 = vrcp.pop %v1655
        %v1702 = vrcp.pop %v1658
        %v1703 = vrcp.pop %v1661
        %v1704 = vrcp.pop %v1664
        %v1705 = vrcp.pop %v1667
        %v1706 = vrcp.pop %v1670
        %v1707 = vrcp.pop %v1673
        %v1708 = vrcp.pop %v1676
        %v1709 = vmul.f32 %v1454, %v1677
        %v1710 = vmul.f32 %v1456, %v1677
        %v1711 = vmul.f32 %v1458, %v1678
        %v1712 = vmul.f32 %v1460, %v1678
        %v1713 = vmul.f32 %v1462, %v1679
        %v1714 = vmul.f32 %v1464, %v1679
        %v1715 = vmul.f32 %v1466, %v1680
        %v1716 = vmul.f32 %v1468, %v1680
        %v1717 = vmul.f32 %v1470, %v1681
        %v1718 = vmul.f32 %v1472, %v1681
        %v1719 = vmul.f32 %v1474, %v1682
        %v1720 = vmul.f32 %v1476, %v1682
        %v1721 = vmul.f32 %v1478, %v1683
        %v1722 = vmul.f32 %v1480, %v1683
        %v1723 = vmul.f32 %v1482, %v1684
        %v1724 = vmul.f32 %v1484, %v1684
        %v1725 = vmul.f32 %v1486, %v1685
        %v1726 = vmul.f32 %v1488, %v1685
        %v1727 = vmul.f32 %v1490, %v1686
        %v1728 = vmul.f32 %v1492, %v1686
        %v1729 = vmul.f32 %v1494, %v1687
        %v1730 = vmul.f32 %v1496, %v1687
        %v1731 = vmul.f32 %v1498, %v1688
        %v1732 = vmul.f32 %v1500, %v1688
        %v1733 = vmul.f32 %v1502, %v1689
        %v1734 = vmul.f32 %v1504, %v1689
        %v1735 = vmul.f32 %v1506, %v1690
        %v1736 = vmul.f32 %v1508, %v1690
        %v1737 = vmul.f32 %v1510, %v1691
        %v1738 = vmul.f32 %v1512, %v1691
        %v1739 = vmul.f32 %v1514, %v1692
        %v1740 = vmul.f32 %v1516, %v1692
        %v1741 = vmul.f32 %v1518, %v1693
        %v1742 = vmul.f32 %v1520, %v1693
        %v1743 = vmul.f32 %v1522, %v1694
        %v1744 = vmul.f32 %v1524, %v1694
        %v1745 = vmul.f32 %v1526, %v1695
        %v1746 = vmul.f32 %v1528, %v1695
        %v1747 = vmul.f32 %v1530, %v1696
        %v1748 = vmul.f32 %v1532, %v1696
        %v1749 = vmul.f32 %v1534, %v1697
        %v1750 = vmul.f32 %v1536, %v1697
        %v1751 = vmul.f32 %v1538, %v1698
        %v1752 = vmul.f32 %v1540, %v1698
        %v1753 = vmul.f32 %v1542, %v1699
        %v1754 = vmul.f32 %v1544, %v1699
        %v1755 = vmul.f32 %v1546, %v1700
        %v1756 = vmul.f32 %v1548, %v1700
        %v1757 = vmul.f32 %v1550, %v1701
        %v1758 = vmul.f32 %v1552, %v1701
        %v1759 = vmul.f32 %v1554, %v1702
        %v1760 = vmul.f32 %v1556, %v1702
        %v1761 = vmul.f32 %v1558, %v1703
        %v1762 = vmul.f32 %v1560, %v1703
        %v1763 = vmul.f32 %v1562, %v1704
        %v1764 = vmul.f32 %v1564, %v1704
        %v1765 = vmul.f32 %v1566, %v1705
        %v1766 = vmul.f32 %v1568, %v1705
        %v1767 = vmul.f32 %v1570, %v1706
        %v1768 = vmul.f32 %v1572, %v1706
        %v1769 = vmul.f32 %v1574, %v1707
        %v1770 = vmul.f32 %v1576, %v1707
        %v1771 = vmul.f32 %v1578, %v1708
        %v1772 = vmul.f32 %v1580, %v1708
        %v1773 = vpack.c.bf16 %v1711, %v1709
        %v1774 = vpack.c.bf16 %v1712, %v1710
        %v1775 = vpack.c.bf16 %v1715, %v1713
        %v1776 = vpack.c.bf16 %v1716, %v1714
        %v1777 = vpack.c.bf16 %v1719, %v1717
        %v1778 = vpack.c.bf16 %v1720, %v1718
        %v1779 = vpack.c.bf16 %v1723, %v1721
        %v1780 = vpack.c.bf16 %v1724, %v1722
        %v1781 = vpack.c.bf16 %v1727, %v1725
        %v1782 = vpack.c.bf16 %v1728, %v1726
        %v1783 = vpack.c.bf16 %v1731, %v1729
        %v1784 = vpack.c.bf16 %v1732, %v1730
        %v1785 = vpack.c.bf16 %v1735, %v1733
        %v1786 = vpack.c.bf16 %v1736, %v1734
        %v1787 = vpack.c.bf16 %v1739, %v1737
        %v1788 = vpack.c.bf16 %v1740, %v1738
        %v1789 = vpack.c.bf16 %v1743, %v1741
        %v1790 = vpack.c.bf16 %v1744, %v1742
        %v1791 = vpack.c.bf16 %v1747, %v1745
        %v1792 = vpack.c.bf16 %v1748, %v1746
        %v1793 = vpack.c.bf16 %v1751, %v1749
        %v1794 = vpack.c.bf16 %v1752, %v1750
        %v1795 = vpack.c.bf16 %v1755, %v1753
        %v1796 = vpack.c.bf16 %v1756, %v1754
        %v1797 = vpack.c.bf16 %v1759, %v1757
        %v1798 = vpack.c.bf16 %v1760, %v1758
        %v1799 = vpack.c.bf16 %v1763, %v1761
        %v1800 = vpack.c.bf16 %v1764, %v1762
        %v1801 = vpack.c.bf16 %v1767, %v1765
        %v1802 = vpack.c.bf16 %v1768, %v1766
        %v1803 = vpack.c.bf16 %v1771, %v1769
        %v1804 = vpack.c.bf16 %v1772, %v1770
        %v1805 = vld [vmem:[#allocation13] sm:$0xff]
        %v1806 = vld [vmem:[#allocation13 + $0x8] sm:$0xff]
        %v1807 = vld [vmem:[#allocation13 + $0x10] sm:$0xff]
        %v1808 = vld [vmem:[#allocation13 + $0x18] sm:$0xff]
        %v1809 = vld [vmem:[#allocation13 + $0x20] sm:$0xff]
        %v1810 = vld [vmem:[#allocation13 + $0x28] sm:$0xff]
        %v1811 = vld [vmem:[#allocation13 + $0x30] sm:$0xff]
        %v1812 = vld [vmem:[#allocation13 + $0x38] sm:$0xff]
        %v1813 = vld [vmem:[#allocation13 + $0x40] sm:$0xff]
        %v1814 = vld [vmem:[#allocation13 + $0x48] sm:$0xff]
        %v1815 = vld [vmem:[#allocation13 + $0x50] sm:$0xff]
        %v1816 = vld [vmem:[#allocation13 + $0x58] sm:$0xff]
        %v1817 = vld [vmem:[#allocation13 + $0x60] sm:$0xff]
        %v1818 = vld [vmem:[#allocation13 + $0x68] sm:$0xff]
        %v1819 = vld [vmem:[#allocation13 + $0x70] sm:$0xff]
        %v1820 = vld [vmem:[#allocation13 + $0x78] sm:$0xff]
        %v1853 = vunpack.c.l.b16 %v812
        %v1854 = vunpack.c.l.b16 %v813
        %v1855 = vunpack.c.l.b16 %v814
        %v1856 = vunpack.c.l.b16 %v815
        %v1857 = vunpack.c.l.b16 %v816
        %v1858 = vunpack.c.l.b16 %v817
        %v1859 = vunpack.c.l.b16 %v818
        %v1860 = vunpack.c.l.b16 %v819
        %v1861 = vunpack.c.l.b16 %v820
        %v1862 = vunpack.c.l.b16 %v821
        %v1863 = vunpack.c.l.b16 %v822
        %v1864 = vunpack.c.l.b16 %v823
        %v1865 = vunpack.c.l.b16 %v824
        %v1866 = vunpack.c.l.b16 %v825
        %v1867 = vunpack.c.l.b16 %v826
        %v1868 = vunpack.c.l.b16 %v827
        %v1869 = vunpack.c.l.b16 %v828
        %v1870 = vunpack.c.l.b16 %v829
        %v1871 = vunpack.c.l.b16 %v830
        %v1872 = vunpack.c.l.b16 %v831
        %v1873 = vunpack.c.l.b16 %v832
        %v1874 = vunpack.c.l.b16 %v833
        %v1875 = vunpack.c.l.b16 %v834
        %v1876 = vunpack.c.l.b16 %v835
        %v1877 = vunpack.c.l.b16 %v836
        %v1878 = vunpack.c.l.b16 %v837
        %v1879 = vunpack.c.l.b16 %v838
        %v1880 = vunpack.c.l.b16 %v839
        %v1881 = vunpack.c.l.b16 %v840
        %v1882 = vunpack.c.l.b16 %v841
        %v1883 = vunpack.c.l.b16 %v842
        %v1884 = vunpack.c.l.b16 %v843
        %v1885 = vpack.c.b16 %v1854, %v1853
        %v1886 = vpack.c.b16 %v1856, %v1855
        %v1887 = vpack.c.b16 %v1858, %v1857
        %v1888 = vpack.c.b16 %v1860, %v1859
        %v1889 = vpack.c.b16 %v1862, %v1861
        %v1890 = vpack.c.b16 %v1864, %v1863
        %v1891 = vpack.c.b16 %v1866, %v1865
        %v1892 = vpack.c.b16 %v1868, %v1867
        %v1893 = vpack.c.b16 %v1870, %v1869
        %v1894 = vpack.c.b16 %v1872, %v1871
        %v1895 = vpack.c.b16 %v1874, %v1873
        %v1896 = vpack.c.b16 %v1876, %v1875
        %v1897 = vpack.c.b16 %v1878, %v1877
        %v1898 = vpack.c.b16 %v1880, %v1879
        %v1899 = vpack.c.b16 %v1882, %v1881
        %v1900 = vpack.c.b16 %v1884, %v1883
        %v1933 = vunpack.c.l.b16 %v1805
        %v1934 = vunpack.c.h.b16 %v1805
        %v1935 = vunpack.c.l.b16 %v1806
        %v1936 = vunpack.c.h.b16 %v1806
        %v1937 = vunpack.c.l.b16 %v1807
        %v1938 = vunpack.c.h.b16 %v1807
        %v1939 = vunpack.c.l.b16 %v1808
        %v1940 = vunpack.c.h.b16 %v1808
        %v1941 = vunpack.c.l.b16 %v1809
        %v1942 = vunpack.c.h.b16 %v1809
        %v1943 = vunpack.c.l.b16 %v1810
        %v1944 = vunpack.c.h.b16 %v1810
        %v1945 = vunpack.c.l.b16 %v1811
        %v1946 = vunpack.c.h.b16 %v1811
        %v1947 = vunpack.c.l.b16 %v1812
        %v1948 = vunpack.c.h.b16 %v1812
        %v1949 = vunpack.c.l.b16 %v1813
        %v1950 = vunpack.c.h.b16 %v1813
        %v1951 = vunpack.c.l.b16 %v1814
        %v1952 = vunpack.c.h.b16 %v1814
        %v1953 = vunpack.c.l.b16 %v1815
        %v1954 = vunpack.c.h.b16 %v1815
        %v1955 = vunpack.c.l.b16 %v1816
        %v1956 = vunpack.c.h.b16 %v1816
        %v1957 = vunpack.c.l.b16 %v1817
        %v1958 = vunpack.c.h.b16 %v1817
        %v1959 = vunpack.c.l.b16 %v1818
        %v1960 = vunpack.c.h.b16 %v1818
        %v1961 = vunpack.c.l.b16 %v1819
        %v1962 = vunpack.c.h.b16 %v1819
        %v1963 = vunpack.c.l.b16 %v1820
        %v1964 = vunpack.c.h.b16 %v1820
        %v1965 = vpack.c.b16 %v1935, %v1933
        %v1966 = vpack.c.b16 %v1936, %v1934
        %v1967 = vpack.c.b16 %v1939, %v1937
        %v1968 = vpack.c.b16 %v1940, %v1938
        %v1969 = vpack.c.b16 %v1943, %v1941
        %v1970 = vpack.c.b16 %v1944, %v1942
        %v1971 = vpack.c.b16 %v1947, %v1945
        %v1972 = vpack.c.b16 %v1948, %v1946
        %v1973 = vpack.c.b16 %v1951, %v1949
        %v1974 = vpack.c.b16 %v1952, %v1950
        %v1975 = vpack.c.b16 %v1955, %v1953
        %v1976 = vpack.c.b16 %v1956, %v1954
        %v1977 = vpack.c.b16 %v1959, %v1957
        %v1978 = vpack.c.b16 %v1960, %v1958
        %v1979 = vpack.c.b16 %v1963, %v1961
        %v1980 = vpack.c.b16 %v1964, %v1962
        %1997 = vmatprep.subr.bf16.mxu0 %v1980
        %1998 = vmatpush1.bf16.msra.mxu0 %v1979
        %1999 = vmatprep.subr.bf16.mxu0 %v1978
        %2000 = vmatpush1.bf16.msra.mxu0 %v1977
        %2001 = vmatprep.subr.bf16.mxu0 %v1976
        %2002 = vmatpush1.bf16.msra.mxu0 %v1975
        %2003 = vmatprep.subr.bf16.mxu0 %v1974
        %2004 = vmatpush1.bf16.msra.mxu0 %v1973
        %2005 = vmatprep.subr.bf16.mxu0 %v1972
        %2006 = vmatpush1.bf16.msra.mxu0 %v1971
        %2007 = vmatprep.subr.bf16.mxu0 %v1970
        %2008 = vmatpush1.bf16.msra.mxu0 %v1969
        %2009 = vmatprep.subr.bf16.mxu0 %v1968
        %2010 = vmatpush1.bf16.msra.mxu0 %v1967
        %2011 = vmatprep.subr.bf16.mxu0 %v1966
        %2012 = vmatpush1.bf16.msra.mxu0 %v1965
        %2013 = vmatprep.subr.bf16.mxu0 0
        %2014 = vmatpush2.bf16.msra.mxu0 0
        %2015 = vmatprep.subr.bf16.mxu0 0
        %2016 = vmatpush2.bf16.msra.mxu0 0
        %2017 = vmatprep.subr.bf16.mxu0 0
        %2018 = vmatpush2.bf16.msra.mxu0 0
        %2019 = vmatprep.subr.bf16.mxu0 0
        %2020 = vmatpush2.bf16.msra.mxu0 0
        %2021 = vmatprep.subr.bf16.mxu0 0
        %2022 = vmatpush2.bf16.msra.mxu0 0
        %2023 = vmatprep.subr.bf16.mxu0 0
        %2024 = vmatpush2.bf16.msra.mxu0 0
        %2025 = vmatprep.subr.bf16.mxu0 0
        %2026 = vmatpush2.bf16.msra.mxu0 0
        %2027 = vmatprep.subr.bf16.mxu0 0
        %2028 = vmatpush2.bf16.msra.mxu0 0
        %2029 = vmatprep.mubr.bf16.mxu0 0
        %2030 = vmatmul.mubr.bf16.gmra.mxu0 %v1885
        %v2031 = vpop.f32.mrf.mxu0
        %v2032 = vadd.f32 0.0, %v2031
        %v2033 = vpop.f32.mrf.mxu0
        %v2034 = vadd.f32 0.0, %v2033
        %v2035 = vpop.f32.mrf.mxu0
        %v2036 = vadd.f32 0.0, %v2035
        %v2037 = vpop.f32.mrf.mxu0
        %v2038 = vadd.f32 0.0, %v2037
        %2039 = vmatprep.mubr.bf16.mxu0 0
        %2040 = vmatmul.mubr.bf16.gmra.mxu0 %v1886
        %v2041 = vpop.f32.mrf.mxu0
        %v2042 = vadd.f32 0.0, %v2041
        %v2043 = vpop.f32.mrf.mxu0
        %v2044 = vadd.f32 0.0, %v2043
        %v2045 = vpop.f32.mrf.mxu0
        %v2046 = vadd.f32 0.0, %v2045
        %v2047 = vpop.f32.mrf.mxu0
        %v2048 = vadd.f32 0.0, %v2047
        %2049 = vmatprep.mubr.bf16.mxu0 0
        %2050 = vmatmul.mubr.bf16.gmra.mxu0 %v1887
        %v2051 = vpop.f32.mrf.mxu0
        %v2052 = vadd.f32 0.0, %v2051
        %v2053 = vpop.f32.mrf.mxu0
        %v2054 = vadd.f32 0.0, %v2053
        %v2055 = vpop.f32.mrf.mxu0
        %v2056 = vadd.f32 0.0, %v2055
        %v2057 = vpop.f32.mrf.mxu0
        %v2058 = vadd.f32 0.0, %v2057
        %2059 = vmatprep.mubr.bf16.mxu0 0
        %2060 = vmatmul.mubr.bf16.gmra.mxu0 %v1888
        %v2061 = vpop.f32.mrf.mxu0
        %v2062 = vadd.f32 0.0, %v2061
        %v2063 = vpop.f32.mrf.mxu0
        %v2064 = vadd.f32 0.0, %v2063
        %v2065 = vpop.f32.mrf.mxu0
        %v2066 = vadd.f32 0.0, %v2065
        %v2067 = vpop.f32.mrf.mxu0
        %v2068 = vadd.f32 0.0, %v2067
        %2069 = vmatprep.mubr.bf16.mxu0 0
        %2070 = vmatmul.mubr.bf16.gmra.mxu0 %v1889
        %v2071 = vpop.f32.mrf.mxu0
        %v2072 = vadd.f32 0.0, %v2071
        %v2073 = vpop.f32.mrf.mxu0
        %v2074 = vadd.f32 0.0, %v2073
        %v2075 = vpop.f32.mrf.mxu0
        %v2076 = vadd.f32 0.0, %v2075
        %v2077 = vpop.f32.mrf.mxu0
        %v2078 = vadd.f32 0.0, %v2077
        %2079 = vmatprep.mubr.bf16.mxu0 0
        %2080 = vmatmul.mubr.bf16.gmra.mxu0 %v1890
        %v2081 = vpop.f32.mrf.mxu0
        %v2082 = vadd.f32 0.0, %v2081
        %v2083 = vpop.f32.mrf.mxu0
        %v2084 = vadd.f32 0.0, %v2083
        %v2085 = vpop.f32.mrf.mxu0
        %v2086 = vadd.f32 0.0, %v2085
        %v2087 = vpop.f32.mrf.mxu0
        %v2088 = vadd.f32 0.0, %v2087
        %2089 = vmatprep.mubr.bf16.mxu0 0
        %2090 = vmatmul.mubr.bf16.gmra.mxu0 %v1891
        %v2091 = vpop.f32.mrf.mxu0
        %v2092 = vadd.f32 0.0, %v2091
        %v2093 = vpop.f32.mrf.mxu0
        %v2094 = vadd.f32 0.0, %v2093
        %v2095 = vpop.f32.mrf.mxu0
        %v2096 = vadd.f32 0.0, %v2095
        %v2097 = vpop.f32.mrf.mxu0
        %v2098 = vadd.f32 0.0, %v2097
        %2099 = vmatprep.mubr.bf16.mxu0 0
        %2100 = vmatmul.mubr.bf16.gmra.mxu0 %v1892
        %v2101 = vpop.f32.mrf.mxu0
        %v2102 = vadd.f32 0.0, %v2101
        %v2103 = vpop.f32.mrf.mxu0
        %v2104 = vadd.f32 0.0, %v2103
        %v2105 = vpop.f32.mrf.mxu0
        %v2106 = vadd.f32 0.0, %v2105
        %v2107 = vpop.f32.mrf.mxu0
        %v2108 = vadd.f32 0.0, %v2107
        %2109 = vmatprep.mubr.bf16.mxu0 0
        %2110 = vmatmul.mubr.bf16.gmra.mxu0 %v1893
        %v2111 = vpop.f32.mrf.mxu0
        %v2112 = vadd.f32 0.0, %v2111
        %v2113 = vpop.f32.mrf.mxu0
        %v2114 = vadd.f32 0.0, %v2113
        %v2115 = vpop.f32.mrf.mxu0
        %v2116 = vadd.f32 0.0, %v2115
        %v2117 = vpop.f32.mrf.mxu0
        %v2118 = vadd.f32 0.0, %v2117
        %2119 = vmatprep.mubr.bf16.mxu0 0
        %2120 = vmatmul.mubr.bf16.gmra.mxu0 %v1894
        %v2121 = vpop.f32.mrf.mxu0
        %v2122 = vadd.f32 0.0, %v2121
        %v2123 = vpop.f32.mrf.mxu0
        %v2124 = vadd.f32 0.0, %v2123
        %v2125 = vpop.f32.mrf.mxu0
        %v2126 = vadd.f32 0.0, %v2125
        %v2127 = vpop.f32.mrf.mxu0
        %v2128 = vadd.f32 0.0, %v2127
        %2129 = vmatprep.mubr.bf16.mxu0 0
        %2130 = vmatmul.mubr.bf16.gmra.mxu0 %v1895
        %v2131 = vpop.f32.mrf.mxu0
        %v2132 = vadd.f32 0.0, %v2131
        %v2133 = vpop.f32.mrf.mxu0
        %v2134 = vadd.f32 0.0, %v2133
        %v2135 = vpop.f32.mrf.mxu0
        %v2136 = vadd.f32 0.0, %v2135
        %v2137 = vpop.f32.mrf.mxu0
        %v2138 = vadd.f32 0.0, %v2137
        %2139 = vmatprep.mubr.bf16.mxu0 0
        %2140 = vmatmul.mubr.bf16.gmra.mxu0 %v1896
        %v2141 = vpop.f32.mrf.mxu0
        %v2142 = vadd.f32 0.0, %v2141
        %v2143 = vpop.f32.mrf.mxu0
        %v2144 = vadd.f32 0.0, %v2143
        %v2145 = vpop.f32.mrf.mxu0
        %v2146 = vadd.f32 0.0, %v2145
        %v2147 = vpop.f32.mrf.mxu0
        %v2148 = vadd.f32 0.0, %v2147
        %2149 = vmatprep.mubr.bf16.mxu0 0
        %2150 = vmatmul.mubr.bf16.gmra.mxu0 %v1897
        %v2151 = vpop.f32.mrf.mxu0
        %v2152 = vadd.f32 0.0, %v2151
        %v2153 = vpop.f32.mrf.mxu0
        %v2154 = vadd.f32 0.0, %v2153
        %v2155 = vpop.f32.mrf.mxu0
        %v2156 = vadd.f32 0.0, %v2155
        %v2157 = vpop.f32.mrf.mxu0
        %v2158 = vadd.f32 0.0, %v2157
        %2159 = vmatprep.mubr.bf16.mxu0 0
        %2160 = vmatmul.mubr.bf16.gmra.mxu0 %v1898
        %v2161 = vpop.f32.mrf.mxu0
        %v2162 = vadd.f32 0.0, %v2161
        %v2163 = vpop.f32.mrf.mxu0
        %v2164 = vadd.f32 0.0, %v2163
        %v2165 = vpop.f32.mrf.mxu0
        %v2166 = vadd.f32 0.0, %v2165
        %v2167 = vpop.f32.mrf.mxu0
        %v2168 = vadd.f32 0.0, %v2167
        %2169 = vmatprep.mubr.bf16.mxu0 0
        %2170 = vmatmul.mubr.bf16.gmra.mxu0 %v1899
        %v2171 = vpop.f32.mrf.mxu0
        %v2172 = vadd.f32 0.0, %v2171
        %v2173 = vpop.f32.mrf.mxu0
        %v2174 = vadd.f32 0.0, %v2173
        %v2175 = vpop.f32.mrf.mxu0
        %v2176 = vadd.f32 0.0, %v2175
        %v2177 = vpop.f32.mrf.mxu0
        %v2178 = vadd.f32 0.0, %v2177
        %2179 = vmatprep.mubr.bf16.mxu0 0
        %2180 = vmatmul.mubr.bf16.gmra.mxu0 %v1900
        %v2181 = vpop.f32.mrf.mxu0
        %v2182 = vadd.f32 0.0, %v2181
        %v2183 = vpop.f32.mrf.mxu0
        %v2184 = vadd.f32 0.0, %v2183
        %v2185 = vpop.f32.mrf.mxu0
        %v2186 = vadd.f32 0.0, %v2185
        %v2187 = vpop.f32.mrf.mxu0
        %v2188 = vadd.f32 0.0, %v2187
        %2189 = vdwg.mxu0
        %v2190 = vmax.f32 %v2032, %v2034
        %2191 = vmax.xlane.f32.xlu0 %v2190
        %v2192 = vpop.xlane.xlu0 %2191
        %v2193 = vmax.f32 %v2036, %v2038
        %2194 = vmax.xlane.f32.xlu0 %v2193
        %v2195 = vpop.xlane.xlu0 %2194
        %v2196 = vmax.f32 %v2042, %v2044
        %2197 = vmax.xlane.f32.xlu0 %v2196
        %v2198 = vpop.xlane.xlu0 %2197
        %v2199 = vmax.f32 %v2046, %v2048
        %2200 = vmax.xlane.f32.xlu0 %v2199
        %v2201 = vpop.xlane.xlu0 %2200
        %v2202 = vmax.f32 %v2052, %v2054
        %2203 = vmax.xlane.f32.xlu0 %v2202
        %v2204 = vpop.xlane.xlu0 %2203
        %v2205 = vmax.f32 %v2056, %v2058
        %2206 = vmax.xlane.f32.xlu0 %v2205
        %v2207 = vpop.xlane.xlu0 %2206
        %v2208 = vmax.f32 %v2062, %v2064
        %2209 = vmax.xlane.f32.xlu0 %v2208
        %v2210 = vpop.xlane.xlu0 %2209
        %v2211 = vmax.f32 %v2066, %v2068
        %2212 = vmax.xlane.f32.xlu0 %v2211
        %v2213 = vpop.xlane.xlu0 %2212
        %v2214 = vmax.f32 %v2072, %v2074
        %2215 = vmax.xlane.f32.xlu0 %v2214
        %v2216 = vpop.xlane.xlu0 %2215
        %v2217 = vmax.f32 %v2076, %v2078
        %2218 = vmax.xlane.f32.xlu0 %v2217
        %v2219 = vpop.xlane.xlu0 %2218
        %v2220 = vmax.f32 %v2082, %v2084
        %2221 = vmax.xlane.f32.xlu0 %v2220
        %v2222 = vpop.xlane.xlu0 %2221
        %v2223 = vmax.f32 %v2086, %v2088
        %2224 = vmax.xlane.f32.xlu0 %v2223
        %v2225 = vpop.xlane.xlu0 %2224
        %v2226 = vmax.f32 %v2092, %v2094
        %2227 = vmax.xlane.f32.xlu0 %v2226
        %v2228 = vpop.xlane.xlu0 %2227
        %v2229 = vmax.f32 %v2096, %v2098
        %2230 = vmax.xlane.f32.xlu0 %v2229
        %v2231 = vpop.xlane.xlu0 %2230
        %v2232 = vmax.f32 %v2102, %v2104
        %2233 = vmax.xlane.f32.xlu0 %v2232
        %v2234 = vpop.xlane.xlu0 %2233
        %v2235 = vmax.f32 %v2106, %v2108
        %2236 = vmax.xlane.f32.xlu0 %v2235
        %v2237 = vpop.xlane.xlu0 %2236
        %v2238 = vmax.f32 %v2112, %v2114
        %2239 = vmax.xlane.f32.xlu0 %v2238
        %v2240 = vpop.xlane.xlu0 %2239
        %v2241 = vmax.f32 %v2116, %v2118
        %2242 = vmax.xlane.f32.xlu0 %v2241
        %v2243 = vpop.xlane.xlu0 %2242
        %v2244 = vmax.f32 %v2122, %v2124
        %2245 = vmax.xlane.f32.xlu0 %v2244
        %v2246 = vpop.xlane.xlu0 %2245
        %v2247 = vmax.f32 %v2126, %v2128
        %2248 = vmax.xlane.f32.xlu0 %v2247
        %v2249 = vpop.xlane.xlu0 %2248
        %v2250 = vmax.f32 %v2132, %v2134
        %2251 = vmax.xlane.f32.xlu0 %v2250
        %v2252 = vpop.xlane.xlu0 %2251
        %v2253 = vmax.f32 %v2136, %v2138
        %2254 = vmax.xlane.f32.xlu0 %v2253
        %v2255 = vpop.xlane.xlu0 %2254
        %v2256 = vmax.f32 %v2142, %v2144
        %2257 = vmax.xlane.f32.xlu0 %v2256
        %v2258 = vpop.xlane.xlu0 %2257
        %v2259 = vmax.f32 %v2146, %v2148
        %2260 = vmax.xlane.f32.xlu0 %v2259
        %v2261 = vpop.xlane.xlu0 %2260
        %v2262 = vmax.f32 %v2152, %v2154
        %2263 = vmax.xlane.f32.xlu0 %v2262
        %v2264 = vpop.xlane.xlu0 %2263
        %v2265 = vmax.f32 %v2156, %v2158
        %2266 = vmax.xlane.f32.xlu0 %v2265
        %v2267 = vpop.xlane.xlu0 %2266
        %v2268 = vmax.f32 %v2162, %v2164
        %2269 = vmax.xlane.f32.xlu0 %v2268
        %v2270 = vpop.xlane.xlu0 %2269
        %v2271 = vmax.f32 %v2166, %v2168
        %2272 = vmax.xlane.f32.xlu0 %v2271
        %v2273 = vpop.xlane.xlu0 %2272
        %v2274 = vmax.f32 %v2172, %v2174
        %2275 = vmax.xlane.f32.xlu0 %v2274
        %v2276 = vpop.xlane.xlu0 %2275
        %v2277 = vmax.f32 %v2176, %v2178
        %2278 = vmax.xlane.f32.xlu0 %v2277
        %v2279 = vpop.xlane.xlu0 %2278
        %v2280 = vmax.f32 %v2182, %v2184
        %2281 = vmax.xlane.f32.xlu0 %v2280
        %v2282 = vpop.xlane.xlu0 %2281
        %v2283 = vmax.f32 %v2186, %v2188
        %2284 = vmax.xlane.f32.xlu0 %v2283
        %v2285 = vpop.xlane.xlu0 %2284
        %v2286 = vsub.f32 %v2032, %v2192
        %v2287 = vsub.f32 %v2034, %v2192
        %v2288 = vsub.f32 %v2036, %v2195
        %v2289 = vsub.f32 %v2038, %v2195
        %v2290 = vsub.f32 %v2042, %v2198
        %v2291 = vsub.f32 %v2044, %v2198
        %v2292 = vsub.f32 %v2046, %v2201
        %v2293 = vsub.f32 %v2048, %v2201
        %v2294 = vsub.f32 %v2052, %v2204
        %v2295 = vsub.f32 %v2054, %v2204
        %v2296 = vsub.f32 %v2056, %v2207
        %v2297 = vsub.f32 %v2058, %v2207
        %v2298 = vsub.f32 %v2062, %v2210
        %v2299 = vsub.f32 %v2064, %v2210
        %v2300 = vsub.f32 %v2066, %v2213
        %v2301 = vsub.f32 %v2068, %v2213
        %v2302 = vsub.f32 %v2072, %v2216
        %v2303 = vsub.f32 %v2074, %v2216
        %v2304 = vsub.f32 %v2076, %v2219
        %v2305 = vsub.f32 %v2078, %v2219
        %v2306 = vsub.f32 %v2082, %v2222
        %v2307 = vsub.f32 %v2084, %v2222
        %v2308 = vsub.f32 %v2086, %v2225
        %v2309 = vsub.f32 %v2088, %v2225
        %v2310 = vsub.f32 %v2092, %v2228
        %v2311 = vsub.f32 %v2094, %v2228
        %v2312 = vsub.f32 %v2096, %v2231
        %v2313 = vsub.f32 %v2098, %v2231
        %v2314 = vsub.f32 %v2102, %v2234
        %v2315 = vsub.f32 %v2104, %v2234
        %v2316 = vsub.f32 %v2106, %v2237
        %v2317 = vsub.f32 %v2108, %v2237
        %v2318 = vsub.f32 %v2112, %v2240
        %v2319 = vsub.f32 %v2114, %v2240
        %v2320 = vsub.f32 %v2116, %v2243
        %v2321 = vsub.f32 %v2118, %v2243
        %v2322 = vsub.f32 %v2122, %v2246
        %v2323 = vsub.f32 %v2124, %v2246
        %v2324 = vsub.f32 %v2126, %v2249
        %v2325 = vsub.f32 %v2128, %v2249
        %v2326 = vsub.f32 %v2132, %v2252
        %v2327 = vsub.f32 %v2134, %v2252
        %v2328 = vsub.f32 %v2136, %v2255
        %v2329 = vsub.f32 %v2138, %v2255
        %v2330 = vsub.f32 %v2142, %v2258
        %v2331 = vsub.f32 %v2144, %v2258
        %v2332 = vsub.f32 %v2146, %v2261
        %v2333 = vsub.f32 %v2148, %v2261
        %v2334 = vsub.f32 %v2152, %v2264
        %v2335 = vsub.f32 %v2154, %v2264
        %v2336 = vsub.f32 %v2156, %v2267
        %v2337 = vsub.f32 %v2158, %v2267
        %v2338 = vsub.f32 %v2162, %v2270
        %v2339 = vsub.f32 %v2164, %v2270
        %v2340 = vsub.f32 %v2166, %v2273
        %v2341 = vsub.f32 %v2168, %v2273
        %v2342 = vsub.f32 %v2172, %v2276
        %v2343 = vsub.f32 %v2174, %v2276
        %v2344 = vsub.f32 %v2176, %v2279
        %v2345 = vsub.f32 %v2178, %v2279
        %v2346 = vsub.f32 %v2182, %v2282
        %v2347 = vsub.f32 %v2184, %v2282
        %v2348 = vsub.f32 %v2186, %v2285
        %v2349 = vsub.f32 %v2188, %v2285
        %v2350 = vmul.f32 %v2286, 1.442695
        %v2351 = vpow.pop %v2350
        %v2352 = vmul.f32 %v2287, 1.442695
        %v2353 = vpow.pop %v2352
        %v2354 = vmul.f32 %v2288, 1.442695
        %v2355 = vpow.pop %v2354
        %v2356 = vmul.f32 %v2289, 1.442695
        %v2357 = vpow.pop %v2356
        %v2358 = vmul.f32 %v2290, 1.442695
        %v2359 = vpow.pop %v2358
        %v2360 = vmul.f32 %v2291, 1.442695
        %v2361 = vpow.pop %v2360
        %v2362 = vmul.f32 %v2292, 1.442695
        %v2363 = vpow.pop %v2362
        %v2364 = vmul.f32 %v2293, 1.442695
        %v2365 = vpow.pop %v2364
        %v2366 = vmul.f32 %v2294, 1.442695
        %v2367 = vpow.pop %v2366
        %v2368 = vmul.f32 %v2295, 1.442695
        %v2369 = vpow.pop %v2368
        %v2370 = vmul.f32 %v2296, 1.442695
        %v2371 = vpow.pop %v2370
        %v2372 = vmul.f32 %v2297, 1.442695
        %v2373 = vpow.pop %v2372
        %v2374 = vmul.f32 %v2298, 1.442695
        %v2375 = vpow.pop %v2374
        %v2376 = vmul.f32 %v2299, 1.442695
        %v2377 = vpow.pop %v2376
        %v2378 = vmul.f32 %v2300, 1.442695
        %v2379 = vpow.pop %v2378
        %v2380 = vmul.f32 %v2301, 1.442695
        %v2381 = vpow.pop %v2380
        %v2382 = vmul.f32 %v2302, 1.442695
        %v2383 = vpow.pop %v2382
        %v2384 = vmul.f32 %v2303, 1.442695
        %v2385 = vpow.pop %v2384
        %v2386 = vmul.f32 %v2304, 1.442695
        %v2387 = vpow.pop %v2386
        %v2388 = vmul.f32 %v2305, 1.442695
        %v2389 = vpow.pop %v2388
        %v2390 = vmul.f32 %v2306, 1.442695
        %v2391 = vpow.pop %v2390
        %v2392 = vmul.f32 %v2307, 1.442695
        %v2393 = vpow.pop %v2392
        %v2394 = vmul.f32 %v2308, 1.442695
        %v2395 = vpow.pop %v2394
        %v2396 = vmul.f32 %v2309, 1.442695
        %v2397 = vpow.pop %v2396
        %v2398 = vmul.f32 %v2310, 1.442695
        %v2399 = vpow.pop %v2398
        %v2400 = vmul.f32 %v2311, 1.442695
        %v2401 = vpow.pop %v2400
        %v2402 = vmul.f32 %v2312, 1.442695
        %v2403 = vpow.pop %v2402
        %v2404 = vmul.f32 %v2313, 1.442695
        %v2405 = vpow.pop %v2404
        %v2406 = vmul.f32 %v2314, 1.442695
        %v2407 = vpow.pop %v2406
        %v2408 = vmul.f32 %v2315, 1.442695
        %v2409 = vpow.pop %v2408
        %v2410 = vmul.f32 %v2316, 1.442695
        %v2411 = vpow.pop %v2410
        %v2412 = vmul.f32 %v2317, 1.442695
        %v2413 = vpow.pop %v2412
        %v2414 = vmul.f32 %v2318, 1.442695
        %v2415 = vpow.pop %v2414
        %v2416 = vmul.f32 %v2319, 1.442695
        %v2417 = vpow.pop %v2416
        %v2418 = vmul.f32 %v2320, 1.442695
        %v2419 = vpow.pop %v2418
        %v2420 = vmul.f32 %v2321, 1.442695
        %v2421 = vpow.pop %v2420
        %v2422 = vmul.f32 %v2322, 1.442695
        %v2423 = vpow.pop %v2422
        %v2424 = vmul.f32 %v2323, 1.442695
        %v2425 = vpow.pop %v2424
        %v2426 = vmul.f32 %v2324, 1.442695
        %v2427 = vpow.pop %v2426
        %v2428 = vmul.f32 %v2325, 1.442695
        %v2429 = vpow.pop %v2428
        %v2430 = vmul.f32 %v2326, 1.442695
        %v2431 = vpow.pop %v2430
        %v2432 = vmul.f32 %v2327, 1.442695
        %v2433 = vpow.pop %v2432
        %v2434 = vmul.f32 %v2328, 1.442695
        %v2435 = vpow.pop %v2434
        %v2436 = vmul.f32 %v2329, 1.442695
        %v2437 = vpow.pop %v2436
        %v2438 = vmul.f32 %v2330, 1.442695
        %v2439 = vpow.pop %v2438
        %v2440 = vmul.f32 %v2331, 1.442695
        %v2441 = vpow.pop %v2440
        %v2442 = vmul.f32 %v2332, 1.442695
        %v2443 = vpow.pop %v2442
        %v2444 = vmul.f32 %v2333, 1.442695
        %v2445 = vpow.pop %v2444
        %v2446 = vmul.f32 %v2334, 1.442695
        %v2447 = vpow.pop %v2446
        %v2448 = vmul.f32 %v2335, 1.442695
        %v2449 = vpow.pop %v2448
        %v2450 = vmul.f32 %v2336, 1.442695
        %v2451 = vpow.pop %v2450
        %v2452 = vmul.f32 %v2337, 1.442695
        %v2453 = vpow.pop %v2452
        %v2454 = vmul.f32 %v2338, 1.442695
        %v2455 = vpow.pop %v2454
        %v2456 = vmul.f32 %v2339, 1.442695
        %v2457 = vpow.pop %v2456
        %v2458 = vmul.f32 %v2340, 1.442695
        %v2459 = vpow.pop %v2458
        %v2460 = vmul.f32 %v2341, 1.442695
        %v2461 = vpow.pop %v2460
        %v2462 = vmul.f32 %v2342, 1.442695
        %v2463 = vpow.pop %v2462
        %v2464 = vmul.f32 %v2343, 1.442695
        %v2465 = vpow.pop %v2464
        %v2466 = vmul.f32 %v2344, 1.442695
        %v2467 = vpow.pop %v2466
        %v2468 = vmul.f32 %v2345, 1.442695
        %v2469 = vpow.pop %v2468
        %v2470 = vmul.f32 %v2346, 1.442695
        %v2471 = vpow.pop %v2470
        %v2472 = vmul.f32 %v2347, 1.442695
        %v2473 = vpow.pop %v2472
        %v2474 = vmul.f32 %v2348, 1.442695
        %v2475 = vpow.pop %v2474
        %v2476 = vmul.f32 %v2349, 1.442695
        %v2477 = vpow.pop %v2476
        %v2478 = vadd.f32 %v2351, %v2353
        %2479 = vadd.xlane.f32.xlu0 %v2478
        %v2480 = vpop.xlane.xlu0 %2479
        %v2481 = vadd.f32 %v2355, %v2357
        %2482 = vadd.xlane.f32.xlu0 %v2481
        %v2483 = vpop.xlane.xlu0 %2482
        %v2484 = vadd.f32 %v2359, %v2361
        %2485 = vadd.xlane.f32.xlu0 %v2484
        %v2486 = vpop.xlane.xlu0 %2485
        %v2487 = vadd.f32 %v2363, %v2365
        %2488 = vadd.xlane.f32.xlu0 %v2487
        %v2489 = vpop.xlane.xlu0 %2488
        %v2490 = vadd.f32 %v2367, %v2369
        %2491 = vadd.xlane.f32.xlu0 %v2490
        %v2492 = vpop.xlane.xlu0 %2491
        %v2493 = vadd.f32 %v2371, %v2373
        %2494 = vadd.xlane.f32.xlu0 %v2493
        %v2495 = vpop.xlane.xlu0 %2494
        %v2496 = vadd.f32 %v2375, %v2377
        %2497 = vadd.xlane.f32.xlu0 %v2496
        %v2498 = vpop.xlane.xlu0 %2497
        %v2499 = vadd.f32 %v2379, %v2381
        %2500 = vadd.xlane.f32.xlu0 %v2499
        %v2501 = vpop.xlane.xlu0 %2500
        %v2502 = vadd.f32 %v2383, %v2385
        %2503 = vadd.xlane.f32.xlu0 %v2502
        %v2504 = vpop.xlane.xlu0 %2503
        %v2505 = vadd.f32 %v2387, %v2389
        %2506 = vadd.xlane.f32.xlu0 %v2505
        %v2507 = vpop.xlane.xlu0 %2506
        %v2508 = vadd.f32 %v2391, %v2393
        %2509 = vadd.xlane.f32.xlu0 %v2508
        %v2510 = vpop.xlane.xlu0 %2509
        %v2511 = vadd.f32 %v2395, %v2397
        %2512 = vadd.xlane.f32.xlu0 %v2511
        %v2513 = vpop.xlane.xlu0 %2512
        %v2514 = vadd.f32 %v2399, %v2401
        %2515 = vadd.xlane.f32.xlu0 %v2514
        %v2516 = vpop.xlane.xlu0 %2515
        %v2517 = vadd.f32 %v2403, %v2405
        %2518 = vadd.xlane.f32.xlu0 %v2517
        %v2519 = vpop.xlane.xlu0 %2518
        %v2520 = vadd.f32 %v2407, %v2409
        %2521 = vadd.xlane.f32.xlu0 %v2520
        %v2522 = vpop.xlane.xlu0 %2521
        %v2523 = vadd.f32 %v2411, %v2413
        %2524 = vadd.xlane.f32.xlu0 %v2523
        %v2525 = vpop.xlane.xlu0 %2524
        %v2526 = vadd.f32 %v2415, %v2417
        %2527 = vadd.xlane.f32.xlu0 %v2526
        %v2528 = vpop.xlane.xlu0 %2527
        %v2529 = vadd.f32 %v2419, %v2421
        %2530 = vadd.xlane.f32.xlu0 %v2529
        %v2531 = vpop.xlane.xlu0 %2530
        %v2532 = vadd.f32 %v2423, %v2425
        %2533 = vadd.xlane.f32.xlu0 %v2532
        %v2534 = vpop.xlane.xlu0 %2533
        %v2535 = vadd.f32 %v2427, %v2429
        %2536 = vadd.xlane.f32.xlu0 %v2535
        %v2537 = vpop.xlane.xlu0 %2536
        %v2538 = vadd.f32 %v2431, %v2433
        %2539 = vadd.xlane.f32.xlu0 %v2538
        %v2540 = vpop.xlane.xlu0 %2539
        %v2541 = vadd.f32 %v2435, %v2437
        %2542 = vadd.xlane.f32.xlu0 %v2541
        %v2543 = vpop.xlane.xlu0 %2542
        %v2544 = vadd.f32 %v2439, %v2441
        %2545 = vadd.xlane.f32.xlu0 %v2544
        %v2546 = vpop.xlane.xlu0 %2545
        %v2547 = vadd.f32 %v2443, %v2445
        %2548 = vadd.xlane.f32.xlu0 %v2547
        %v2549 = vpop.xlane.xlu0 %2548
        %v2550 = vadd.f32 %v2447, %v2449
        %2551 = vadd.xlane.f32.xlu0 %v2550
        %v2552 = vpop.xlane.xlu0 %2551
        %v2553 = vadd.f32 %v2451, %v2453
        %2554 = vadd.xlane.f32.xlu0 %v2553
        %v2555 = vpop.xlane.xlu0 %2554
        %v2556 = vadd.f32 %v2455, %v2457
        %2557 = vadd.xlane.f32.xlu0 %v2556
        %v2558 = vpop.xlane.xlu0 %2557
        %v2559 = vadd.f32 %v2459, %v2461
        %2560 = vadd.xlane.f32.xlu0 %v2559
        %v2561 = vpop.xlane.xlu0 %2560
        %v2562 = vadd.f32 %v2463, %v2465
        %2563 = vadd.xlane.f32.xlu0 %v2562
        %v2564 = vpop.xlane.xlu0 %2563
        %v2565 = vadd.f32 %v2467, %v2469
        %2566 = vadd.xlane.f32.xlu0 %v2565
        %v2567 = vpop.xlane.xlu0 %2566
        %v2568 = vadd.f32 %v2471, %v2473
        %2569 = vadd.xlane.f32.xlu0 %v2568
        %v2570 = vpop.xlane.xlu0 %2569
        %v2571 = vadd.f32 %v2475, %v2477
        %2572 = vadd.xlane.f32.xlu0 %v2571
        %v2573 = vpop.xlane.xlu0 %2572
        %v2574 = vrcp.pop %v2480
        %v2575 = vrcp.pop %v2483
        %v2576 = vrcp.pop %v2486
        %v2577 = vrcp.pop %v2489
        %v2578 = vrcp.pop %v2492
        %v2579 = vrcp.pop %v2495
        %v2580 = vrcp.pop %v2498
        %v2581 = vrcp.pop %v2501
        %v2582 = vrcp.pop %v2504
        %v2583 = vrcp.pop %v2507
        %v2584 = vrcp.pop %v2510
        %v2585 = vrcp.pop %v2513
        %v2586 = vrcp.pop %v2516
        %v2587 = vrcp.pop %v2519
        %v2588 = vrcp.pop %v2522
        %v2589 = vrcp.pop %v2525
        %v2590 = vrcp.pop %v2528
        %v2591 = vrcp.pop %v2531
        %v2592 = vrcp.pop %v2534
        %v2593 = vrcp.pop %v2537
        %v2594 = vrcp.pop %v2540
        %v2595 = vrcp.pop %v2543
        %v2596 = vrcp.pop %v2546
        %v2597 = vrcp.pop %v2549
        %v2598 = vrcp.pop %v2552
        %v2599 = vrcp.pop %v2555
        %v2600 = vrcp.pop %v2558
        %v2601 = vrcp.pop %v2561
        %v2602 = vrcp.pop %v2564
        %v2603 = vrcp.pop %v2567
        %v2604 = vrcp.pop %v2570
        %v2605 = vrcp.pop %v2573
        %v2606 = vmul.f32 %v2351, %v2574
        %v2607 = vmul.f32 %v2353, %v2574
        %v2608 = vmul.f32 %v2355, %v2575
        %v2609 = vmul.f32 %v2357, %v2575
        %v2610 = vmul.f32 %v2359, %v2576
        %v2611 = vmul.f32 %v2361, %v2576
        %v2612 = vmul.f32 %v2363, %v2577
        %v2613 = vmul.f32 %v2365, %v2577
        %v2614 = vmul.f32 %v2367, %v2578
        %v2615 = vmul.f32 %v2369, %v2578
        %v2616 = vmul.f32 %v2371, %v2579
        %v2617 = vmul.f32 %v2373, %v2579
        %v2618 = vmul.f32 %v2375, %v2580
        %v2619 = vmul.f32 %v2377, %v2580
        %v2620 = vmul.f32 %v2379, %v2581
        %v2621 = vmul.f32 %v2381, %v2581
        %v2622 = vmul.f32 %v2383, %v2582
        %v2623 = vmul.f32 %v2385, %v2582
        %v2624 = vmul.f32 %v2387, %v2583
        %v2625 = vmul.f32 %v2389, %v2583
        %v2626 = vmul.f32 %v2391, %v2584
        %v2627 = vmul.f32 %v2393, %v2584
        %v2628 = vmul.f32 %v2395, %v2585
        %v2629 = vmul.f32 %v2397, %v2585
        %v2630 = vmul.f32 %v2399, %v2586
        %v2631 = vmul.f32 %v2401, %v2586
        %v2632 = vmul.f32 %v2403, %v2587
        %v2633 = vmul.f32 %v2405, %v2587
        %v2634 = vmul.f32 %v2407, %v2588
        %v2635 = vmul.f32 %v2409, %v2588
        %v2636 = vmul.f32 %v2411, %v2589
        %v2637 = vmul.f32 %v2413, %v2589
        %v2638 = vmul.f32 %v2415, %v2590
        %v2639 = vmul.f32 %v2417, %v2590
        %v2640 = vmul.f32 %v2419, %v2591
        %v2641 = vmul.f32 %v2421, %v2591
        %v2642 = vmul.f32 %v2423, %v2592
        %v2643 = vmul.f32 %v2425, %v2592
        %v2644 = vmul.f32 %v2427, %v2593
        %v2645 = vmul.f32 %v2429, %v2593
        %v2646 = vmul.f32 %v2431, %v2594
        %v2647 = vmul.f32 %v2433, %v2594
        %v2648 = vmul.f32 %v2435, %v2595
        %v2649 = vmul.f32 %v2437, %v2595
        %v2650 = vmul.f32 %v2439, %v2596
        %v2651 = vmul.f32 %v2441, %v2596
        %v2652 = vmul.f32 %v2443, %v2597
        %v2653 = vmul.f32 %v2445, %v2597
        %v2654 = vmul.f32 %v2447, %v2598
        %v2655 = vmul.f32 %v2449, %v2598
        %v2656 = vmul.f32 %v2451, %v2599
        %v2657 = vmul.f32 %v2453, %v2599
        %v2658 = vmul.f32 %v2455, %v2600
        %v2659 = vmul.f32 %v2457, %v2600
        %v2660 = vmul.f32 %v2459, %v2601
        %v2661 = vmul.f32 %v2461, %v2601
        %v2662 = vmul.f32 %v2463, %v2602
        %v2663 = vmul.f32 %v2465, %v2602
        %v2664 = vmul.f32 %v2467, %v2603
        %v2665 = vmul.f32 %v2469, %v2603
        %v2666 = vmul.f32 %v2471, %v2604
        %v2667 = vmul.f32 %v2473, %v2604
        %v2668 = vmul.f32 %v2475, %v2605
        %v2669 = vmul.f32 %v2477, %v2605
        %v2670 = vpack.c.bf16 %v2608, %v2606
        %v2671 = vpack.c.bf16 %v2609, %v2607
        %v2672 = vpack.c.bf16 %v2612, %v2610
        %v2673 = vpack.c.bf16 %v2613, %v2611
        %v2674 = vpack.c.bf16 %v2616, %v2614
        %v2675 = vpack.c.bf16 %v2617, %v2615
        %v2676 = vpack.c.bf16 %v2620, %v2618
        %v2677 = vpack.c.bf16 %v2621, %v2619
        %v2678 = vpack.c.bf16 %v2624, %v2622
        %v2679 = vpack.c.bf16 %v2625, %v2623
        %v2680 = vpack.c.bf16 %v2628, %v2626
        %v2681 = vpack.c.bf16 %v2629, %v2627
        %v2682 = vpack.c.bf16 %v2632, %v2630
        %v2683 = vpack.c.bf16 %v2633, %v2631
        %v2684 = vpack.c.bf16 %v2636, %v2634
        %v2685 = vpack.c.bf16 %v2637, %v2635
        %v2686 = vpack.c.bf16 %v2640, %v2638
        %v2687 = vpack.c.bf16 %v2641, %v2639
        %v2688 = vpack.c.bf16 %v2644, %v2642
        %v2689 = vpack.c.bf16 %v2645, %v2643
        %v2690 = vpack.c.bf16 %v2648, %v2646
        %v2691 = vpack.c.bf16 %v2649, %v2647
        %v2692 = vpack.c.bf16 %v2652, %v2650
        %v2693 = vpack.c.bf16 %v2653, %v2651
        %v2694 = vpack.c.bf16 %v2656, %v2654
        %v2695 = vpack.c.bf16 %v2657, %v2655
        %v2696 = vpack.c.bf16 %v2660, %v2658
        %v2697 = vpack.c.bf16 %v2661, %v2659
        %v2698 = vpack.c.bf16 %v2664, %v2662
        %v2699 = vpack.c.bf16 %v2665, %v2663
        %v2700 = vpack.c.bf16 %v2668, %v2666
        %v2701 = vpack.c.bf16 %v2669, %v2667
        %v2702 = vld [vmem:[#allocation14] sm:$0xf]
        %v2703 = vld [vmem:[#allocation14 + $0x4] sm:$0xf]
        %v2704 = vld [vmem:[#allocation14 + $0x8] sm:$0xf]
        %v2705 = vld [vmem:[#allocation14 + $0xc] sm:$0xf]
        %v2706 = vld [vmem:[#allocation14 + $0x10] sm:$0xf]
        %v2707 = vld [vmem:[#allocation14 + $0x14] sm:$0xf]
        %v2708 = vld [vmem:[#allocation14 + $0x18] sm:$0xf]
        %v2709 = vld [vmem:[#allocation14 + $0x1c] sm:$0xf]
        %v2710 = vld [vmem:[#allocation14 + $0x20] sm:$0xf]
        %v2711 = vld [vmem:[#allocation14 + $0x24] sm:$0xf]
        %v2712 = vld [vmem:[#allocation14 + $0x28] sm:$0xf]
        %v2713 = vld [vmem:[#allocation14 + $0x2c] sm:$0xf]
        %v2714 = vld [vmem:[#allocation14 + $0x30] sm:$0xf]
        %v2715 = vld [vmem:[#allocation14 + $0x34] sm:$0xf]
        %v2716 = vld [vmem:[#allocation14 + $0x38] sm:$0xf]
        %v2717 = vld [vmem:[#allocation14 + $0x3c] sm:$0xf]
        %v2718 = vld [vmem:[#allocation16] sm:$0xf]
        %v2719 = vld [vmem:[#allocation16 + $0x4] sm:$0xf]
        %v2720 = vld [vmem:[#allocation16 + $0x8] sm:$0xf]
        %v2721 = vld [vmem:[#allocation16 + $0xc] sm:$0xf]
        %v2722 = vld [vmem:[#allocation16 + $0x10] sm:$0xf]
        %v2723 = vld [vmem:[#allocation16 + $0x14] sm:$0xf]
        %v2724 = vld [vmem:[#allocation16 + $0x18] sm:$0xf]
        %v2725 = vld [vmem:[#allocation16 + $0x1c] sm:$0xf]
        %v2726 = vld [vmem:[#allocation16 + $0x20] sm:$0xf]
        %v2727 = vld [vmem:[#allocation16 + $0x24] sm:$0xf]
        %v2728 = vld [vmem:[#allocation16 + $0x28] sm:$0xf]
        %v2729 = vld [vmem:[#allocation16 + $0x2c] sm:$0xf]
        %v2730 = vld [vmem:[#allocation16 + $0x30] sm:$0xf]
        %v2731 = vld [vmem:[#allocation16 + $0x34] sm:$0xf]
        %v2732 = vld [vmem:[#allocation16 + $0x38] sm:$0xf]
        %v2733 = vld [vmem:[#allocation16 + $0x3c] sm:$0xf]
        %v2734 = vld [vmem:[#allocation16 + $0x40] sm:$0xf]
        %v2735 = vld [vmem:[#allocation16 + $0x44] sm:$0xf]
        %v2736 = vld [vmem:[#allocation16 + $0x48] sm:$0xf]
        %v2737 = vld [vmem:[#allocation16 + $0x4c] sm:$0xf]
        %v2738 = vld [vmem:[#allocation16 + $0x50] sm:$0xf]
        %v2739 = vld [vmem:[#allocation16 + $0x54] sm:$0xf]
        %v2740 = vld [vmem:[#allocation16 + $0x58] sm:$0xf]
        %v2741 = vld [vmem:[#allocation16 + $0x5c] sm:$0xf]
        %v2742 = vld [vmem:[#allocation16 + $0x60] sm:$0xf]
        %v2743 = vld [vmem:[#allocation16 + $0x64] sm:$0xf]
        %v2744 = vld [vmem:[#allocation16 + $0x68] sm:$0xf]
        %v2745 = vld [vmem:[#allocation16 + $0x6c] sm:$0xf]
        %v2746 = vld [vmem:[#allocation16 + $0x70] sm:$0xf]
        %v2747 = vld [vmem:[#allocation16 + $0x74] sm:$0xf]
        %v2748 = vld [vmem:[#allocation16 + $0x78] sm:$0xf]
        %v2749 = vld [vmem:[#allocation16 + $0x7c] sm:$0xf]
        %v2782 = vunpack.c.l.b16 %v2718
        %v2783 = vunpack.c.l.b16 %v2719
        %v2784 = vunpack.c.l.b16 %v2720
        %v2785 = vunpack.c.l.b16 %v2721
        %v2786 = vunpack.c.l.b16 %v2722
        %v2787 = vunpack.c.l.b16 %v2723
        %v2788 = vunpack.c.l.b16 %v2724
        %v2789 = vunpack.c.l.b16 %v2725
        %v2790 = vunpack.c.l.b16 %v2726
        %v2791 = vunpack.c.l.b16 %v2727
        %v2792 = vunpack.c.l.b16 %v2728
        %v2793 = vunpack.c.l.b16 %v2729
        %v2794 = vunpack.c.l.b16 %v2730
        %v2795 = vunpack.c.l.b16 %v2731
        %v2796 = vunpack.c.l.b16 %v2732
        %v2797 = vunpack.c.l.b16 %v2733
        %v2798 = vunpack.c.l.b16 %v2734
        %v2799 = vunpack.c.l.b16 %v2735
        %v2800 = vunpack.c.l.b16 %v2736
        %v2801 = vunpack.c.l.b16 %v2737
        %v2802 = vunpack.c.l.b16 %v2738
        %v2803 = vunpack.c.l.b16 %v2739
        %v2804 = vunpack.c.l.b16 %v2740
        %v2805 = vunpack.c.l.b16 %v2741
        %v2806 = vunpack.c.l.b16 %v2742
        %v2807 = vunpack.c.l.b16 %v2743
        %v2808 = vunpack.c.l.b16 %v2744
        %v2809 = vunpack.c.l.b16 %v2745
        %v2810 = vunpack.c.l.b16 %v2746
        %v2811 = vunpack.c.l.b16 %v2747
        %v2812 = vunpack.c.l.b16 %v2748
        %v2813 = vunpack.c.l.b16 %v2749
        %v2814 = vpack.c.b16 %v2783, %v2782
        %v2815 = vpack.c.b16 %v2785, %v2784
        %v2816 = vpack.c.b16 %v2787, %v2786
        %v2817 = vpack.c.b16 %v2789, %v2788
        %v2818 = vpack.c.b16 %v2791, %v2790
        %v2819 = vpack.c.b16 %v2793, %v2792
        %v2820 = vpack.c.b16 %v2795, %v2794
        %v2821 = vpack.c.b16 %v2797, %v2796
        %v2822 = vpack.c.b16 %v2799, %v2798
        %v2823 = vpack.c.b16 %v2801, %v2800
        %v2824 = vpack.c.b16 %v2803, %v2802
        %v2825 = vpack.c.b16 %v2805, %v2804
        %v2826 = vpack.c.b16 %v2807, %v2806
        %v2827 = vpack.c.b16 %v2809, %v2808
        %v2828 = vpack.c.b16 %v2811, %v2810
        %v2829 = vpack.c.b16 %v2813, %v2812
        %2846 = vmatprep.subr.bf16.mxu0 0
        %2847 = vmatpush1.bf16.msra.mxu0 %v2821
        %2848 = vmatprep.subr.bf16.mxu0 0
        %2849 = vmatpush1.bf16.msra.mxu0 %v2820
        %2850 = vmatprep.subr.bf16.mxu0 0
        %2851 = vmatpush1.bf16.msra.mxu0 %v2819
        %2852 = vmatprep.subr.bf16.mxu0 0
        %2853 = vmatpush1.bf16.msra.mxu0 %v2818
        %2854 = vmatprep.subr.bf16.mxu0 0
        %2855 = vmatpush1.bf16.msra.mxu0 %v2817
        %2856 = vmatprep.subr.bf16.mxu0 0
        %2857 = vmatpush1.bf16.msra.mxu0 %v2816
        %2858 = vmatprep.subr.bf16.mxu0 0
        %2859 = vmatpush1.bf16.msra.mxu0 %v2815
        %2860 = vmatprep.subr.bf16.mxu0 0
        %2861 = vmatpush1.bf16.msra.mxu0 %v2814
        %2862 = vmatprep.subr.bf16.mxu0 0
        %2863 = vmatpush2.bf16.msra.mxu0 %v2829
        %2864 = vmatprep.subr.bf16.mxu0 0
        %2865 = vmatpush2.bf16.msra.mxu0 %v2828
        %2866 = vmatprep.subr.bf16.mxu0 0
        %2867 = vmatpush2.bf16.msra.mxu0 %v2827
        %2868 = vmatprep.subr.bf16.mxu0 0
        %2869 = vmatpush2.bf16.msra.mxu0 %v2826
        %2870 = vmatprep.subr.bf16.mxu0 0
        %2871 = vmatpush2.bf16.msra.mxu0 %v2825
        %2872 = vmatprep.subr.bf16.mxu0 0
        %2873 = vmatpush2.bf16.msra.mxu0 %v2824
        %2874 = vmatprep.subr.bf16.mxu0 0
        %2875 = vmatpush2.bf16.msra.mxu0 %v2823
        %2876 = vmatprep.subr.bf16.mxu0 0
        %2877 = vmatpush2.bf16.msra.mxu0 %v2822
        %2878 = vmatprep.mubr.bf16.mxu0 %v1774
        %2879 = vmatmul.mubr.bf16.gmra.mxu0 %v1773
        %v2880 = vpop.f32.mrf.mxu0
        %v2881 = vadd.f32 0.0, %v2880
        %v2882 = vpop.f32.mrf.mxu0
        %v2883 = vpop.f32.mrf.mxu0
        %v2884 = vadd.f32 0.0, %v2883
        %v2885 = vpop.f32.mrf.mxu0
        %2886 = vmatprep.mubr.bf16.mxu0 %v1776
        %2887 = vmatmul.mubr.bf16.gmra.mxu0 %v1775
        %v2888 = vpop.f32.mrf.mxu0
        %v2889 = vadd.f32 0.0, %v2888
        %v2890 = vpop.f32.mrf.mxu0
        %v2891 = vpop.f32.mrf.mxu0
        %v2892 = vadd.f32 0.0, %v2891
        %v2893 = vpop.f32.mrf.mxu0
        %2894 = vmatprep.mubr.bf16.mxu0 %v1778
        %2895 = vmatmul.mubr.bf16.gmra.mxu0 %v1777
        %v2896 = vpop.f32.mrf.mxu0
        %v2897 = vadd.f32 0.0, %v2896
        %v2898 = vpop.f32.mrf.mxu0
        %v2899 = vpop.f32.mrf.mxu0
        %v2900 = vadd.f32 0.0, %v2899
        %v2901 = vpop.f32.mrf.mxu0
        %2902 = vmatprep.mubr.bf16.mxu0 %v1780
        %2903 = vmatmul.mubr.bf16.gmra.mxu0 %v1779
        %v2904 = vpop.f32.mrf.mxu0
        %v2905 = vadd.f32 0.0, %v2904
        %v2906 = vpop.f32.mrf.mxu0
        %v2907 = vpop.f32.mrf.mxu0
        %v2908 = vadd.f32 0.0, %v2907
        %v2909 = vpop.f32.mrf.mxu0
        %2910 = vmatprep.mubr.bf16.mxu0 %v1782
        %2911 = vmatmul.mubr.bf16.gmra.mxu0 %v1781
        %v2912 = vpop.f32.mrf.mxu0
        %v2913 = vadd.f32 0.0, %v2912
        %v2914 = vpop.f32.mrf.mxu0
        %v2915 = vpop.f32.mrf.mxu0
        %v2916 = vadd.f32 0.0, %v2915
        %v2917 = vpop.f32.mrf.mxu0
        %2918 = vmatprep.mubr.bf16.mxu0 %v1784
        %2919 = vmatmul.mubr.bf16.gmra.mxu0 %v1783
        %v2920 = vpop.f32.mrf.mxu0
        %v2921 = vadd.f32 0.0, %v2920
        %v2922 = vpop.f32.mrf.mxu0
        %v2923 = vpop.f32.mrf.mxu0
        %v2924 = vadd.f32 0.0, %v2923
        %v2925 = vpop.f32.mrf.mxu0
        %2926 = vmatprep.mubr.bf16.mxu0 %v1786
        %2927 = vmatmul.mubr.bf16.gmra.mxu0 %v1785
        %v2928 = vpop.f32.mrf.mxu0
        %v2929 = vadd.f32 0.0, %v2928
        %v2930 = vpop.f32.mrf.mxu0
        %v2931 = vpop.f32.mrf.mxu0
        %v2932 = vadd.f32 0.0, %v2931
        %v2933 = vpop.f32.mrf.mxu0
        %2934 = vmatprep.mubr.bf16.mxu0 %v1788
        %2935 = vmatmul.mubr.bf16.gmra.mxu0 %v1787
        %v2936 = vpop.f32.mrf.mxu0
        %v2937 = vadd.f32 0.0, %v2936
        %v2938 = vpop.f32.mrf.mxu0
        %v2939 = vpop.f32.mrf.mxu0
        %v2940 = vadd.f32 0.0, %v2939
        %v2941 = vpop.f32.mrf.mxu0
        %2942 = vmatprep.mubr.bf16.mxu0 %v1790
        %2943 = vmatmul.mubr.bf16.gmra.mxu0 %v1789
        %v2944 = vpop.f32.mrf.mxu0
        %v2945 = vadd.f32 0.0, %v2944
        %v2946 = vpop.f32.mrf.mxu0
        %v2947 = vpop.f32.mrf.mxu0
        %v2948 = vadd.f32 0.0, %v2947
        %v2949 = vpop.f32.mrf.mxu0
        %2950 = vmatprep.mubr.bf16.mxu0 %v1792
        %2951 = vmatmul.mubr.bf16.gmra.mxu0 %v1791
        %v2952 = vpop.f32.mrf.mxu0
        %v2953 = vadd.f32 0.0, %v2952
        %v2954 = vpop.f32.mrf.mxu0
        %v2955 = vpop.f32.mrf.mxu0
        %v2956 = vadd.f32 0.0, %v2955
        %v2957 = vpop.f32.mrf.mxu0
        %2958 = vmatprep.mubr.bf16.mxu0 %v1794
        %2959 = vmatmul.mubr.bf16.gmra.mxu0 %v1793
        %v2960 = vpop.f32.mrf.mxu0
        %v2961 = vadd.f32 0.0, %v2960
        %v2962 = vpop.f32.mrf.mxu0
        %v2963 = vpop.f32.mrf.mxu0
        %v2964 = vadd.f32 0.0, %v2963
        %v2965 = vpop.f32.mrf.mxu0
        %2966 = vmatprep.mubr.bf16.mxu0 %v1796
        %2967 = vmatmul.mubr.bf16.gmra.mxu0 %v1795
        %v2968 = vpop.f32.mrf.mxu0
        %v2969 = vadd.f32 0.0, %v2968
        %v2970 = vpop.f32.mrf.mxu0
        %v2971 = vpop.f32.mrf.mxu0
        %v2972 = vadd.f32 0.0, %v2971
        %v2973 = vpop.f32.mrf.mxu0
        %2974 = vmatprep.mubr.bf16.mxu0 %v1798
        %2975 = vmatmul.mubr.bf16.gmra.mxu0 %v1797
        %v2976 = vpop.f32.mrf.mxu0
        %v2977 = vadd.f32 0.0, %v2976
        %v2978 = vpop.f32.mrf.mxu0
        %v2979 = vpop.f32.mrf.mxu0
        %v2980 = vadd.f32 0.0, %v2979
        %v2981 = vpop.f32.mrf.mxu0
        %2982 = vmatprep.mubr.bf16.mxu0 %v1800
        %2983 = vmatmul.mubr.bf16.gmra.mxu0 %v1799
        %v2984 = vpop.f32.mrf.mxu0
        %v2985 = vadd.f32 0.0, %v2984
        %v2986 = vpop.f32.mrf.mxu0
        %v2987 = vpop.f32.mrf.mxu0
        %v2988 = vadd.f32 0.0, %v2987
        %v2989 = vpop.f32.mrf.mxu0
        %2990 = vmatprep.mubr.bf16.mxu0 %v1802
        %2991 = vmatmul.mubr.bf16.gmra.mxu0 %v1801
        %v2992 = vpop.f32.mrf.mxu0
        %v2993 = vadd.f32 0.0, %v2992
        %v2994 = vpop.f32.mrf.mxu0
        %v2995 = vpop.f32.mrf.mxu0
        %v2996 = vadd.f32 0.0, %v2995
        %v2997 = vpop.f32.mrf.mxu0
        %2998 = vmatprep.mubr.bf16.mxu0 %v1804
        %2999 = vmatmul.mubr.bf16.gmra.mxu0 %v1803
        %v3000 = vpop.f32.mrf.mxu0
        %v3001 = vadd.f32 0.0, %v3000
        %v3002 = vpop.f32.mrf.mxu0
        %v3003 = vpop.f32.mrf.mxu0
        %v3004 = vadd.f32 0.0, %v3003
        %v3005 = vpop.f32.mrf.mxu0
        %3006 = vdwg.mxu0
        %v3039 = vunpack.c.l.b16 %v844
        %v3040 = vunpack.c.l.b16 %v845
        %v3041 = vunpack.c.l.b16 %v846
        %v3042 = vunpack.c.l.b16 %v847
        %v3043 = vunpack.c.l.b16 %v848
        %v3044 = vunpack.c.l.b16 %v849
        %v3045 = vunpack.c.l.b16 %v850
        %v3046 = vunpack.c.l.b16 %v851
        %v3047 = vunpack.c.l.b16 %v852
        %v3048 = vunpack.c.l.b16 %v853
        %v3049 = vunpack.c.l.b16 %v854
        %v3050 = vunpack.c.l.b16 %v855
        %v3051 = vunpack.c.l.b16 %v856
        %v3052 = vunpack.c.l.b16 %v857
        %v3053 = vunpack.c.l.b16 %v858
        %v3054 = vunpack.c.l.b16 %v859
        %v3055 = vunpack.c.l.b16 %v860
        %v3056 = vunpack.c.l.b16 %v861
        %v3057 = vunpack.c.l.b16 %v862
        %v3058 = vunpack.c.l.b16 %v863
        %v3059 = vunpack.c.l.b16 %v864
        %v3060 = vunpack.c.l.b16 %v865
        %v3061 = vunpack.c.l.b16 %v866
        %v3062 = vunpack.c.l.b16 %v867
        %v3063 = vunpack.c.l.b16 %v868
        %v3064 = vunpack.c.l.b16 %v869
        %v3065 = vunpack.c.l.b16 %v870
        %v3066 = vunpack.c.l.b16 %v871
        %v3067 = vunpack.c.l.b16 %v872
        %v3068 = vunpack.c.l.b16 %v873
        %v3069 = vunpack.c.l.b16 %v874
        %v3070 = vunpack.c.l.b16 %v875
        %v3071 = vpack.c.b16 %v3040, %v3039
        %v3072 = vpack.c.b16 %v3042, %v3041
        %v3073 = vpack.c.b16 %v3044, %v3043
        %v3074 = vpack.c.b16 %v3046, %v3045
        %v3075 = vpack.c.b16 %v3048, %v3047
        %v3076 = vpack.c.b16 %v3050, %v3049
        %v3077 = vpack.c.b16 %v3052, %v3051
        %v3078 = vpack.c.b16 %v3054, %v3053
        %v3079 = vpack.c.b16 %v3056, %v3055
        %v3080 = vpack.c.b16 %v3058, %v3057
        %v3081 = vpack.c.b16 %v3060, %v3059
        %v3082 = vpack.c.b16 %v3062, %v3061
        %v3083 = vpack.c.b16 %v3064, %v3063
        %v3084 = vpack.c.b16 %v3066, %v3065
        %v3085 = vpack.c.b16 %v3068, %v3067
        %v3086 = vpack.c.b16 %v3070, %v3069
        %v3119 = vunpack.c.l.b16 %v2702
        %v3120 = vunpack.c.l.b16 %v2703
        %v3121 = vunpack.c.l.b16 %v2704
        %v3122 = vunpack.c.l.b16 %v2705
        %v3123 = vunpack.c.l.b16 %v2706
        %v3124 = vunpack.c.l.b16 %v2707
        %v3125 = vunpack.c.l.b16 %v2708
        %v3126 = vunpack.c.l.b16 %v2709
        %v3127 = vunpack.c.l.b16 %v2710
        %v3128 = vunpack.c.l.b16 %v2711
        %v3129 = vunpack.c.l.b16 %v2712
        %v3130 = vunpack.c.l.b16 %v2713
        %v3131 = vunpack.c.l.b16 %v2714
        %v3132 = vunpack.c.l.b16 %v2715
        %v3133 = vunpack.c.l.b16 %v2716
        %v3134 = vunpack.c.l.b16 %v2717
        %v3135 = vpack.c.b16 %v3120, %v3119
        %v3136 = vpack.c.b16 %v3122, %v3121
        %v3137 = vpack.c.b16 %v3124, %v3123
        %v3138 = vpack.c.b16 %v3126, %v3125
        %v3139 = vpack.c.b16 %v3128, %v3127
        %v3140 = vpack.c.b16 %v3130, %v3129
        %v3141 = vpack.c.b16 %v3132, %v3131
        %v3142 = vpack.c.b16 %v3134, %v3133
        %3151 = vmatprep.subr.bf16.mxu0 0
        %3152 = vmatpush1.bf16.msra.mxu0 %v3142
        %3153 = vmatprep.subr.bf16.mxu0 0
        %3154 = vmatpush1.bf16.msra.mxu0 %v3141
        %3155 = vmatprep.subr.bf16.mxu0 0
        %3156 = vmatpush1.bf16.msra.mxu0 %v3140
        %3157 = vmatprep.subr.bf16.mxu0 0
        %3158 = vmatpush1.bf16.msra.mxu0 %v3139
        %3159 = vmatprep.subr.bf16.mxu0 0
        %3160 = vmatpush1.bf16.msra.mxu0 %v3138
        %3161 = vmatprep.subr.bf16.mxu0 0
        %3162 = vmatpush1.bf16.msra.mxu0 %v3137
        %3163 = vmatprep.subr.bf16.mxu0 0
        %3164 = vmatpush1.bf16.msra.mxu0 %v3136
        %3165 = vmatprep.subr.bf16.mxu0 0
        %3166 = vmatpush1.bf16.msra.mxu0 %v3135
        %3167 = vmatprep.subr.bf16.mxu0 0
        %3168 = vmatpush2.bf16.msra.mxu0 0
        %3169 = vmatprep.subr.bf16.mxu0 0
        %3170 = vmatpush2.bf16.msra.mxu0 0
        %3171 = vmatprep.subr.bf16.mxu0 0
        %3172 = vmatpush2.bf16.msra.mxu0 0
        %3173 = vmatprep.subr.bf16.mxu0 0
        %3174 = vmatpush2.bf16.msra.mxu0 0
        %3175 = vmatprep.subr.bf16.mxu0 0
        %3176 = vmatpush2.bf16.msra.mxu0 0
        %3177 = vmatprep.subr.bf16.mxu0 0
        %3178 = vmatpush2.bf16.msra.mxu0 0
        %3179 = vmatprep.subr.bf16.mxu0 0
        %3180 = vmatpush2.bf16.msra.mxu0 0
        %3181 = vmatprep.subr.bf16.mxu0 0
        %3182 = vmatpush2.bf16.msra.mxu0 0
        %3183 = vmatprep.mubr.bf16.mxu0 0
        %3184 = vmatmul.mubr.bf16.gmra.mxu0 %v3071
        %v3185 = vpop.f32.mrf.mxu0
        %v3186 = vadd.f32 %v2881, %v3185
        %v3187 = vpop.f32.mrf.mxu0
        %v3188 = vpop.f32.mrf.mxu0
        %v3189 = vadd.f32 %v2884, %v3188
        %v3190 = vpop.f32.mrf.mxu0
        %3191 = vmatprep.mubr.bf16.mxu0 0
        %3192 = vmatmul.mubr.bf16.gmra.mxu0 %v3072
        %v3193 = vpop.f32.mrf.mxu0
        %v3194 = vadd.f32 %v2889, %v3193
        %v3195 = vpop.f32.mrf.mxu0
        %v3196 = vpop.f32.mrf.mxu0
        %v3197 = vadd.f32 %v2892, %v3196
        %v3198 = vpop.f32.mrf.mxu0
        %3199 = vmatprep.mubr.bf16.mxu0 0
        %3200 = vmatmul.mubr.bf16.gmra.mxu0 %v3073
        %v3201 = vpop.f32.mrf.mxu0
        %v3202 = vadd.f32 %v2897, %v3201
        %v3203 = vpop.f32.mrf.mxu0
        %v3204 = vpop.f32.mrf.mxu0
        %v3205 = vadd.f32 %v2900, %v3204
        %v3206 = vpop.f32.mrf.mxu0
        %3207 = vmatprep.mubr.bf16.mxu0 0
        %3208 = vmatmul.mubr.bf16.gmra.mxu0 %v3074
        %v3209 = vpop.f32.mrf.mxu0
        %v3210 = vadd.f32 %v2905, %v3209
        %v3211 = vpop.f32.mrf.mxu0
        %v3212 = vpop.f32.mrf.mxu0
        %v3213 = vadd.f32 %v2908, %v3212
        %v3214 = vpop.f32.mrf.mxu0
        %3215 = vmatprep.mubr.bf16.mxu0 0
        %3216 = vmatmul.mubr.bf16.gmra.mxu0 %v3075
        %v3217 = vpop.f32.mrf.mxu0
        %v3218 = vadd.f32 %v2913, %v3217
        %v3219 = vpop.f32.mrf.mxu0
        %v3220 = vpop.f32.mrf.mxu0
        %v3221 = vadd.f32 %v2916, %v3220
        %v3222 = vpop.f32.mrf.mxu0
        %3223 = vmatprep.mubr.bf16.mxu0 0
        %3224 = vmatmul.mubr.bf16.gmra.mxu0 %v3076
        %v3225 = vpop.f32.mrf.mxu0
        %v3226 = vadd.f32 %v2921, %v3225
        %v3227 = vpop.f32.mrf.mxu0
        %v3228 = vpop.f32.mrf.mxu0
        %v3229 = vadd.f32 %v2924, %v3228
        %v3230 = vpop.f32.mrf.mxu0
        %3231 = vmatprep.mubr.bf16.mxu0 0
        %3232 = vmatmul.mubr.bf16.gmra.mxu0 %v3077
        %v3233 = vpop.f32.mrf.mxu0
        %v3234 = vadd.f32 %v2929, %v3233
        %v3235 = vpop.f32.mrf.mxu0
        %v3236 = vpop.f32.mrf.mxu0
        %v3237 = vadd.f32 %v2932, %v3236
        %v3238 = vpop.f32.mrf.mxu0
        %3239 = vmatprep.mubr.bf16.mxu0 0
        %3240 = vmatmul.mubr.bf16.gmra.mxu0 %v3078
        %v3241 = vpop.f32.mrf.mxu0
        %v3242 = vadd.f32 %v2937, %v3241
        %v3243 = vpop.f32.mrf.mxu0
        %v3244 = vpop.f32.mrf.mxu0
        %v3245 = vadd.f32 %v2940, %v3244
        %v3246 = vpop.f32.mrf.mxu0
        %3247 = vmatprep.mubr.bf16.mxu0 0
        %3248 = vmatmul.mubr.bf16.gmra.mxu0 %v3079
        %v3249 = vpop.f32.mrf.mxu0
        %v3250 = vadd.f32 %v2945, %v3249
        %v3251 = vpop.f32.mrf.mxu0
        %v3252 = vpop.f32.mrf.mxu0
        %v3253 = vadd.f32 %v2948, %v3252
        %v3254 = vpop.f32.mrf.mxu0
        %3255 = vmatprep.mubr.bf16.mxu0 0
        %3256 = vmatmul.mubr.bf16.gmra.mxu0 %v3080
        %v3257 = vpop.f32.mrf.mxu0
        %v3258 = vadd.f32 %v2953, %v3257
        %v3259 = vpop.f32.mrf.mxu0
        %v3260 = vpop.f32.mrf.mxu0
        %v3261 = vadd.f32 %v2956, %v3260
        %v3262 = vpop.f32.mrf.mxu0
        %3263 = vmatprep.mubr.bf16.mxu0 0
        %3264 = vmatmul.mubr.bf16.gmra.mxu0 %v3081
        %v3265 = vpop.f32.mrf.mxu0
        %v3266 = vadd.f32 %v2961, %v3265
        %v3267 = vpop.f32.mrf.mxu0
        %v3268 = vpop.f32.mrf.mxu0
        %v3269 = vadd.f32 %v2964, %v3268
        %v3270 = vpop.f32.mrf.mxu0
        %3271 = vmatprep.mubr.bf16.mxu0 0
        %3272 = vmatmul.mubr.bf16.gmra.mxu0 %v3082
        %v3273 = vpop.f32.mrf.mxu0
        %v3274 = vadd.f32 %v2969, %v3273
        %v3275 = vpop.f32.mrf.mxu0
        %v3276 = vpop.f32.mrf.mxu0
        %v3277 = vadd.f32 %v2972, %v3276
        %v3278 = vpop.f32.mrf.mxu0
        %3279 = vmatprep.mubr.bf16.mxu0 0
        %3280 = vmatmul.mubr.bf16.gmra.mxu0 %v3083
        %v3281 = vpop.f32.mrf.mxu0
        %v3282 = vadd.f32 %v2977, %v3281
        %v3283 = vpop.f32.mrf.mxu0
        %v3284 = vpop.f32.mrf.mxu0
        %v3285 = vadd.f32 %v2980, %v3284
        %v3286 = vpop.f32.mrf.mxu0
        %3287 = vmatprep.mubr.bf16.mxu0 0
        %3288 = vmatmul.mubr.bf16.gmra.mxu0 %v3084
        %v3289 = vpop.f32.mrf.mxu0
        %v3290 = vadd.f32 %v2985, %v3289
        %v3291 = vpop.f32.mrf.mxu0
        %v3292 = vpop.f32.mrf.mxu0
        %v3293 = vadd.f32 %v2988, %v3292
        %v3294 = vpop.f32.mrf.mxu0
        %3295 = vmatprep.mubr.bf16.mxu0 0
        %3296 = vmatmul.mubr.bf16.gmra.mxu0 %v3085
        %v3297 = vpop.f32.mrf.mxu0
        %v3298 = vadd.f32 %v2993, %v3297
        %v3299 = vpop.f32.mrf.mxu0
        %v3300 = vpop.f32.mrf.mxu0
        %v3301 = vadd.f32 %v2996, %v3300
        %v3302 = vpop.f32.mrf.mxu0
        %3303 = vmatprep.mubr.bf16.mxu0 0
        %3304 = vmatmul.mubr.bf16.gmra.mxu0 %v3086
        %v3305 = vpop.f32.mrf.mxu0
        %v3306 = vadd.f32 %v3001, %v3305
        %v3307 = vpop.f32.mrf.mxu0
        %v3308 = vpop.f32.mrf.mxu0
        %v3309 = vadd.f32 %v3004, %v3308
        %v3310 = vpop.f32.mrf.mxu0
        %3311 = vdwg.mxu0
        %v3312 = vld [vmem:[%s9] sm:$0x1]
        %v3314 = vlaneseq
        %v3315 = vshrl.u32 %v3314, 7
        %v3316 = vsub.s32 0, %v3315
        %v3317 = vrot.slane %v3312, %v3316
        %v3319 = vadd.f32 %v3186, %v3317
        %v3320 = vadd.f32 %v3189, %v3317
        %v3321 = vadd.f32 %v3194, %v3317
        %v3322 = vadd.f32 %v3197, %v3317
        %v3323 = vadd.f32 %v3202, %v3317
        %v3324 = vadd.f32 %v3205, %v3317
        %v3325 = vadd.f32 %v3210, %v3317
        %v3326 = vadd.f32 %v3213, %v3317
        %v3327 = vadd.f32 %v3218, %v3317
        %v3328 = vadd.f32 %v3221, %v3317
        %v3329 = vadd.f32 %v3226, %v3317
        %v3330 = vadd.f32 %v3229, %v3317
        %v3331 = vadd.f32 %v3234, %v3317
        %v3332 = vadd.f32 %v3237, %v3317
        %v3333 = vadd.f32 %v3242, %v3317
        %v3334 = vadd.f32 %v3245, %v3317
        %v3335 = vadd.f32 %v3250, %v3317
        %v3336 = vadd.f32 %v3253, %v3317
        %v3337 = vadd.f32 %v3258, %v3317
        %v3338 = vadd.f32 %v3261, %v3317
        %v3339 = vadd.f32 %v3266, %v3317
        %v3340 = vadd.f32 %v3269, %v3317
        %v3341 = vadd.f32 %v3274, %v3317
        %v3342 = vadd.f32 %v3277, %v3317
        %v3343 = vadd.f32 %v3282, %v3317
        %v3344 = vadd.f32 %v3285, %v3317
        %v3345 = vadd.f32 %v3290, %v3317
        %v3346 = vadd.f32 %v3293, %v3317
        %v3347 = vadd.f32 %v3298, %v3317
        %v3348 = vadd.f32 %v3301, %v3317
        %v3349 = vadd.f32 %v3306, %v3317
        %v3350 = vadd.f32 %v3309, %v3317
        %v3351 = vtanh.pop %v3319
        %v3352 = vtanh.pop %v3320
        %v3353 = vtanh.pop %v3321
        %v3354 = vtanh.pop %v3322
        %v3355 = vtanh.pop %v3323
        %v3356 = vtanh.pop %v3324
        %v3357 = vtanh.pop %v3325
        %v3358 = vtanh.pop %v3326
        %v3359 = vtanh.pop %v3327
        %v3360 = vtanh.pop %v3328
        %v3361 = vtanh.pop %v3329
        %v3362 = vtanh.pop %v3330
        %v3363 = vtanh.pop %v3331
        %v3364 = vtanh.pop %v3332
        %v3365 = vtanh.pop %v3333
        %v3366 = vtanh.pop %v3334
        %v3367 = vtanh.pop %v3335
        %v3368 = vtanh.pop %v3336
        %v3369 = vtanh.pop %v3337
        %v3370 = vtanh.pop %v3338
        %v3371 = vtanh.pop %v3339
        %v3372 = vtanh.pop %v3340
        %v3373 = vtanh.pop %v3341
        %v3374 = vtanh.pop %v3342
        %v3375 = vtanh.pop %v3343
        %v3376 = vtanh.pop %v3344
        %v3377 = vtanh.pop %v3345
        %v3378 = vtanh.pop %v3346
        %v3379 = vtanh.pop %v3347
        %v3380 = vtanh.pop %v3348
        %v3381 = vtanh.pop %v3349
        %v3382 = vtanh.pop %v3350
        %v3383 = vpack.c.bf16 %v3352, %v3351
        %v3384 = vpack.c.bf16 %v3354, %v3353
        %v3385 = vpack.c.bf16 %v3356, %v3355
        %v3386 = vpack.c.bf16 %v3358, %v3357
        %v3387 = vpack.c.bf16 %v3360, %v3359
        %v3388 = vpack.c.bf16 %v3362, %v3361
        %v3389 = vpack.c.bf16 %v3364, %v3363
        %v3390 = vpack.c.bf16 %v3366, %v3365
        %v3391 = vpack.c.bf16 %v3368, %v3367
        %v3392 = vpack.c.bf16 %v3370, %v3369
        %v3393 = vpack.c.bf16 %v3372, %v3371
        %v3394 = vpack.c.bf16 %v3374, %v3373
        %v3395 = vpack.c.bf16 %v3376, %v3375
        %v3396 = vpack.c.bf16 %v3378, %v3377
        %v3397 = vpack.c.bf16 %v3380, %v3379
        %v3398 = vpack.c.bf16 %v3382, %v3381
        %v3399 = vld [vmem:[#allocation17] sm:$0xf]
        %v3400 = vld [vmem:[#allocation17 + $0x4] sm:$0xf]
        %v3401 = vld [vmem:[#allocation17 + $0x8] sm:$0xf]
        %v3402 = vld [vmem:[#allocation17 + $0xc] sm:$0xf]
        %v3403 = vld [vmem:[#allocation17 + $0x10] sm:$0xf]
        %v3404 = vld [vmem:[#allocation17 + $0x14] sm:$0xf]
        %v3405 = vld [vmem:[#allocation17 + $0x18] sm:$0xf]
        %v3406 = vld [vmem:[#allocation17 + $0x1c] sm:$0xf]
        %v3407 = vld [vmem:[#allocation17 + $0x20] sm:$0xf]
        %v3408 = vld [vmem:[#allocation17 + $0x24] sm:$0xf]
        %v3409 = vld [vmem:[#allocation17 + $0x28] sm:$0xf]
        %v3410 = vld [vmem:[#allocation17 + $0x2c] sm:$0xf]
        %v3411 = vld [vmem:[#allocation17 + $0x30] sm:$0xf]
        %v3412 = vld [vmem:[#allocation17 + $0x34] sm:$0xf]
        %v3413 = vld [vmem:[#allocation17 + $0x38] sm:$0xf]
        %v3414 = vld [vmem:[#allocation17 + $0x3c] sm:$0xf]
        %v3415 = vld [vmem:[#allocation19] sm:$0xf]
        %v3416 = vld [vmem:[#allocation19 + $0x4] sm:$0xf]
        %v3417 = vld [vmem:[#allocation19 + $0x8] sm:$0xf]
        %v3418 = vld [vmem:[#allocation19 + $0xc] sm:$0xf]
        %v3419 = vld [vmem:[#allocation19 + $0x10] sm:$0xf]
        %v3420 = vld [vmem:[#allocation19 + $0x14] sm:$0xf]
        %v3421 = vld [vmem:[#allocation19 + $0x18] sm:$0xf]
        %v3422 = vld [vmem:[#allocation19 + $0x1c] sm:$0xf]
        %v3423 = vld [vmem:[#allocation19 + $0x20] sm:$0xf]
        %v3424 = vld [vmem:[#allocation19 + $0x24] sm:$0xf]
        %v3425 = vld [vmem:[#allocation19 + $0x28] sm:$0xf]
        %v3426 = vld [vmem:[#allocation19 + $0x2c] sm:$0xf]
        %v3427 = vld [vmem:[#allocation19 + $0x30] sm:$0xf]
        %v3428 = vld [vmem:[#allocation19 + $0x34] sm:$0xf]
        %v3429 = vld [vmem:[#allocation19 + $0x38] sm:$0xf]
        %v3430 = vld [vmem:[#allocation19 + $0x3c] sm:$0xf]
        %v3431 = vld [vmem:[#allocation19 + $0x40] sm:$0xf]
        %v3432 = vld [vmem:[#allocation19 + $0x44] sm:$0xf]
        %v3433 = vld [vmem:[#allocation19 + $0x48] sm:$0xf]
        %v3434 = vld [vmem:[#allocation19 + $0x4c] sm:$0xf]
        %v3435 = vld [vmem:[#allocation19 + $0x50] sm:$0xf]
        %v3436 = vld [vmem:[#allocation19 + $0x54] sm:$0xf]
        %v3437 = vld [vmem:[#allocation19 + $0x58] sm:$0xf]
        %v3438 = vld [vmem:[#allocation19 + $0x5c] sm:$0xf]
        %v3439 = vld [vmem:[#allocation19 + $0x60] sm:$0xf]
        %v3440 = vld [vmem:[#allocation19 + $0x64] sm:$0xf]
        %v3441 = vld [vmem:[#allocation19 + $0x68] sm:$0xf]
        %v3442 = vld [vmem:[#allocation19 + $0x6c] sm:$0xf]
        %v3443 = vld [vmem:[#allocation19 + $0x70] sm:$0xf]
        %v3444 = vld [vmem:[#allocation19 + $0x74] sm:$0xf]
        %v3445 = vld [vmem:[#allocation19 + $0x78] sm:$0xf]
        %v3446 = vld [vmem:[#allocation19 + $0x7c] sm:$0xf]
        %v3479 = vunpack.c.l.b16 %v3415
        %v3480 = vunpack.c.l.b16 %v3416
        %v3481 = vunpack.c.l.b16 %v3417
        %v3482 = vunpack.c.l.b16 %v3418
        %v3483 = vunpack.c.l.b16 %v3419
        %v3484 = vunpack.c.l.b16 %v3420
        %v3485 = vunpack.c.l.b16 %v3421
        %v3486 = vunpack.c.l.b16 %v3422
        %v3487 = vunpack.c.l.b16 %v3423
        %v3488 = vunpack.c.l.b16 %v3424
        %v3489 = vunpack.c.l.b16 %v3425
        %v3490 = vunpack.c.l.b16 %v3426
        %v3491 = vunpack.c.l.b16 %v3427
        %v3492 = vunpack.c.l.b16 %v3428
        %v3493 = vunpack.c.l.b16 %v3429
        %v3494 = vunpack.c.l.b16 %v3430
        %v3495 = vunpack.c.l.b16 %v3431
        %v3496 = vunpack.c.l.b16 %v3432
        %v3497 = vunpack.c.l.b16 %v3433
        %v3498 = vunpack.c.l.b16 %v3434
        %v3499 = vunpack.c.l.b16 %v3435
        %v3500 = vunpack.c.l.b16 %v3436
        %v3501 = vunpack.c.l.b16 %v3437
        %v3502 = vunpack.c.l.b16 %v3438
        %v3503 = vunpack.c.l.b16 %v3439
        %v3504 = vunpack.c.l.b16 %v3440
        %v3505 = vunpack.c.l.b16 %v3441
        %v3506 = vunpack.c.l.b16 %v3442
        %v3507 = vunpack.c.l.b16 %v3443
        %v3508 = vunpack.c.l.b16 %v3444
        %v3509 = vunpack.c.l.b16 %v3445
        %v3510 = vunpack.c.l.b16 %v3446
        %v3511 = vpack.c.b16 %v3480, %v3479
        %v3512 = vpack.c.b16 %v3482, %v3481
        %v3513 = vpack.c.b16 %v3484, %v3483
        %v3514 = vpack.c.b16 %v3486, %v3485
        %v3515 = vpack.c.b16 %v3488, %v3487
        %v3516 = vpack.c.b16 %v3490, %v3489
        %v3517 = vpack.c.b16 %v3492, %v3491
        %v3518 = vpack.c.b16 %v3494, %v3493
        %v3519 = vpack.c.b16 %v3496, %v3495
        %v3520 = vpack.c.b16 %v3498, %v3497
        %v3521 = vpack.c.b16 %v3500, %v3499
        %v3522 = vpack.c.b16 %v3502, %v3501
        %v3523 = vpack.c.b16 %v3504, %v3503
        %v3524 = vpack.c.b16 %v3506, %v3505
        %v3525 = vpack.c.b16 %v3508, %v3507
        %v3526 = vpack.c.b16 %v3510, %v3509
        %3543 = vmatprep.subr.bf16.mxu0 0
        %3544 = vmatpush1.bf16.msra.mxu0 %v3518
        %3545 = vmatprep.subr.bf16.mxu0 0
        %3546 = vmatpush1.bf16.msra.mxu0 %v3517
        %3547 = vmatprep.subr.bf16.mxu0 0
        %3548 = vmatpush1.bf16.msra.mxu0 %v3516
        %3549 = vmatprep.subr.bf16.mxu0 0
        %3550 = vmatpush1.bf16.msra.mxu0 %v3515
        %3551 = vmatprep.subr.bf16.mxu0 0
        %3552 = vmatpush1.bf16.msra.mxu0 %v3514
        %3553 = vmatprep.subr.bf16.mxu0 0
        %3554 = vmatpush1.bf16.msra.mxu0 %v3513
        %3555 = vmatprep.subr.bf16.mxu0 0
        %3556 = vmatpush1.bf16.msra.mxu0 %v3512
        %3557 = vmatprep.subr.bf16.mxu0 0
        %3558 = vmatpush1.bf16.msra.mxu0 %v3511
        %3559 = vmatprep.subr.bf16.mxu0 0
        %3560 = vmatpush2.bf16.msra.mxu0 %v3526
        %3561 = vmatprep.subr.bf16.mxu0 0
        %3562 = vmatpush2.bf16.msra.mxu0 %v3525
        %3563 = vmatprep.subr.bf16.mxu0 0
        %3564 = vmatpush2.bf16.msra.mxu0 %v3524
        %3565 = vmatprep.subr.bf16.mxu0 0
        %3566 = vmatpush2.bf16.msra.mxu0 %v3523
        %3567 = vmatprep.subr.bf16.mxu0 0
        %3568 = vmatpush2.bf16.msra.mxu0 %v3522
        %3569 = vmatprep.subr.bf16.mxu0 0
        %3570 = vmatpush2.bf16.msra.mxu0 %v3521
        %3571 = vmatprep.subr.bf16.mxu0 0
        %3572 = vmatpush2.bf16.msra.mxu0 %v3520
        %3573 = vmatprep.subr.bf16.mxu0 0
        %3574 = vmatpush2.bf16.msra.mxu0 %v3519
        %3575 = vmatprep.mubr.bf16.mxu0 %v2671
        %3576 = vmatmul.mubr.bf16.gmra.mxu0 %v2670
        %v3577 = vpop.f32.mrf.mxu0
        %v3578 = vadd.f32 0.0, %v3577
        %v3579 = vpop.f32.mrf.mxu0
        %v3580 = vpop.f32.mrf.mxu0
        %v3581 = vadd.f32 0.0, %v3580
        %v3582 = vpop.f32.mrf.mxu0
        %3583 = vmatprep.mubr.bf16.mxu0 %v2673
        %3584 = vmatmul.mubr.bf16.gmra.mxu0 %v2672
        %v3585 = vpop.f32.mrf.mxu0
        %v3586 = vadd.f32 0.0, %v3585
        %v3587 = vpop.f32.mrf.mxu0
        %v3588 = vpop.f32.mrf.mxu0
        %v3589 = vadd.f32 0.0, %v3588
        %v3590 = vpop.f32.mrf.mxu0
        %3591 = vmatprep.mubr.bf16.mxu0 %v2675
        %3592 = vmatmul.mubr.bf16.gmra.mxu0 %v2674
        %v3593 = vpop.f32.mrf.mxu0
        %v3594 = vadd.f32 0.0, %v3593
        %v3595 = vpop.f32.mrf.mxu0
        %v3596 = vpop.f32.mrf.mxu0
        %v3597 = vadd.f32 0.0, %v3596
        %v3598 = vpop.f32.mrf.mxu0
        %3599 = vmatprep.mubr.bf16.mxu0 %v2677
        %3600 = vmatmul.mubr.bf16.gmra.mxu0 %v2676
        %v3601 = vpop.f32.mrf.mxu0
        %v3602 = vadd.f32 0.0, %v3601
        %v3603 = vpop.f32.mrf.mxu0
        %v3604 = vpop.f32.mrf.mxu0
        %v3605 = vadd.f32 0.0, %v3604
        %v3606 = vpop.f32.mrf.mxu0
        %3607 = vmatprep.mubr.bf16.mxu0 %v2679
        %3608 = vmatmul.mubr.bf16.gmra.mxu0 %v2678
        %v3609 = vpop.f32.mrf.mxu0
        %v3610 = vadd.f32 0.0, %v3609
        %v3611 = vpop.f32.mrf.mxu0
        %v3612 = vpop.f32.mrf.mxu0
        %v3613 = vadd.f32 0.0, %v3612
        %v3614 = vpop.f32.mrf.mxu0
        %3615 = vmatprep.mubr.bf16.mxu0 %v2681
        %3616 = vmatmul.mubr.bf16.gmra.mxu0 %v2680
        %v3617 = vpop.f32.mrf.mxu0
        %v3618 = vadd.f32 0.0, %v3617
        %v3619 = vpop.f32.mrf.mxu0
        %v3620 = vpop.f32.mrf.mxu0
        %v3621 = vadd.f32 0.0, %v3620
        %v3622 = vpop.f32.mrf.mxu0
        %3623 = vmatprep.mubr.bf16.mxu0 %v2683
        %3624 = vmatmul.mubr.bf16.gmra.mxu0 %v2682
        %v3625 = vpop.f32.mrf.mxu0
        %v3626 = vadd.f32 0.0, %v3625
        %v3627 = vpop.f32.mrf.mxu0
        %v3628 = vpop.f32.mrf.mxu0
        %v3629 = vadd.f32 0.0, %v3628
        %v3630 = vpop.f32.mrf.mxu0
        %3631 = vmatprep.mubr.bf16.mxu0 %v2685
        %3632 = vmatmul.mubr.bf16.gmra.mxu0 %v2684
        %v3633 = vpop.f32.mrf.mxu0
        %v3634 = vadd.f32 0.0, %v3633
        %v3635 = vpop.f32.mrf.mxu0
        %v3636 = vpop.f32.mrf.mxu0
        %v3637 = vadd.f32 0.0, %v3636
        %v3638 = vpop.f32.mrf.mxu0
        %3639 = vmatprep.mubr.bf16.mxu0 %v2687
        %3640 = vmatmul.mubr.bf16.gmra.mxu0 %v2686
        %v3641 = vpop.f32.mrf.mxu0
        %v3642 = vadd.f32 0.0, %v3641
        %v3643 = vpop.f32.mrf.mxu0
        %v3644 = vpop.f32.mrf.mxu0
        %v3645 = vadd.f32 0.0, %v3644
        %v3646 = vpop.f32.mrf.mxu0
        %3647 = vmatprep.mubr.bf16.mxu0 %v2689
        %3648 = vmatmul.mubr.bf16.gmra.mxu0 %v2688
        %v3649 = vpop.f32.mrf.mxu0
        %v3650 = vadd.f32 0.0, %v3649
        %v3651 = vpop.f32.mrf.mxu0
        %v3652 = vpop.f32.mrf.mxu0
        %v3653 = vadd.f32 0.0, %v3652
        %v3654 = vpop.f32.mrf.mxu0
        %3655 = vmatprep.mubr.bf16.mxu0 %v2691
        %3656 = vmatmul.mubr.bf16.gmra.mxu0 %v2690
        %v3657 = vpop.f32.mrf.mxu0
        %v3658 = vadd.f32 0.0, %v3657
        %v3659 = vpop.f32.mrf.mxu0
        %v3660 = vpop.f32.mrf.mxu0
        %v3661 = vadd.f32 0.0, %v3660
        %v3662 = vpop.f32.mrf.mxu0
        %3663 = vmatprep.mubr.bf16.mxu0 %v2693
        %3664 = vmatmul.mubr.bf16.gmra.mxu0 %v2692
        %v3665 = vpop.f32.mrf.mxu0
        %v3666 = vadd.f32 0.0, %v3665
        %v3667 = vpop.f32.mrf.mxu0
        %v3668 = vpop.f32.mrf.mxu0
        %v3669 = vadd.f32 0.0, %v3668
        %v3670 = vpop.f32.mrf.mxu0
        %3671 = vmatprep.mubr.bf16.mxu0 %v2695
        %3672 = vmatmul.mubr.bf16.gmra.mxu0 %v2694
        %v3673 = vpop.f32.mrf.mxu0
        %v3674 = vadd.f32 0.0, %v3673
        %v3675 = vpop.f32.mrf.mxu0
        %v3676 = vpop.f32.mrf.mxu0
        %v3677 = vadd.f32 0.0, %v3676
        %v3678 = vpop.f32.mrf.mxu0
        %3679 = vmatprep.mubr.bf16.mxu0 %v2697
        %3680 = vmatmul.mubr.bf16.gmra.mxu0 %v2696
        %v3681 = vpop.f32.mrf.mxu0
        %v3682 = vadd.f32 0.0, %v3681
        %v3683 = vpop.f32.mrf.mxu0
        %v3684 = vpop.f32.mrf.mxu0
        %v3685 = vadd.f32 0.0, %v3684
        %v3686 = vpop.f32.mrf.mxu0
        %3687 = vmatprep.mubr.bf16.mxu0 %v2699
        %3688 = vmatmul.mubr.bf16.gmra.mxu0 %v2698
        %v3689 = vpop.f32.mrf.mxu0
        %v3690 = vadd.f32 0.0, %v3689
        %v3691 = vpop.f32.mrf.mxu0
        %v3692 = vpop.f32.mrf.mxu0
        %v3693 = vadd.f32 0.0, %v3692
        %v3694 = vpop.f32.mrf.mxu0
        %3695 = vmatprep.mubr.bf16.mxu0 %v2701
        %3696 = vmatmul.mubr.bf16.gmra.mxu0 %v2700
        %v3697 = vpop.f32.mrf.mxu0
        %v3698 = vadd.f32 0.0, %v3697
        %v3699 = vpop.f32.mrf.mxu0
        %v3700 = vpop.f32.mrf.mxu0
        %v3701 = vadd.f32 0.0, %v3700
        %v3702 = vpop.f32.mrf.mxu0
        %3703 = vdwg.mxu0
        %v3736 = vunpack.c.l.b16 %v876
        %v3737 = vunpack.c.l.b16 %v877
        %v3738 = vunpack.c.l.b16 %v878
        %v3739 = vunpack.c.l.b16 %v879
        %v3740 = vunpack.c.l.b16 %v880
        %v3741 = vunpack.c.l.b16 %v881
        %v3742 = vunpack.c.l.b16 %v882
        %v3743 = vunpack.c.l.b16 %v883
        %v3744 = vunpack.c.l.b16 %v884
        %v3745 = vunpack.c.l.b16 %v885
        %v3746 = vunpack.c.l.b16 %v886
        %v3747 = vunpack.c.l.b16 %v887
        %v3748 = vunpack.c.l.b16 %v888
        %v3749 = vunpack.c.l.b16 %v889
        %v3750 = vunpack.c.l.b16 %v890
        %v3751 = vunpack.c.l.b16 %v891
        %v3752 = vunpack.c.l.b16 %v892
        %v3753 = vunpack.c.l.b16 %v893
        %v3754 = vunpack.c.l.b16 %v894
        %v3755 = vunpack.c.l.b16 %v895
        %v3756 = vunpack.c.l.b16 %v896
        %v3757 = vunpack.c.l.b16 %v897
        %v3758 = vunpack.c.l.b16 %v898
        %v3759 = vunpack.c.l.b16 %v899
        %v3760 = vunpack.c.l.b16 %v900
        %v3761 = vunpack.c.l.b16 %v901
        %v3762 = vunpack.c.l.b16 %v902
        %v3763 = vunpack.c.l.b16 %v903
        %v3764 = vunpack.c.l.b16 %v904
        %v3765 = vunpack.c.l.b16 %v905
        %v3766 = vunpack.c.l.b16 %v906
        %v3767 = vunpack.c.l.b16 %v907
        %v3768 = vpack.c.b16 %v3737, %v3736
        %v3769 = vpack.c.b16 %v3739, %v3738
        %v3770 = vpack.c.b16 %v3741, %v3740
        %v3771 = vpack.c.b16 %v3743, %v3742
        %v3772 = vpack.c.b16 %v3745, %v3744
        %v3773 = vpack.c.b16 %v3747, %v3746
        %v3774 = vpack.c.b16 %v3749, %v3748
        %v3775 = vpack.c.b16 %v3751, %v3750
        %v3776 = vpack.c.b16 %v3753, %v3752
        %v3777 = vpack.c.b16 %v3755, %v3754
        %v3778 = vpack.c.b16 %v3757, %v3756
        %v3779 = vpack.c.b16 %v3759, %v3758
        %v3780 = vpack.c.b16 %v3761, %v3760
        %v3781 = vpack.c.b16 %v3763, %v3762
        %v3782 = vpack.c.b16 %v3765, %v3764
        %v3783 = vpack.c.b16 %v3767, %v3766
        %v3816 = vunpack.c.l.b16 %v3399
        %v3817 = vunpack.c.l.b16 %v3400
        %v3818 = vunpack.c.l.b16 %v3401
        %v3819 = vunpack.c.l.b16 %v3402
        %v3820 = vunpack.c.l.b16 %v3403
        %v3821 = vunpack.c.l.b16 %v3404
        %v3822 = vunpack.c.l.b16 %v3405
        %v3823 = vunpack.c.l.b16 %v3406
        %v3824 = vunpack.c.l.b16 %v3407
        %v3825 = vunpack.c.l.b16 %v3408
        %v3826 = vunpack.c.l.b16 %v3409
        %v3827 = vunpack.c.l.b16 %v3410
        %v3828 = vunpack.c.l.b16 %v3411
        %v3829 = vunpack.c.l.b16 %v3412
        %v3830 = vunpack.c.l.b16 %v3413
        %v3831 = vunpack.c.l.b16 %v3414
        %v3832 = vpack.c.b16 %v3817, %v3816
        %v3833 = vpack.c.b16 %v3819, %v3818
        %v3834 = vpack.c.b16 %v3821, %v3820
        %v3835 = vpack.c.b16 %v3823, %v3822
        %v3836 = vpack.c.b16 %v3825, %v3824
        %v3837 = vpack.c.b16 %v3827, %v3826
        %v3838 = vpack.c.b16 %v3829, %v3828
        %v3839 = vpack.c.b16 %v3831, %v3830
        %3848 = vmatprep.subr.bf16.mxu0 0
        %3849 = vmatpush1.bf16.msra.mxu0 %v3839
        %3850 = vmatprep.subr.bf16.mxu0 0
        %3851 = vmatpush1.bf16.msra.mxu0 %v3838
        %3852 = vmatprep.subr.bf16.mxu0 0
        %3853 = vmatpush1.bf16.msra.mxu0 %v3837
        %3854 = vmatprep.subr.bf16.mxu0 0
        %3855 = vmatpush1.bf16.msra.mxu0 %v3836
        %3856 = vmatprep.subr.bf16.mxu0 0
        %3857 = vmatpush1.bf16.msra.mxu0 %v3835
        %3858 = vmatprep.subr.bf16.mxu0 0
        %3859 = vmatpush1.bf16.msra.mxu0 %v3834
        %3860 = vmatprep.subr.bf16.mxu0 0
        %3861 = vmatpush1.bf16.msra.mxu0 %v3833
        %3862 = vmatprep.subr.bf16.mxu0 0
        %3863 = vmatpush1.bf16.msra.mxu0 %v3832
        %3864 = vmatprep.subr.bf16.mxu0 0
        %3865 = vmatpush2.bf16.msra.mxu0 0
        %3866 = vmatprep.subr.bf16.mxu0 0
        %3867 = vmatpush2.bf16.msra.mxu0 0
        %3868 = vmatprep.subr.bf16.mxu0 0
        %3869 = vmatpush2.bf16.msra.mxu0 0
        %3870 = vmatprep.subr.bf16.mxu0 0
        %3871 = vmatpush2.bf16.msra.mxu0 0
        %3872 = vmatprep.subr.bf16.mxu0 0
        %3873 = vmatpush2.bf16.msra.mxu0 0
        %3874 = vmatprep.subr.bf16.mxu0 0
        %3875 = vmatpush2.bf16.msra.mxu0 0
        %3876 = vmatprep.subr.bf16.mxu0 0
        %3877 = vmatpush2.bf16.msra.mxu0 0
        %3878 = vmatprep.subr.bf16.mxu0 0
        %3879 = vmatpush2.bf16.msra.mxu0 0
        %3880 = vmatprep.mubr.bf16.mxu0 0
        %3881 = vmatmul.mubr.bf16.gmra.mxu0 %v3768
        %v3882 = vpop.f32.mrf.mxu0
        %v3883 = vadd.f32 %v3578, %v3882
        %v3884 = vpop.f32.mrf.mxu0
        %v3885 = vpop.f32.mrf.mxu0
        %v3886 = vadd.f32 %v3581, %v3885
        %v3887 = vpop.f32.mrf.mxu0
        %3888 = vmatprep.mubr.bf16.mxu0 0
        %3889 = vmatmul.mubr.bf16.gmra.mxu0 %v3769
        %v3890 = vpop.f32.mrf.mxu0
        %v3891 = vadd.f32 %v3586, %v3890
        %v3892 = vpop.f32.mrf.mxu0
        %v3893 = vpop.f32.mrf.mxu0
        %v3894 = vadd.f32 %v3589, %v3893
        %v3895 = vpop.f32.mrf.mxu0
        %3896 = vmatprep.mubr.bf16.mxu0 0
        %3897 = vmatmul.mubr.bf16.gmra.mxu0 %v3770
        %v3898 = vpop.f32.mrf.mxu0
        %v3899 = vadd.f32 %v3594, %v3898
        %v3900 = vpop.f32.mrf.mxu0
        %v3901 = vpop.f32.mrf.mxu0
        %v3902 = vadd.f32 %v3597, %v3901
        %v3903 = vpop.f32.mrf.mxu0
        %3904 = vmatprep.mubr.bf16.mxu0 0
        %3905 = vmatmul.mubr.bf16.gmra.mxu0 %v3771
        %v3906 = vpop.f32.mrf.mxu0
        %v3907 = vadd.f32 %v3602, %v3906
        %v3908 = vpop.f32.mrf.mxu0
        %v3909 = vpop.f32.mrf.mxu0
        %v3910 = vadd.f32 %v3605, %v3909
        %v3911 = vpop.f32.mrf.mxu0
        %3912 = vmatprep.mubr.bf16.mxu0 0
        %3913 = vmatmul.mubr.bf16.gmra.mxu0 %v3772
        %v3914 = vpop.f32.mrf.mxu0
        %v3915 = vadd.f32 %v3610, %v3914
        %v3916 = vpop.f32.mrf.mxu0
        %v3917 = vpop.f32.mrf.mxu0
        %v3918 = vadd.f32 %v3613, %v3917
        %v3919 = vpop.f32.mrf.mxu0
        %3920 = vmatprep.mubr.bf16.mxu0 0
        %3921 = vmatmul.mubr.bf16.gmra.mxu0 %v3773
        %v3922 = vpop.f32.mrf.mxu0
        %v3923 = vadd.f32 %v3618, %v3922
        %v3924 = vpop.f32.mrf.mxu0
        %v3925 = vpop.f32.mrf.mxu0
        %v3926 = vadd.f32 %v3621, %v3925
        %v3927 = vpop.f32.mrf.mxu0
        %3928 = vmatprep.mubr.bf16.mxu0 0
        %3929 = vmatmul.mubr.bf16.gmra.mxu0 %v3774
        %v3930 = vpop.f32.mrf.mxu0
        %v3931 = vadd.f32 %v3626, %v3930
        %v3932 = vpop.f32.mrf.mxu0
        %v3933 = vpop.f32.mrf.mxu0
        %v3934 = vadd.f32 %v3629, %v3933
        %v3935 = vpop.f32.mrf.mxu0
        %3936 = vmatprep.mubr.bf16.mxu0 0
        %3937 = vmatmul.mubr.bf16.gmra.mxu0 %v3775
        %v3938 = vpop.f32.mrf.mxu0
        %v3939 = vadd.f32 %v3634, %v3938
        %v3940 = vpop.f32.mrf.mxu0
        %v3941 = vpop.f32.mrf.mxu0
        %v3942 = vadd.f32 %v3637, %v3941
        %v3943 = vpop.f32.mrf.mxu0
        %3944 = vmatprep.mubr.bf16.mxu0 0
        %3945 = vmatmul.mubr.bf16.gmra.mxu0 %v3776
        %v3946 = vpop.f32.mrf.mxu0
        %v3947 = vadd.f32 %v3642, %v3946
        %v3948 = vpop.f32.mrf.mxu0
        %v3949 = vpop.f32.mrf.mxu0
        %v3950 = vadd.f32 %v3645, %v3949
        %v3951 = vpop.f32.mrf.mxu0
        %3952 = vmatprep.mubr.bf16.mxu0 0
        %3953 = vmatmul.mubr.bf16.gmra.mxu0 %v3777
        %v3954 = vpop.f32.mrf.mxu0
        %v3955 = vadd.f32 %v3650, %v3954
        %v3956 = vpop.f32.mrf.mxu0
        %v3957 = vpop.f32.mrf.mxu0
        %v3958 = vadd.f32 %v3653, %v3957
        %v3959 = vpop.f32.mrf.mxu0
        %3960 = vmatprep.mubr.bf16.mxu0 0
        %3961 = vmatmul.mubr.bf16.gmra.mxu0 %v3778
        %v3962 = vpop.f32.mrf.mxu0
        %v3963 = vadd.f32 %v3658, %v3962
        %v3964 = vpop.f32.mrf.mxu0
        %v3965 = vpop.f32.mrf.mxu0
        %v3966 = vadd.f32 %v3661, %v3965
        %v3967 = vpop.f32.mrf.mxu0
        %3968 = vmatprep.mubr.bf16.mxu0 0
        %3969 = vmatmul.mubr.bf16.gmra.mxu0 %v3779
        %v3970 = vpop.f32.mrf.mxu0
        %v3971 = vadd.f32 %v3666, %v3970
        %v3972 = vpop.f32.mrf.mxu0
        %v3973 = vpop.f32.mrf.mxu0
        %v3974 = vadd.f32 %v3669, %v3973
        %v3975 = vpop.f32.mrf.mxu0
        %3976 = vmatprep.mubr.bf16.mxu0 0
        %3977 = vmatmul.mubr.bf16.gmra.mxu0 %v3780
        %v3978 = vpop.f32.mrf.mxu0
        %v3979 = vadd.f32 %v3674, %v3978
        %v3980 = vpop.f32.mrf.mxu0
        %v3981 = vpop.f32.mrf.mxu0
        %v3982 = vadd.f32 %v3677, %v3981
        %v3983 = vpop.f32.mrf.mxu0
        %3984 = vmatprep.mubr.bf16.mxu0 0
        %3985 = vmatmul.mubr.bf16.gmra.mxu0 %v3781
        %v3986 = vpop.f32.mrf.mxu0
        %v3987 = vadd.f32 %v3682, %v3986
        %v3988 = vpop.f32.mrf.mxu0
        %v3989 = vpop.f32.mrf.mxu0
        %v3990 = vadd.f32 %v3685, %v3989
        %v3991 = vpop.f32.mrf.mxu0
        %3992 = vmatprep.mubr.bf16.mxu0 0
        %3993 = vmatmul.mubr.bf16.gmra.mxu0 %v3782
        %v3994 = vpop.f32.mrf.mxu0
        %v3995 = vadd.f32 %v3690, %v3994
        %v3996 = vpop.f32.mrf.mxu0
        %v3997 = vpop.f32.mrf.mxu0
        %v3998 = vadd.f32 %v3693, %v3997
        %v3999 = vpop.f32.mrf.mxu0
        %4000 = vmatprep.mubr.bf16.mxu0 0
        %4001 = vmatmul.mubr.bf16.gmra.mxu0 %v3783
        %v4002 = vpop.f32.mrf.mxu0
        %v4003 = vadd.f32 %v3698, %v4002
        %v4004 = vpop.f32.mrf.mxu0
        %v4005 = vpop.f32.mrf.mxu0
        %v4006 = vadd.f32 %v3701, %v4005
        %v4007 = vpop.f32.mrf.mxu0
        %4008 = vdwg.mxu0
        %v4009 = vld [vmem:[%s12] sm:$0x1]
        %v4011 = vlaneseq
        %v4012 = vshrl.u32 %v4011, 7
        %v4013 = vsub.s32 0, %v4012
        %v4014 = vrot.slane %v4009, %v4013
        %v4016 = vadd.f32 %v3883, %v4014
        %v4017 = vadd.f32 %v3886, %v4014
        %v4018 = vadd.f32 %v3891, %v4014
        %v4019 = vadd.f32 %v3894, %v4014
        %v4020 = vadd.f32 %v3899, %v4014
        %v4021 = vadd.f32 %v3902, %v4014
        %v4022 = vadd.f32 %v3907, %v4014
        %v4023 = vadd.f32 %v3910, %v4014
        %v4024 = vadd.f32 %v3915, %v4014
        %v4025 = vadd.f32 %v3918, %v4014
        %v4026 = vadd.f32 %v3923, %v4014
        %v4027 = vadd.f32 %v3926, %v4014
        %v4028 = vadd.f32 %v3931, %v4014
        %v4029 = vadd.f32 %v3934, %v4014
        %v4030 = vadd.f32 %v3939, %v4014
        %v4031 = vadd.f32 %v3942, %v4014
        %v4032 = vadd.f32 %v3947, %v4014
        %v4033 = vadd.f32 %v3950, %v4014
        %v4034 = vadd.f32 %v3955, %v4014
        %v4035 = vadd.f32 %v3958, %v4014
        %v4036 = vadd.f32 %v3963, %v4014
        %v4037 = vadd.f32 %v3966, %v4014
        %v4038 = vadd.f32 %v3971, %v4014
        %v4039 = vadd.f32 %v3974, %v4014
        %v4040 = vadd.f32 %v3979, %v4014
        %v4041 = vadd.f32 %v3982, %v4014
        %v4042 = vadd.f32 %v3987, %v4014
        %v4043 = vadd.f32 %v3990, %v4014
        %v4044 = vadd.f32 %v3995, %v4014
        %v4045 = vadd.f32 %v3998, %v4014
        %v4046 = vadd.f32 %v4003, %v4014
        %v4047 = vadd.f32 %v4006, %v4014
        %v4048 = vtanh.pop %v4016
        %v4049 = vtanh.pop %v4017
        %v4050 = vtanh.pop %v4018
        %v4051 = vtanh.pop %v4019
        %v4052 = vtanh.pop %v4020
        %v4053 = vtanh.pop %v4021
        %v4054 = vtanh.pop %v4022
        %v4055 = vtanh.pop %v4023
        %v4056 = vtanh.pop %v4024
        %v4057 = vtanh.pop %v4025
        %v4058 = vtanh.pop %v4026
        %v4059 = vtanh.pop %v4027
        %v4060 = vtanh.pop %v4028
        %v4061 = vtanh.pop %v4029
        %v4062 = vtanh.pop %v4030
        %v4063 = vtanh.pop %v4031
        %v4064 = vtanh.pop %v4032
        %v4065 = vtanh.pop %v4033
        %v4066 = vtanh.pop %v4034
        %v4067 = vtanh.pop %v4035
        %v4068 = vtanh.pop %v4036
        %v4069 = vtanh.pop %v4037
        %v4070 = vtanh.pop %v4038
        %v4071 = vtanh.pop %v4039
        %v4072 = vtanh.pop %v4040
        %v4073 = vtanh.pop %v4041
        %v4074 = vtanh.pop %v4042
        %v4075 = vtanh.pop %v4043
        %v4076 = vtanh.pop %v4044
        %v4077 = vtanh.pop %v4045
        %v4078 = vtanh.pop %v4046
        %v4079 = vtanh.pop %v4047
        %v4080 = vpack.c.bf16 %v4049, %v4048
        %v4081 = vpack.c.bf16 %v4051, %v4050
        %v4082 = vpack.c.bf16 %v4053, %v4052
        %v4083 = vpack.c.bf16 %v4055, %v4054
        %v4084 = vpack.c.bf16 %v4057, %v4056
        %v4085 = vpack.c.bf16 %v4059, %v4058
        %v4086 = vpack.c.bf16 %v4061, %v4060
        %v4087 = vpack.c.bf16 %v4063, %v4062
        %v4088 = vpack.c.bf16 %v4065, %v4064
        %v4089 = vpack.c.bf16 %v4067, %v4066
        %v4090 = vpack.c.bf16 %v4069, %v4068
        %v4091 = vpack.c.bf16 %v4071, %v4070
        %v4092 = vpack.c.bf16 %v4073, %v4072
        %v4093 = vpack.c.bf16 %v4075, %v4074
        %v4094 = vpack.c.bf16 %v4077, %v4076
        %v4095 = vpack.c.bf16 %v4079, %v4078
        %4096 = vmatprep.subr.bf16.mxu0 0
        %4097 = vmatpush1.bf16.xpose.msra.mxu0 0
        %4098 = vmatprep.subr.bf16.mxu0 0
        %4099 = vmatpush1.bf16.xpose.msra.mxu0 0
        %4100 = vmatprep.subr.bf16.mxu0 0
        %4101 = vmatpush1.bf16.xpose.msra.mxu0 0
        %4102 = vmatprep.subr.bf16.mxu0 0
        %4103 = vmatpush1.bf16.xpose.msra.mxu0 0
        %4104 = vmatprep.subr.bf16.mxu0 0
        %4105 = vmatpush1.bf16.xpose.msra.mxu0 0
        %4106 = vmatprep.subr.bf16.mxu0 0
        %4107 = vmatpush1.bf16.xpose.msra.mxu0 0
        %4108 = vmatprep.subr.bf16.mxu0 0
        %4109 = vmatpush1.bf16.xpose.msra.mxu0 %v3384
        %4110 = vmatprep.subr.bf16.mxu0 0
        %4111 = vmatpush1.bf16.xpose.msra.mxu0 %v3383
        %4112 = vmatprep.subr.bf16.mxu0 0
        %4113 = vmatpush2.bf16.xpose.msra.mxu0 0
        %4114 = vmatprep.subr.bf16.mxu0 0
        %4115 = vmatpush2.bf16.xpose.msra.mxu0 0
        %4116 = vmatprep.subr.bf16.mxu0 0
        %4117 = vmatpush2.bf16.xpose.msra.mxu0 0
        %4118 = vmatprep.subr.bf16.mxu0 0
        %4119 = vmatpush2.bf16.xpose.msra.mxu0 0
        %4120 = vmatprep.subr.bf16.mxu0 0
        %4121 = vmatpush2.bf16.xpose.msra.mxu0 0
        %4122 = vmatprep.subr.bf16.mxu0 0
        %4123 = vmatpush2.bf16.xpose.msra.mxu0 0
        %4124 = vmatprep.subr.bf16.mxu0 0
        %4125 = vmatpush2.bf16.xpose.msra.mxu0 0
        %4126 = vmatprep.subr.bf16.mxu0 0
        %4127 = vmatpush2.bf16.xpose.msra.mxu0 0
        %4128 = vmatprep.mubr.bf16.mxu0 0
        %4129 = vmatmul.mubr.bf16.gmra.mxu0 %v4080
        %v4130 = vpop.f32.mrf.mxu0
        %v4131 = vadd.f32 0.0, %v4130
        %v4132 = vpop.f32.mrf.mxu0
        %v4133 = vpop.f32.mrf.mxu0
        %v4134 = vadd.f32 0.0, %v4133
        %v4135 = vpop.f32.mrf.mxu0
        %4136 = vmatprep.mubr.bf16.mxu0 0
        %4137 = vmatmul.mubr.bf16.gmra.mxu0 %v4081
        %v4138 = vpop.f32.mrf.mxu0
        %v4139 = vadd.f32 0.0, %v4138
        %v4140 = vpop.f32.mrf.mxu0
        %v4141 = vpop.f32.mrf.mxu0
        %v4142 = vadd.f32 0.0, %v4141
        %v4143 = vpop.f32.mrf.mxu0
        %4144 = vdwg.mxu0
        %4145 = vmatprep.subr.bf16.mxu0 0
        %4146 = vmatpush1.bf16.xpose.msra.mxu0 0
        %4147 = vmatprep.subr.bf16.mxu0 0
        %4148 = vmatpush1.bf16.xpose.msra.mxu0 0
        %4149 = vmatprep.subr.bf16.mxu0 0
        %4150 = vmatpush1.bf16.xpose.msra.mxu0 0
        %4151 = vmatprep.subr.bf16.mxu0 0
        %4152 = vmatpush1.bf16.xpose.msra.mxu0 0
        %4153 = vmatprep.subr.bf16.mxu0 0
        %4154 = vmatpush1.bf16.xpose.msra.mxu0 0
        %4155 = vmatprep.subr.bf16.mxu0 0
        %4156 = vmatpush1.bf16.xpose.msra.mxu0 0
        %4157 = vmatprep.subr.bf16.mxu0 0
        %4158 = vmatpush1.bf16.xpose.msra.mxu0 %v3386
        %4159 = vmatprep.subr.bf16.mxu0 0
        %4160 = vmatpush1.bf16.xpose.msra.mxu0 %v3385
        %4161 = vmatprep.subr.bf16.mxu0 0
        %4162 = vmatpush2.bf16.xpose.msra.mxu0 0
        %4163 = vmatprep.subr.bf16.mxu0 0
        %4164 = vmatpush2.bf16.xpose.msra.mxu0 0
        %4165 = vmatprep.subr.bf16.mxu0 0
        %4166 = vmatpush2.bf16.xpose.msra.mxu0 0
        %4167 = vmatprep.subr.bf16.mxu0 0
        %4168 = vmatpush2.bf16.xpose.msra.mxu0 0
        %4169 = vmatprep.subr.bf16.mxu0 0
        %4170 = vmatpush2.bf16.xpose.msra.mxu0 0
        %4171 = vmatprep.subr.bf16.mxu0 0
        %4172 = vmatpush2.bf16.xpose.msra.mxu0 0
        %4173 = vmatprep.subr.bf16.mxu0 0
        %4174 = vmatpush2.bf16.xpose.msra.mxu0 0
        %4175 = vmatprep.subr.bf16.mxu0 0
        %4176 = vmatpush2.bf16.xpose.msra.mxu0 0
        %4177 = vmatprep.mubr.bf16.mxu0 0
        %4178 = vmatmul.mubr.bf16.gmra.mxu0 %v4082
        %v4179 = vpop.f32.mrf.mxu0
        %v4180 = vadd.f32 0.0, %v4179
        %v4181 = vpop.f32.mrf.mxu0
        %v4182 = vpop.f32.mrf.mxu0
        %v4183 = vadd.f32 0.0, %v4182
        %v4184 = vpop.f32.mrf.mxu0
        %4185 = vmatprep.mubr.bf16.mxu0 0
        %4186 = vmatmul.mubr.bf16.gmra.mxu0 %v4083
        %v4187 = vpop.f32.mrf.mxu0
        %v4188 = vadd.f32 0.0, %v4187
        %v4189 = vpop.f32.mrf.mxu0
        %v4190 = vpop.f32.mrf.mxu0
        %v4191 = vadd.f32 0.0, %v4190
        %v4192 = vpop.f32.mrf.mxu0
        %4193 = vdwg.mxu0
        %4194 = vmatprep.subr.bf16.mxu0 0
        %4195 = vmatpush1.bf16.xpose.msra.mxu0 0
        %4196 = vmatprep.subr.bf16.mxu0 0
        %4197 = vmatpush1.bf16.xpose.msra.mxu0 0
        %4198 = vmatprep.subr.bf16.mxu0 0
        %4199 = vmatpush1.bf16.xpose.msra.mxu0 0
        %4200 = vmatprep.subr.bf16.mxu0 0
        %4201 = vmatpush1.bf16.xpose.msra.mxu0 0
        %4202 = vmatprep.subr.bf16.mxu0 0
        %4203 = vmatpush1.bf16.xpose.msra.mxu0 0
        %4204 = vmatprep.subr.bf16.mxu0 0
        %4205 = vmatpush1.bf16.xpose.msra.mxu0 0
        %4206 = vmatprep.subr.bf16.mxu0 0
        %4207 = vmatpush1.bf16.xpose.msra.mxu0 %v3388
        %4208 = vmatprep.subr.bf16.mxu0 0
        %4209 = vmatpush1.bf16.xpose.msra.mxu0 %v3387
        %4210 = vmatprep.subr.bf16.mxu0 0
        %4211 = vmatpush2.bf16.xpose.msra.mxu0 0
        %4212 = vmatprep.subr.bf16.mxu0 0
        %4213 = vmatpush2.bf16.xpose.msra.mxu0 0
        %4214 = vmatprep.subr.bf16.mxu0 0
        %4215 = vmatpush2.bf16.xpose.msra.mxu0 0
        %4216 = vmatprep.subr.bf16.mxu0 0
        %4217 = vmatpush2.bf16.xpose.msra.mxu0 0
        %4218 = vmatprep.subr.bf16.mxu0 0
        %4219 = vmatpush2.bf16.xpose.msra.mxu0 0
        %4220 = vmatprep.subr.bf16.mxu0 0
        %4221 = vmatpush2.bf16.xpose.msra.mxu0 0
        %4222 = vmatprep.subr.bf16.mxu0 0
        %4223 = vmatpush2.bf16.xpose.msra.mxu0 0
        %4224 = vmatprep.subr.bf16.mxu0 0
        %4225 = vmatpush2.bf16.xpose.msra.mxu0 0
        %4226 = vmatprep.mubr.bf16.mxu0 0
        %4227 = vmatmul.mubr.bf16.gmra.mxu0 %v4084
        %v4228 = vpop.f32.mrf.mxu0
        %v4229 = vadd.f32 0.0, %v4228
        %v4230 = vpop.f32.mrf.mxu0
        %v4231 = vpop.f32.mrf.mxu0
        %v4232 = vadd.f32 0.0, %v4231
        %v4233 = vpop.f32.mrf.mxu0
        %4234 = vmatprep.mubr.bf16.mxu0 0
        %4235 = vmatmul.mubr.bf16.gmra.mxu0 %v4085
        %v4236 = vpop.f32.mrf.mxu0
        %v4237 = vadd.f32 0.0, %v4236
        %v4238 = vpop.f32.mrf.mxu0
        %v4239 = vpop.f32.mrf.mxu0
        %v4240 = vadd.f32 0.0, %v4239
        %v4241 = vpop.f32.mrf.mxu0
        %4242 = vdwg.mxu0
        %4243 = vmatprep.subr.bf16.mxu0 0
        %4244 = vmatpush1.bf16.xpose.msra.mxu0 0
        %4245 = vmatprep.subr.bf16.mxu0 0
        %4246 = vmatpush1.bf16.xpose.msra.mxu0 0
        %4247 = vmatprep.subr.bf16.mxu0 0
        %4248 = vmatpush1.bf16.xpose.msra.mxu0 0
        %4249 = vmatprep.subr.bf16.mxu0 0
        %4250 = vmatpush1.bf16.xpose.msra.mxu0 0
        %4251 = vmatprep.subr.bf16.mxu0 0
        %4252 = vmatpush1.bf16.xpose.msra.mxu0 0
        %4253 = vmatprep.subr.bf16.mxu0 0
        %4254 = vmatpush1.bf16.xpose.msra.mxu0 0
        %4255 = vmatprep.subr.bf16.mxu0 0
        %4256 = vmatpush1.bf16.xpose.msra.mxu0 %v3390
        %4257 = vmatprep.subr.bf16.mxu0 0
        %4258 = vmatpush1.bf16.xpose.msra.mxu0 %v3389
        %4259 = vmatprep.subr.bf16.mxu0 0
        %4260 = vmatpush2.bf16.xpose.msra.mxu0 0
        %4261 = vmatprep.subr.bf16.mxu0 0
        %4262 = vmatpush2.bf16.xpose.msra.mxu0 0
        %4263 = vmatprep.subr.bf16.mxu0 0
        %4264 = vmatpush2.bf16.xpose.msra.mxu0 0
        %4265 = vmatprep.subr.bf16.mxu0 0
        %4266 = vmatpush2.bf16.xpose.msra.mxu0 0
        %4267 = vmatprep.subr.bf16.mxu0 0
        %4268 = vmatpush2.bf16.xpose.msra.mxu0 0
        %4269 = vmatprep.subr.bf16.mxu0 0
        %4270 = vmatpush2.bf16.xpose.msra.mxu0 0
        %4271 = vmatprep.subr.bf16.mxu0 0
        %4272 = vmatpush2.bf16.xpose.msra.mxu0 0
        %4273 = vmatprep.subr.bf16.mxu0 0
        %4274 = vmatpush2.bf16.xpose.msra.mxu0 0
        %4275 = vmatprep.mubr.bf16.mxu0 0
        %4276 = vmatmul.mubr.bf16.gmra.mxu0 %v4086
        %v4277 = vpop.f32.mrf.mxu0
        %v4278 = vadd.f32 0.0, %v4277
        %v4279 = vpop.f32.mrf.mxu0
        %v4280 = vpop.f32.mrf.mxu0
        %v4281 = vadd.f32 0.0, %v4280
        %v4282 = vpop.f32.mrf.mxu0
        %4283 = vmatprep.mubr.bf16.mxu0 0
        %4284 = vmatmul.mubr.bf16.gmra.mxu0 %v4087
        %v4285 = vpop.f32.mrf.mxu0
        %v4286 = vadd.f32 0.0, %v4285
        %v4287 = vpop.f32.mrf.mxu0
        %v4288 = vpop.f32.mrf.mxu0
        %v4289 = vadd.f32 0.0, %v4288
        %v4290 = vpop.f32.mrf.mxu0
        %4291 = vdwg.mxu0
        %4292 = vmatprep.subr.bf16.mxu0 0
        %4293 = vmatpush1.bf16.xpose.msra.mxu0 0
        %4294 = vmatprep.subr.bf16.mxu0 0
        %4295 = vmatpush1.bf16.xpose.msra.mxu0 0
        %4296 = vmatprep.subr.bf16.mxu0 0
        %4297 = vmatpush1.bf16.xpose.msra.mxu0 0
        %4298 = vmatprep.subr.bf16.mxu0 0
        %4299 = vmatpush1.bf16.xpose.msra.mxu0 0
        %4300 = vmatprep.subr.bf16.mxu0 0
        %4301 = vmatpush1.bf16.xpose.msra.mxu0 0
        %4302 = vmatprep.subr.bf16.mxu0 0
        %4303 = vmatpush1.bf16.xpose.msra.mxu0 0
        %4304 = vmatprep.subr.bf16.mxu0 0
        %4305 = vmatpush1.bf16.xpose.msra.mxu0 %v3392
        %4306 = vmatprep.subr.bf16.mxu0 0
        %4307 = vmatpush1.bf16.xpose.msra.mxu0 %v3391
        %4308 = vmatprep.subr.bf16.mxu0 0
        %4309 = vmatpush2.bf16.xpose.msra.mxu0 0
        %4310 = vmatprep.subr.bf16.mxu0 0
        %4311 = vmatpush2.bf16.xpose.msra.mxu0 0
        %4312 = vmatprep.subr.bf16.mxu0 0
        %4313 = vmatpush2.bf16.xpose.msra.mxu0 0
        %4314 = vmatprep.subr.bf16.mxu0 0
        %4315 = vmatpush2.bf16.xpose.msra.mxu0 0
        %4316 = vmatprep.subr.bf16.mxu0 0
        %4317 = vmatpush2.bf16.xpose.msra.mxu0 0
        %4318 = vmatprep.subr.bf16.mxu0 0
        %4319 = vmatpush2.bf16.xpose.msra.mxu0 0
        %4320 = vmatprep.subr.bf16.mxu0 0
        %4321 = vmatpush2.bf16.xpose.msra.mxu0 0
        %4322 = vmatprep.subr.bf16.mxu0 0
        %4323 = vmatpush2.bf16.xpose.msra.mxu0 0
        %4324 = vmatprep.mubr.bf16.mxu0 0
        %4325 = vmatmul.mubr.bf16.gmra.mxu0 %v4088
        %v4326 = vpop.f32.mrf.mxu0
        %v4327 = vadd.f32 0.0, %v4326
        %v4328 = vpop.f32.mrf.mxu0
        %v4329 = vpop.f32.mrf.mxu0
        %v4330 = vadd.f32 0.0, %v4329
        %v4331 = vpop.f32.mrf.mxu0
        %4332 = vmatprep.mubr.bf16.mxu0 0
        %4333 = vmatmul.mubr.bf16.gmra.mxu0 %v4089
        %v4334 = vpop.f32.mrf.mxu0
        %v4335 = vadd.f32 0.0, %v4334
        %v4336 = vpop.f32.mrf.mxu0
        %v4337 = vpop.f32.mrf.mxu0
        %v4338 = vadd.f32 0.0, %v4337
        %v4339 = vpop.f32.mrf.mxu0
        %4340 = vdwg.mxu0
        %4341 = vmatprep.subr.bf16.mxu0 0
        %4342 = vmatpush1.bf16.xpose.msra.mxu0 0
        %4343 = vmatprep.subr.bf16.mxu0 0
        %4344 = vmatpush1.bf16.xpose.msra.mxu0 0
        %4345 = vmatprep.subr.bf16.mxu0 0
        %4346 = vmatpush1.bf16.xpose.msra.mxu0 0
        %4347 = vmatprep.subr.bf16.mxu0 0
        %4348 = vmatpush1.bf16.xpose.msra.mxu0 0
        %4349 = vmatprep.subr.bf16.mxu0 0
        %4350 = vmatpush1.bf16.xpose.msra.mxu0 0
        %4351 = vmatprep.subr.bf16.mxu0 0
        %4352 = vmatpush1.bf16.xpose.msra.mxu0 0
        %4353 = vmatprep.subr.bf16.mxu0 0
        %4354 = vmatpush1.bf16.xpose.msra.mxu0 %v3394
        %4355 = vmatprep.subr.bf16.mxu0 0
        %4356 = vmatpush1.bf16.xpose.msra.mxu0 %v3393
        %4357 = vmatprep.subr.bf16.mxu0 0
        %4358 = vmatpush2.bf16.xpose.msra.mxu0 0
        %4359 = vmatprep.subr.bf16.mxu0 0
        %4360 = vmatpush2.bf16.xpose.msra.mxu0 0
        %4361 = vmatprep.subr.bf16.mxu0 0
        %4362 = vmatpush2.bf16.xpose.msra.mxu0 0
        %4363 = vmatprep.subr.bf16.mxu0 0
        %4364 = vmatpush2.bf16.xpose.msra.mxu0 0
        %4365 = vmatprep.subr.bf16.mxu0 0
        %4366 = vmatpush2.bf16.xpose.msra.mxu0 0
        %4367 = vmatprep.subr.bf16.mxu0 0
        %4368 = vmatpush2.bf16.xpose.msra.mxu0 0
        %4369 = vmatprep.subr.bf16.mxu0 0
        %4370 = vmatpush2.bf16.xpose.msra.mxu0 0
        %4371 = vmatprep.subr.bf16.mxu0 0
        %4372 = vmatpush2.bf16.xpose.msra.mxu0 0
        %4373 = vmatprep.mubr.bf16.mxu0 0
        %4374 = vmatmul.mubr.bf16.gmra.mxu0 %v4090
        %v4375 = vpop.f32.mrf.mxu0
        %v4376 = vadd.f32 0.0, %v4375
        %v4377 = vpop.f32.mrf.mxu0
        %v4378 = vpop.f32.mrf.mxu0
        %v4379 = vadd.f32 0.0, %v4378
        %v4380 = vpop.f32.mrf.mxu0
        %4381 = vmatprep.mubr.bf16.mxu0 0
        %4382 = vmatmul.mubr.bf16.gmra.mxu0 %v4091
        %v4383 = vpop.f32.mrf.mxu0
        %v4384 = vadd.f32 0.0, %v4383
        %v4385 = vpop.f32.mrf.mxu0
        %v4386 = vpop.f32.mrf.mxu0
        %v4387 = vadd.f32 0.0, %v4386
        %v4388 = vpop.f32.mrf.mxu0
        %4389 = vdwg.mxu0
        %4390 = vmatprep.subr.bf16.mxu0 0
        %4391 = vmatpush1.bf16.xpose.msra.mxu0 0
        %4392 = vmatprep.subr.bf16.mxu0 0
        %4393 = vmatpush1.bf16.xpose.msra.mxu0 0
        %4394 = vmatprep.subr.bf16.mxu0 0
        %4395 = vmatpush1.bf16.xpose.msra.mxu0 0
        %4396 = vmatprep.subr.bf16.mxu0 0
        %4397 = vmatpush1.bf16.xpose.msra.mxu0 0
        %4398 = vmatprep.subr.bf16.mxu0 0
        %4399 = vmatpush1.bf16.xpose.msra.mxu0 0
        %4400 = vmatprep.subr.bf16.mxu0 0
        %4401 = vmatpush1.bf16.xpose.msra.mxu0 0
        %4402 = vmatprep.subr.bf16.mxu0 0
        %4403 = vmatpush1.bf16.xpose.msra.mxu0 %v3396
        %4404 = vmatprep.subr.bf16.mxu0 0
        %4405 = vmatpush1.bf16.xpose.msra.mxu0 %v3395
        %4406 = vmatprep.subr.bf16.mxu0 0
        %4407 = vmatpush2.bf16.xpose.msra.mxu0 0
        %4408 = vmatprep.subr.bf16.mxu0 0
        %4409 = vmatpush2.bf16.xpose.msra.mxu0 0
        %4410 = vmatprep.subr.bf16.mxu0 0
        %4411 = vmatpush2.bf16.xpose.msra.mxu0 0
        %4412 = vmatprep.subr.bf16.mxu0 0
        %4413 = vmatpush2.bf16.xpose.msra.mxu0 0
        %4414 = vmatprep.subr.bf16.mxu0 0
        %4415 = vmatpush2.bf16.xpose.msra.mxu0 0
        %4416 = vmatprep.subr.bf16.mxu0 0
        %4417 = vmatpush2.bf16.xpose.msra.mxu0 0
        %4418 = vmatprep.subr.bf16.mxu0 0
        %4419 = vmatpush2.bf16.xpose.msra.mxu0 0
        %4420 = vmatprep.subr.bf16.mxu0 0
        %4421 = vmatpush2.bf16.xpose.msra.mxu0 0
        %4422 = vmatprep.mubr.bf16.mxu0 0
        %4423 = vmatmul.mubr.bf16.gmra.mxu0 %v4092
        %v4424 = vpop.f32.mrf.mxu0
        %v4425 = vadd.f32 0.0, %v4424
        %v4426 = vpop.f32.mrf.mxu0
        %v4427 = vpop.f32.mrf.mxu0
        %v4428 = vadd.f32 0.0, %v4427
        %v4429 = vpop.f32.mrf.mxu0
        %4430 = vmatprep.mubr.bf16.mxu0 0
        %4431 = vmatmul.mubr.bf16.gmra.mxu0 %v4093
        %v4432 = vpop.f32.mrf.mxu0
        %v4433 = vadd.f32 0.0, %v4432
        %v4434 = vpop.f32.mrf.mxu0
        %v4435 = vpop.f32.mrf.mxu0
        %v4436 = vadd.f32 0.0, %v4435
        %v4437 = vpop.f32.mrf.mxu0
        %4438 = vdwg.mxu0
        %4439 = vmatprep.subr.bf16.mxu0 0
        %4440 = vmatpush1.bf16.xpose.msra.mxu0 0
        %4441 = vmatprep.subr.bf16.mxu0 0
        %4442 = vmatpush1.bf16.xpose.msra.mxu0 0
        %4443 = vmatprep.subr.bf16.mxu0 0
        %4444 = vmatpush1.bf16.xpose.msra.mxu0 0
        %4445 = vmatprep.subr.bf16.mxu0 0
        %4446 = vmatpush1.bf16.xpose.msra.mxu0 0
        %4447 = vmatprep.subr.bf16.mxu0 0
        %4448 = vmatpush1.bf16.xpose.msra.mxu0 0
        %4449 = vmatprep.subr.bf16.mxu0 0
        %4450 = vmatpush1.bf16.xpose.msra.mxu0 0
        %4451 = vmatprep.subr.bf16.mxu0 0
        %4452 = vmatpush1.bf16.xpose.msra.mxu0 %v3398
        %4453 = vmatprep.subr.bf16.mxu0 0
        %4454 = vmatpush1.bf16.xpose.msra.mxu0 %v3397
        %4455 = vmatprep.subr.bf16.mxu0 0
        %4456 = vmatpush2.bf16.xpose.msra.mxu0 0
        %4457 = vmatprep.subr.bf16.mxu0 0
        %4458 = vmatpush2.bf16.xpose.msra.mxu0 0
        %4459 = vmatprep.subr.bf16.mxu0 0
        %4460 = vmatpush2.bf16.xpose.msra.mxu0 0
        %4461 = vmatprep.subr.bf16.mxu0 0
        %4462 = vmatpush2.bf16.xpose.msra.mxu0 0
        %4463 = vmatprep.subr.bf16.mxu0 0
        %4464 = vmatpush2.bf16.xpose.msra.mxu0 0
        %4465 = vmatprep.subr.bf16.mxu0 0
        %4466 = vmatpush2.bf16.xpose.msra.mxu0 0
        %4467 = vmatprep.subr.bf16.mxu0 0
        %4468 = vmatpush2.bf16.xpose.msra.mxu0 0
        %4469 = vmatprep.subr.bf16.mxu0 0
        %4470 = vmatpush2.bf16.xpose.msra.mxu0 0
        %4471 = vmatprep.mubr.bf16.mxu0 0
        %4472 = vmatmul.mubr.bf16.gmra.mxu0 %v4094
        %v4473 = vpop.f32.mrf.mxu0
        %v4474 = vadd.f32 0.0, %v4473
        %v4475 = vpop.f32.mrf.mxu0
        %v4476 = vpop.f32.mrf.mxu0
        %v4477 = vadd.f32 0.0, %v4476
        %v4478 = vpop.f32.mrf.mxu0
        %4479 = vmatprep.mubr.bf16.mxu0 0
        %4480 = vmatmul.mubr.bf16.gmra.mxu0 %v4095
        %v4481 = vpop.f32.mrf.mxu0
        %v4482 = vadd.f32 0.0, %v4481
        %v4483 = vpop.f32.mrf.mxu0
        %v4484 = vpop.f32.mrf.mxu0
        %v4485 = vadd.f32 0.0, %v4484
        %v4486 = vpop.f32.mrf.mxu0
        %4487 = vdwg.mxu0
        %v4488 = vmul.f32 %v4131, 0.088388346
        %v4489 = vmul.f32 %v4134, 0.088388346
        %v4490 = vmul.f32 %v4139, 0.088388346
        %v4491 = vmul.f32 %v4142, 0.088388346
        %v4492 = vmul.f32 %v4180, 0.088388346
        %v4493 = vmul.f32 %v4183, 0.088388346
        %v4494 = vmul.f32 %v4188, 0.088388346
        %v4495 = vmul.f32 %v4191, 0.088388346
        %v4496 = vmul.f32 %v4229, 0.088388346
        %v4497 = vmul.f32 %v4232, 0.088388346
        %v4498 = vmul.f32 %v4237, 0.088388346
        %v4499 = vmul.f32 %v4240, 0.088388346
        %v4500 = vmul.f32 %v4278, 0.088388346
        %v4501 = vmul.f32 %v4281, 0.088388346
        %v4502 = vmul.f32 %v4286, 0.088388346
        %v4503 = vmul.f32 %v4289, 0.088388346
        %v4504 = vmul.f32 %v4327, 0.088388346
        %v4505 = vmul.f32 %v4330, 0.088388346
        %v4506 = vmul.f32 %v4335, 0.088388346
        %v4507 = vmul.f32 %v4338, 0.088388346
        %v4508 = vmul.f32 %v4376, 0.088388346
        %v4509 = vmul.f32 %v4379, 0.088388346
        %v4510 = vmul.f32 %v4384, 0.088388346
        %v4511 = vmul.f32 %v4387, 0.088388346
        %v4512 = vmul.f32 %v4425, 0.088388346
        %v4513 = vmul.f32 %v4428, 0.088388346
        %v4514 = vmul.f32 %v4433, 0.088388346
        %v4515 = vmul.f32 %v4436, 0.088388346
        %v4516 = vmul.f32 %v4474, 0.088388346
        %v4517 = vmul.f32 %v4477, 0.088388346
        %v4518 = vmul.f32 %v4482, 0.088388346
        %v4519 = vmul.f32 %v4485, 0.088388346
        %v4520 = vlaneseq
        %v4521 = vand.u32 %v4520, 127
        %v4522 = vld [vmem:[%s642] sm:$0x1]
        %v4523 = vld [vmem:[%s642 + $0x1] sm:$0x1]
        %v4524 = vld [vmem:[%s642 + $0x2] sm:$0x1]
        %v4525 = vld [vmem:[%s642 + $0x3] sm:$0x1]
        %v4526 = vld [vmem:[%s642 + $0x4] sm:$0x1]
        %v4527 = vld [vmem:[%s642 + $0x5] sm:$0x1]
        %v4528 = vld [vmem:[%s642 + $0x6] sm:$0x1]
        %v4529 = vld [vmem:[%s642 + $0x7] sm:$0x1]
        %v4530 = vlaneseq
        %v4531 = vshrl.u32 %v4530, 7
        %v4532 = vsub.s32 0, %v4531
        %v4533 = vrot.slane %v4522, %v4532
        %v4534 = vlaneseq
        %v4535 = vshrl.u32 %v4534, 7
        %v4536 = vsub.s32 0, %v4535
        %v4537 = vrot.slane %v4523, %v4536
        %v4538 = vlaneseq
        %v4539 = vshrl.u32 %v4538, 7
        %v4540 = vsub.s32 0, %v4539
        %v4541 = vrot.slane %v4524, %v4540
        %v4542 = vlaneseq
        %v4543 = vshrl.u32 %v4542, 7
        %v4544 = vsub.s32 0, %v4543
        %v4545 = vrot.slane %v4525, %v4544
        %v4546 = vlaneseq
        %v4547 = vshrl.u32 %v4546, 7
        %v4548 = vsub.s32 0, %v4547
        %v4549 = vrot.slane %v4526, %v4548
        %v4550 = vlaneseq
        %v4551 = vshrl.u32 %v4550, 7
        %v4552 = vsub.s32 0, %v4551
        %v4553 = vrot.slane %v4527, %v4552
        %v4554 = vlaneseq
        %v4555 = vshrl.u32 %v4554, 7
        %v4556 = vsub.s32 0, %v4555
        %v4557 = vrot.slane %v4528, %v4556
        %v4558 = vlaneseq
        %v4559 = vshrl.u32 %v4558, 7
        %v4560 = vsub.s32 0, %v4559
        %v4561 = vrot.slane %v4529, %v4560
        %vm4562 = vcmp.lt.s32.totalorder %v4521, %v4533
        %vm4563 = vcmp.lt.s32.totalorder %v4521, %v4537
        %vm4564 = vcmp.lt.s32.totalorder %v4521, %v4541
        %vm4565 = vcmp.lt.s32.totalorder %v4521, %v4545
        %vm4566 = vcmp.lt.s32.totalorder %v4521, %v4549
        %vm4567 = vcmp.lt.s32.totalorder %v4521, %v4553
        %vm4568 = vcmp.lt.s32.totalorder %v4521, %v4557
        %vm4569 = vcmp.lt.s32.totalorder %v4521, %v4561
        %v4570 = vsel %vm4562, %v4488, -1e+30
        %v4571 = vsel %vm4562, %v4489, -1e+30
        %v4572 = vsel %vm4562, %v4490, -1e+30
        %v4573 = vsel %vm4562, %v4491, -1e+30
        %v4574 = vsel %vm4563, %v4492, -1e+30
        %v4575 = vsel %vm4563, %v4493, -1e+30
        %v4576 = vsel %vm4563, %v4494, -1e+30
        %v4577 = vsel %vm4563, %v4495, -1e+30
        %v4578 = vsel %vm4564, %v4496, -1e+30
        %v4579 = vsel %vm4564, %v4497, -1e+30
        %v4580 = vsel %vm4564, %v4498, -1e+30
        %v4581 = vsel %vm4564, %v4499, -1e+30
        %v4582 = vsel %vm4565, %v4500, -1e+30
        %v4583 = vsel %vm4565, %v4501, -1e+30
        %v4584 = vsel %vm4565, %v4502, -1e+30
        %v4585 = vsel %vm4565, %v4503, -1e+30
        %v4586 = vsel %vm4566, %v4504, -1e+30
        %v4587 = vsel %vm4566, %v4505, -1e+30
        %v4588 = vsel %vm4566, %v4506, -1e+30
        %v4589 = vsel %vm4566, %v4507, -1e+30
        %v4590 = vsel %vm4567, %v4508, -1e+30
        %v4591 = vsel %vm4567, %v4509, -1e+30
        %v4592 = vsel %vm4567, %v4510, -1e+30
        %v4593 = vsel %vm4567, %v4511, -1e+30
        %v4594 = vsel %vm4568, %v4512, -1e+30
        %v4595 = vsel %vm4568, %v4513, -1e+30
        %v4596 = vsel %vm4568, %v4514, -1e+30
        %v4597 = vsel %vm4568, %v4515, -1e+30
        %v4598 = vsel %vm4569, %v4516, -1e+30
        %v4599 = vsel %vm4569, %v4517, -1e+30
        %v4600 = vsel %vm4569, %v4518, -1e+30
        %v4601 = vsel %vm4569, %v4519, -1e+30
        %vm4602 = vcmask 261120
        %v4603 = vsel %vm4602, %v4570, -inf
        %4604 = vmax.xlane.f32.xlu0 %v4603
        %v4605 = vpop.xlane.xlu0 %4604
        %v4606 = vsel %vm4602, %v4571, -inf
        %4607 = vmax.xlane.f32.xlu0 %v4606
        %v4608 = vpop.xlane.xlu0 %4607
        %v4609 = vsel %vm4602, %v4572, -inf
        %4610 = vmax.xlane.f32.xlu0 %v4609
        %v4611 = vpop.xlane.xlu0 %4610
        %v4612 = vsel %vm4602, %v4573, -inf
        %4613 = vmax.xlane.f32.xlu0 %v4612
        %v4614 = vpop.xlane.xlu0 %4613
        %v4615 = vsel %vm4602, %v4574, -inf
        %4616 = vmax.xlane.f32.xlu0 %v4615
        %v4617 = vpop.xlane.xlu0 %4616
        %v4618 = vsel %vm4602, %v4575, -inf
        %4619 = vmax.xlane.f32.xlu0 %v4618
        %v4620 = vpop.xlane.xlu0 %4619
        %v4621 = vsel %vm4602, %v4576, -inf
        %4622 = vmax.xlane.f32.xlu0 %v4621
        %v4623 = vpop.xlane.xlu0 %4622
        %v4624 = vsel %vm4602, %v4577, -inf
        %4625 = vmax.xlane.f32.xlu0 %v4624
        %v4626 = vpop.xlane.xlu0 %4625
        %v4627 = vsel %vm4602, %v4578, -inf
        %4628 = vmax.xlane.f32.xlu0 %v4627
        %v4629 = vpop.xlane.xlu0 %4628
        %v4630 = vsel %vm4602, %v4579, -inf
        %4631 = vmax.xlane.f32.xlu0 %v4630
        %v4632 = vpop.xlane.xlu0 %4631
        %v4633 = vsel %vm4602, %v4580, -inf
        %4634 = vmax.xlane.f32.xlu0 %v4633
        %v4635 = vpop.xlane.xlu0 %4634
        %v4636 = vsel %vm4602, %v4581, -inf
        %4637 = vmax.xlane.f32.xlu0 %v4636
        %v4638 = vpop.xlane.xlu0 %4637
        %v4639 = vsel %vm4602, %v4582, -inf
        %4640 = vmax.xlane.f32.xlu0 %v4639
        %v4641 = vpop.xlane.xlu0 %4640
        %v4642 = vsel %vm4602, %v4583, -inf
        %4643 = vmax.xlane.f32.xlu0 %v4642
        %v4644 = vpop.xlane.xlu0 %4643
        %v4645 = vsel %vm4602, %v4584, -inf
        %4646 = vmax.xlane.f32.xlu0 %v4645
        %v4647 = vpop.xlane.xlu0 %4646
        %v4648 = vsel %vm4602, %v4585, -inf
        %4649 = vmax.xlane.f32.xlu0 %v4648
        %v4650 = vpop.xlane.xlu0 %4649
        %v4651 = vsel %vm4602, %v4586, -inf
        %4652 = vmax.xlane.f32.xlu0 %v4651
        %v4653 = vpop.xlane.xlu0 %4652
        %v4654 = vsel %vm4602, %v4587, -inf
        %4655 = vmax.xlane.f32.xlu0 %v4654
        %v4656 = vpop.xlane.xlu0 %4655
        %v4657 = vsel %vm4602, %v4588, -inf
        %4658 = vmax.xlane.f32.xlu0 %v4657
        %v4659 = vpop.xlane.xlu0 %4658
        %v4660 = vsel %vm4602, %v4589, -inf
        %4661 = vmax.xlane.f32.xlu0 %v4660
        %v4662 = vpop.xlane.xlu0 %4661
        %v4663 = vsel %vm4602, %v4590, -inf
        %4664 = vmax.xlane.f32.xlu0 %v4663
        %v4665 = vpop.xlane.xlu0 %4664
        %v4666 = vsel %vm4602, %v4591, -inf
        %4667 = vmax.xlane.f32.xlu0 %v4666
        %v4668 = vpop.xlane.xlu0 %4667
        %v4669 = vsel %vm4602, %v4592, -inf
        %4670 = vmax.xlane.f32.xlu0 %v4669
        %v4671 = vpop.xlane.xlu0 %4670
        %v4672 = vsel %vm4602, %v4593, -inf
        %4673 = vmax.xlane.f32.xlu0 %v4672
        %v4674 = vpop.xlane.xlu0 %4673
        %v4675 = vsel %vm4602, %v4594, -inf
        %4676 = vmax.xlane.f32.xlu0 %v4675
        %v4677 = vpop.xlane.xlu0 %4676
        %v4678 = vsel %vm4602, %v4595, -inf
        %4679 = vmax.xlane.f32.xlu0 %v4678
        %v4680 = vpop.xlane.xlu0 %4679
        %v4681 = vsel %vm4602, %v4596, -inf
        %4682 = vmax.xlane.f32.xlu0 %v4681
        %v4683 = vpop.xlane.xlu0 %4682
        %v4684 = vsel %vm4602, %v4597, -inf
        %4685 = vmax.xlane.f32.xlu0 %v4684
        %v4686 = vpop.xlane.xlu0 %4685
        %v4687 = vsel %vm4602, %v4598, -inf
        %4688 = vmax.xlane.f32.xlu0 %v4687
        %v4689 = vpop.xlane.xlu0 %4688
        %v4690 = vsel %vm4602, %v4599, -inf
        %4691 = vmax.xlane.f32.xlu0 %v4690
        %v4692 = vpop.xlane.xlu0 %4691
        %v4693 = vsel %vm4602, %v4600, -inf
        %4694 = vmax.xlane.f32.xlu0 %v4693
        %v4695 = vpop.xlane.xlu0 %4694
        %v4696 = vsel %vm4602, %v4601, -inf
        %4697 = vmax.xlane.f32.xlu0 %v4696
        %v4698 = vpop.xlane.xlu0 %4697
        %v4699 = vsub.f32 %v4570, %v4605
        %v4700 = vsub.f32 %v4571, %v4608
        %v4701 = vsub.f32 %v4572, %v4611
        %v4702 = vsub.f32 %v4573, %v4614
        %v4703 = vsub.f32 %v4574, %v4617
        %v4704 = vsub.f32 %v4575, %v4620
        %v4705 = vsub.f32 %v4576, %v4623
        %v4706 = vsub.f32 %v4577, %v4626
        %v4707 = vsub.f32 %v4578, %v4629
        %v4708 = vsub.f32 %v4579, %v4632
        %v4709 = vsub.f32 %v4580, %v4635
        %v4710 = vsub.f32 %v4581, %v4638
        %v4711 = vsub.f32 %v4582, %v4641
        %v4712 = vsub.f32 %v4583, %v4644
        %v4713 = vsub.f32 %v4584, %v4647
        %v4714 = vsub.f32 %v4585, %v4650
        %v4715 = vsub.f32 %v4586, %v4653
        %v4716 = vsub.f32 %v4587, %v4656
        %v4717 = vsub.f32 %v4588, %v4659
        %v4718 = vsub.f32 %v4589, %v4662
        %v4719 = vsub.f32 %v4590, %v4665
        %v4720 = vsub.f32 %v4591, %v4668
        %v4721 = vsub.f32 %v4592, %v4671
        %v4722 = vsub.f32 %v4593, %v4674
        %v4723 = vsub.f32 %v4594, %v4677
        %v4724 = vsub.f32 %v4595, %v4680
        %v4725 = vsub.f32 %v4596, %v4683
        %v4726 = vsub.f32 %v4597, %v4686
        %v4727 = vsub.f32 %v4598, %v4689
        %v4728 = vsub.f32 %v4599, %v4692
        %v4729 = vsub.f32 %v4600, %v4695
        %v4730 = vsub.f32 %v4601, %v4698
        %v4731 = vmul.f32 %v4699, 1.442695
        %v4732 = vpow.pop %v4731
        %v4733 = vmul.f32 %v4700, 1.442695
        %v4734 = vpow.pop %v4733
        %v4735 = vmul.f32 %v4701, 1.442695
        %v4736 = vpow.pop %v4735
        %v4737 = vmul.f32 %v4702, 1.442695
        %v4738 = vpow.pop %v4737
        %v4739 = vmul.f32 %v4703, 1.442695
        %v4740 = vpow.pop %v4739
        %v4741 = vmul.f32 %v4704, 1.442695
        %v4742 = vpow.pop %v4741
        %v4743 = vmul.f32 %v4705, 1.442695
        %v4744 = vpow.pop %v4743
        %v4745 = vmul.f32 %v4706, 1.442695
        %v4746 = vpow.pop %v4745
        %v4747 = vmul.f32 %v4707, 1.442695
        %v4748 = vpow.pop %v4747
        %v4749 = vmul.f32 %v4708, 1.442695
        %v4750 = vpow.pop %v4749
        %v4751 = vmul.f32 %v4709, 1.442695
        %v4752 = vpow.pop %v4751
        %v4753 = vmul.f32 %v4710, 1.442695
        %v4754 = vpow.pop %v4753
        %v4755 = vmul.f32 %v4711, 1.442695
        %v4756 = vpow.pop %v4755
        %v4757 = vmul.f32 %v4712, 1.442695
        %v4758 = vpow.pop %v4757
        %v4759 = vmul.f32 %v4713, 1.442695
        %v4760 = vpow.pop %v4759
        %v4761 = vmul.f32 %v4714, 1.442695
        %v4762 = vpow.pop %v4761
        %v4763 = vmul.f32 %v4715, 1.442695
        %v4764 = vpow.pop %v4763
        %v4765 = vmul.f32 %v4716, 1.442695
        %v4766 = vpow.pop %v4765
        %v4767 = vmul.f32 %v4717, 1.442695
        %v4768 = vpow.pop %v4767
        %v4769 = vmul.f32 %v4718, 1.442695
        %v4770 = vpow.pop %v4769
        %v4771 = vmul.f32 %v4719, 1.442695
        %v4772 = vpow.pop %v4771
        %v4773 = vmul.f32 %v4720, 1.442695
        %v4774 = vpow.pop %v4773
        %v4775 = vmul.f32 %v4721, 1.442695
        %v4776 = vpow.pop %v4775
        %v4777 = vmul.f32 %v4722, 1.442695
        %v4778 = vpow.pop %v4777
        %v4779 = vmul.f32 %v4723, 1.442695
        %v4780 = vpow.pop %v4779
        %v4781 = vmul.f32 %v4724, 1.442695
        %v4782 = vpow.pop %v4781
        %v4783 = vmul.f32 %v4725, 1.442695
        %v4784 = vpow.pop %v4783
        %v4785 = vmul.f32 %v4726, 1.442695
        %v4786 = vpow.pop %v4785
        %v4787 = vmul.f32 %v4727, 1.442695
        %v4788 = vpow.pop %v4787
        %v4789 = vmul.f32 %v4728, 1.442695
        %v4790 = vpow.pop %v4789
        %v4791 = vmul.f32 %v4729, 1.442695
        %v4792 = vpow.pop %v4791
        %v4793 = vmul.f32 %v4730, 1.442695
        %v4794 = vpow.pop %v4793
        %v4795 = vsel %vm4602, %v4732, 0.0
        %4796 = vadd.xlane.f32.xlu0 %v4795
        %v4797 = vpop.xlane.xlu0 %4796
        %v4798 = vsel %vm4602, %v4734, 0.0
        %4799 = vadd.xlane.f32.xlu0 %v4798
        %v4800 = vpop.xlane.xlu0 %4799
        %v4801 = vsel %vm4602, %v4736, 0.0
        %4802 = vadd.xlane.f32.xlu0 %v4801
        %v4803 = vpop.xlane.xlu0 %4802
        %v4804 = vsel %vm4602, %v4738, 0.0
        %4805 = vadd.xlane.f32.xlu0 %v4804
        %v4806 = vpop.xlane.xlu0 %4805
        %v4807 = vsel %vm4602, %v4740, 0.0
        %4808 = vadd.xlane.f32.xlu0 %v4807
        %v4809 = vpop.xlane.xlu0 %4808
        %v4810 = vsel %vm4602, %v4742, 0.0
        %4811 = vadd.xlane.f32.xlu0 %v4810
        %v4812 = vpop.xlane.xlu0 %4811
        %v4813 = vsel %vm4602, %v4744, 0.0
        %4814 = vadd.xlane.f32.xlu0 %v4813
        %v4815 = vpop.xlane.xlu0 %4814
        %v4816 = vsel %vm4602, %v4746, 0.0
        %4817 = vadd.xlane.f32.xlu0 %v4816
        %v4818 = vpop.xlane.xlu0 %4817
        %v4819 = vsel %vm4602, %v4748, 0.0
        %4820 = vadd.xlane.f32.xlu0 %v4819
        %v4821 = vpop.xlane.xlu0 %4820
        %v4822 = vsel %vm4602, %v4750, 0.0
        %4823 = vadd.xlane.f32.xlu0 %v4822
        %v4824 = vpop.xlane.xlu0 %4823
        %v4825 = vsel %vm4602, %v4752, 0.0
        %4826 = vadd.xlane.f32.xlu0 %v4825
        %v4827 = vpop.xlane.xlu0 %4826
        %v4828 = vsel %vm4602, %v4754, 0.0
        %4829 = vadd.xlane.f32.xlu0 %v4828
        %v4830 = vpop.xlane.xlu0 %4829
        %v4831 = vsel %vm4602, %v4756, 0.0
        %4832 = vadd.xlane.f32.xlu0 %v4831
        %v4833 = vpop.xlane.xlu0 %4832
        %v4834 = vsel %vm4602, %v4758, 0.0
        %4835 = vadd.xlane.f32.xlu0 %v4834
        %v4836 = vpop.xlane.xlu0 %4835
        %v4837 = vsel %vm4602, %v4760, 0.0
        %4838 = vadd.xlane.f32.xlu0 %v4837
        %v4839 = vpop.xlane.xlu0 %4838
        %v4840 = vsel %vm4602, %v4762, 0.0
        %4841 = vadd.xlane.f32.xlu0 %v4840
        %v4842 = vpop.xlane.xlu0 %4841
        %v4843 = vsel %vm4602, %v4764, 0.0
        %4844 = vadd.xlane.f32.xlu0 %v4843
        %v4845 = vpop.xlane.xlu0 %4844
        %v4846 = vsel %vm4602, %v4766, 0.0
        %4847 = vadd.xlane.f32.xlu0 %v4846
        %v4848 = vpop.xlane.xlu0 %4847
        %v4849 = vsel %vm4602, %v4768, 0.0
        %4850 = vadd.xlane.f32.xlu0 %v4849
        %v4851 = vpop.xlane.xlu0 %4850
        %v4852 = vsel %vm4602, %v4770, 0.0
        %4853 = vadd.xlane.f32.xlu0 %v4852
        %v4854 = vpop.xlane.xlu0 %4853
        %v4855 = vsel %vm4602, %v4772, 0.0
        %4856 = vadd.xlane.f32.xlu0 %v4855
        %v4857 = vpop.xlane.xlu0 %4856
        %v4858 = vsel %vm4602, %v4774, 0.0
        %4859 = vadd.xlane.f32.xlu0 %v4858
        %v4860 = vpop.xlane.xlu0 %4859
        %v4861 = vsel %vm4602, %v4776, 0.0
        %4862 = vadd.xlane.f32.xlu0 %v4861
        %v4863 = vpop.xlane.xlu0 %4862
        %v4864 = vsel %vm4602, %v4778, 0.0
        %4865 = vadd.xlane.f32.xlu0 %v4864
        %v4866 = vpop.xlane.xlu0 %4865
        %v4867 = vsel %vm4602, %v4780, 0.0
        %4868 = vadd.xlane.f32.xlu0 %v4867
        %v4869 = vpop.xlane.xlu0 %4868
        %v4870 = vsel %vm4602, %v4782, 0.0
        %4871 = vadd.xlane.f32.xlu0 %v4870
        %v4872 = vpop.xlane.xlu0 %4871
        %v4873 = vsel %vm4602, %v4784, 0.0
        %4874 = vadd.xlane.f32.xlu0 %v4873
        %v4875 = vpop.xlane.xlu0 %4874
        %v4876 = vsel %vm4602, %v4786, 0.0
        %4877 = vadd.xlane.f32.xlu0 %v4876
        %v4878 = vpop.xlane.xlu0 %4877
        %v4879 = vsel %vm4602, %v4788, 0.0
        %4880 = vadd.xlane.f32.xlu0 %v4879
        %v4881 = vpop.xlane.xlu0 %4880
        %v4882 = vsel %vm4602, %v4790, 0.0
        %4883 = vadd.xlane.f32.xlu0 %v4882
        %v4884 = vpop.xlane.xlu0 %4883
        %v4885 = vsel %vm4602, %v4792, 0.0
        %4886 = vadd.xlane.f32.xlu0 %v4885
        %v4887 = vpop.xlane.xlu0 %4886
        %v4888 = vsel %vm4602, %v4794, 0.0
        %4889 = vadd.xlane.f32.xlu0 %v4888
        %v4890 = vpop.xlane.xlu0 %4889
        %v4891 = vrcp.pop %v4797
        %v4892 = vrcp.pop %v4800
        %v4893 = vrcp.pop %v4803
        %v4894 = vrcp.pop %v4806
        %v4895 = vrcp.pop %v4809
        %v4896 = vrcp.pop %v4812
        %v4897 = vrcp.pop %v4815
        %v4898 = vrcp.pop %v4818
        %v4899 = vrcp.pop %v4821
        %v4900 = vrcp.pop %v4824
        %v4901 = vrcp.pop %v4827
        %v4902 = vrcp.pop %v4830
        %v4903 = vrcp.pop %v4833
        %v4904 = vrcp.pop %v4836
        %v4905 = vrcp.pop %v4839
        %v4906 = vrcp.pop %v4842
        %v4907 = vrcp.pop %v4845
        %v4908 = vrcp.pop %v4848
        %v4909 = vrcp.pop %v4851
        %v4910 = vrcp.pop %v4854
        %v4911 = vrcp.pop %v4857
        %v4912 = vrcp.pop %v4860
        %v4913 = vrcp.pop %v4863
        %v4914 = vrcp.pop %v4866
        %v4915 = vrcp.pop %v4869
        %v4916 = vrcp.pop %v4872
        %v4917 = vrcp.pop %v4875
        %v4918 = vrcp.pop %v4878
        %v4919 = vrcp.pop %v4881
        %v4920 = vrcp.pop %v4884
        %v4921 = vrcp.pop %v4887
        %v4922 = vrcp.pop %v4890
        %v4923 = vmul.f32 %v4732, %v4891
        %v4924 = vmul.f32 %v4734, %v4892
        %v4925 = vmul.f32 %v4736, %v4893
        %v4926 = vmul.f32 %v4738, %v4894
        %v4927 = vmul.f32 %v4740, %v4895
        %v4928 = vmul.f32 %v4742, %v4896
        %v4929 = vmul.f32 %v4744, %v4897
        %v4930 = vmul.f32 %v4746, %v4898
        %v4931 = vmul.f32 %v4748, %v4899
        %v4932 = vmul.f32 %v4750, %v4900
        %v4933 = vmul.f32 %v4752, %v4901
        %v4934 = vmul.f32 %v4754, %v4902
        %v4935 = vmul.f32 %v4756, %v4903
        %v4936 = vmul.f32 %v4758, %v4904
        %v4937 = vmul.f32 %v4760, %v4905
        %v4938 = vmul.f32 %v4762, %v4906
        %v4939 = vmul.f32 %v4764, %v4907
        %v4940 = vmul.f32 %v4766, %v4908
        %v4941 = vmul.f32 %v4768, %v4909
        %v4942 = vmul.f32 %v4770, %v4910
        %v4943 = vmul.f32 %v4772, %v4911
        %v4944 = vmul.f32 %v4774, %v4912
        %v4945 = vmul.f32 %v4776, %v4913
        %v4946 = vmul.f32 %v4778, %v4914
        %v4947 = vmul.f32 %v4780, %v4915
        %v4948 = vmul.f32 %v4782, %v4916
        %v4949 = vmul.f32 %v4784, %v4917
        %v4950 = vmul.f32 %v4786, %v4918
        %v4951 = vmul.f32 %v4788, %v4919
        %v4952 = vmul.f32 %v4790, %v4920
        %v4953 = vmul.f32 %v4792, %v4921
        %v4954 = vmul.f32 %v4794, %v4922
        %v4955 = vpack.c.bf16 %v4924, %v4923
        %v4956 = vpack.c.bf16 %v4926, %v4925
        %v4957 = vpack.c.bf16 %v4928, %v4927
        %v4958 = vpack.c.bf16 %v4930, %v4929
        %v4959 = vpack.c.bf16 %v4932, %v4931
        %v4960 = vpack.c.bf16 %v4934, %v4933
        %v4961 = vpack.c.bf16 %v4936, %v4935
        %v4962 = vpack.c.bf16 %v4938, %v4937
        %v4963 = vpack.c.bf16 %v4940, %v4939
        %v4964 = vpack.c.bf16 %v4942, %v4941
        %v4965 = vpack.c.bf16 %v4944, %v4943
        %v4966 = vpack.c.bf16 %v4946, %v4945
        %v4967 = vpack.c.bf16 %v4948, %v4947
        %v4968 = vpack.c.bf16 %v4950, %v4949
        %v4969 = vpack.c.bf16 %v4952, %v4951
        %v4970 = vpack.c.bf16 %v4954, %v4953
        %v4972 = vsel %vm4602, %v4955, 0
        %v4975 = vsel %vm4602, %v4956, 0
        %4977 = vmatprep.subr.bf16.mxu0 0
        %4978 = vmatpush1.bf16.msra.mxu0 0
        %4979 = vmatprep.subr.bf16.mxu0 0
        %4980 = vmatpush1.bf16.msra.mxu0 0
        %4981 = vmatprep.subr.bf16.mxu0 0
        %4982 = vmatpush1.bf16.msra.mxu0 0
        %4983 = vmatprep.subr.bf16.mxu0 0
        %4984 = vmatpush1.bf16.msra.mxu0 0
        %4985 = vmatprep.subr.bf16.mxu0 0
        %4986 = vmatpush1.bf16.msra.mxu0 0
        %4987 = vmatprep.subr.bf16.mxu0 0
        %4988 = vmatpush1.bf16.msra.mxu0 0
        %4989 = vmatprep.subr.bf16.mxu0 0
        %4990 = vmatpush1.bf16.msra.mxu0 %v3384
        %4991 = vmatprep.subr.bf16.mxu0 0
        %4992 = vmatpush1.bf16.msra.mxu0 %v3383
        %4993 = vmatprep.subr.bf16.mxu0 0
        %4994 = vmatpush2.bf16.msra.mxu0 0
        %4995 = vmatprep.subr.bf16.mxu0 0
        %4996 = vmatpush2.bf16.msra.mxu0 0
        %4997 = vmatprep.subr.bf16.mxu0 0
        %4998 = vmatpush2.bf16.msra.mxu0 0
        %4999 = vmatprep.subr.bf16.mxu0 0
        %5000 = vmatpush2.bf16.msra.mxu0 0
        %5001 = vmatprep.subr.bf16.mxu0 0
        %5002 = vmatpush2.bf16.msra.mxu0 0
        %5003 = vmatprep.subr.bf16.mxu0 0
        %5004 = vmatpush2.bf16.msra.mxu0 0
        %5005 = vmatprep.subr.bf16.mxu0 0
        %5006 = vmatpush2.bf16.msra.mxu0 0
        %5007 = vmatprep.subr.bf16.mxu0 0
        %5008 = vmatpush2.bf16.msra.mxu0 0
        %5009 = vmatprep.mubr.bf16.mxu0 0
        %5010 = vmatmul.mubr.bf16.gmra.mxu0 %v4972
        %v5011 = vpop.f32.mrf.mxu0
        %v5012 = vadd.f32 0.0, %v5011
        %v5013 = vpop.f32.mrf.mxu0
        %v5014 = vpop.f32.mrf.mxu0
        %v5015 = vadd.f32 0.0, %v5014
        %v5016 = vpop.f32.mrf.mxu0
        %5017 = vmatprep.mubr.bf16.mxu0 0
        %5018 = vmatmul.mubr.bf16.gmra.mxu0 %v4975
        %v5019 = vpop.f32.mrf.mxu0
        %v5020 = vadd.f32 0.0, %v5019
        %v5021 = vpop.f32.mrf.mxu0
        %v5022 = vpop.f32.mrf.mxu0
        %v5023 = vadd.f32 0.0, %v5022
        %v5024 = vpop.f32.mrf.mxu0
        %5025 = vdwg.mxu0
        %v5027 = vsel %vm4602, %v4957, 0
        %v5030 = vsel %vm4602, %v4958, 0
        %5032 = vmatprep.subr.bf16.mxu0 0
        %5033 = vmatpush1.bf16.msra.mxu0 0
        %5034 = vmatprep.subr.bf16.mxu0 0
        %5035 = vmatpush1.bf16.msra.mxu0 0
        %5036 = vmatprep.subr.bf16.mxu0 0
        %5037 = vmatpush1.bf16.msra.mxu0 0
        %5038 = vmatprep.subr.bf16.mxu0 0
        %5039 = vmatpush1.bf16.msra.mxu0 0
        %5040 = vmatprep.subr.bf16.mxu0 0
        %5041 = vmatpush1.bf16.msra.mxu0 0
        %5042 = vmatprep.subr.bf16.mxu0 0
        %5043 = vmatpush1.bf16.msra.mxu0 0
        %5044 = vmatprep.subr.bf16.mxu0 0
        %5045 = vmatpush1.bf16.msra.mxu0 %v3386
        %5046 = vmatprep.subr.bf16.mxu0 0
        %5047 = vmatpush1.bf16.msra.mxu0 %v3385
        %5048 = vmatprep.subr.bf16.mxu0 0
        %5049 = vmatpush2.bf16.msra.mxu0 0
        %5050 = vmatprep.subr.bf16.mxu0 0
        %5051 = vmatpush2.bf16.msra.mxu0 0
        %5052 = vmatprep.subr.bf16.mxu0 0
        %5053 = vmatpush2.bf16.msra.mxu0 0
        %5054 = vmatprep.subr.bf16.mxu0 0
        %5055 = vmatpush2.bf16.msra.mxu0 0
        %5056 = vmatprep.subr.bf16.mxu0 0
        %5057 = vmatpush2.bf16.msra.mxu0 0
        %5058 = vmatprep.subr.bf16.mxu0 0
        %5059 = vmatpush2.bf16.msra.mxu0 0
        %5060 = vmatprep.subr.bf16.mxu0 0
        %5061 = vmatpush2.bf16.msra.mxu0 0
        %5062 = vmatprep.subr.bf16.mxu0 0
        %5063 = vmatpush2.bf16.msra.mxu0 0
        %5064 = vmatprep.mubr.bf16.mxu0 0
        %5065 = vmatmul.mubr.bf16.gmra.mxu0 %v5027
        %v5066 = vpop.f32.mrf.mxu0
        %v5067 = vadd.f32 0.0, %v5066
        %v5068 = vpop.f32.mrf.mxu0
        %v5069 = vpop.f32.mrf.mxu0
        %v5070 = vadd.f32 0.0, %v5069
        %v5071 = vpop.f32.mrf.mxu0
        %5072 = vmatprep.mubr.bf16.mxu0 0
        %5073 = vmatmul.mubr.bf16.gmra.mxu0 %v5030
        %v5074 = vpop.f32.mrf.mxu0
        %v5075 = vadd.f32 0.0, %v5074
        %v5076 = vpop.f32.mrf.mxu0
        %v5077 = vpop.f32.mrf.mxu0
        %v5078 = vadd.f32 0.0, %v5077
        %v5079 = vpop.f32.mrf.mxu0
        %5080 = vdwg.mxu0
        %v5082 = vsel %vm4602, %v4959, 0
        %v5085 = vsel %vm4602, %v4960, 0
        %5087 = vmatprep.subr.bf16.mxu0 0
        %5088 = vmatpush1.bf16.msra.mxu0 0
        %5089 = vmatprep.subr.bf16.mxu0 0
        %5090 = vmatpush1.bf16.msra.mxu0 0
        %5091 = vmatprep.subr.bf16.mxu0 0
        %5092 = vmatpush1.bf16.msra.mxu0 0
        %5093 = vmatprep.subr.bf16.mxu0 0
        %5094 = vmatpush1.bf16.msra.mxu0 0
        %5095 = vmatprep.subr.bf16.mxu0 0
        %5096 = vmatpush1.bf16.msra.mxu0 0
        %5097 = vmatprep.subr.bf16.mxu0 0
        %5098 = vmatpush1.bf16.msra.mxu0 0
        %5099 = vmatprep.subr.bf16.mxu0 0
        %5100 = vmatpush1.bf16.msra.mxu0 %v3388
        %5101 = vmatprep.subr.bf16.mxu0 0
        %5102 = vmatpush1.bf16.msra.mxu0 %v3387
        %5103 = vmatprep.subr.bf16.mxu0 0
        %5104 = vmatpush2.bf16.msra.mxu0 0
        %5105 = vmatprep.subr.bf16.mxu0 0
        %5106 = vmatpush2.bf16.msra.mxu0 0
        %5107 = vmatprep.subr.bf16.mxu0 0
        %5108 = vmatpush2.bf16.msra.mxu0 0
        %5109 = vmatprep.subr.bf16.mxu0 0
        %5110 = vmatpush2.bf16.msra.mxu0 0
        %5111 = vmatprep.subr.bf16.mxu0 0
        %5112 = vmatpush2.bf16.msra.mxu0 0
        %5113 = vmatprep.subr.bf16.mxu0 0
        %5114 = vmatpush2.bf16.msra.mxu0 0
        %5115 = vmatprep.subr.bf16.mxu0 0
        %5116 = vmatpush2.bf16.msra.mxu0 0
        %5117 = vmatprep.subr.bf16.mxu0 0
        %5118 = vmatpush2.bf16.msra.mxu0 0
        %5119 = vmatprep.mubr.bf16.mxu0 0
        %5120 = vmatmul.mubr.bf16.gmra.mxu0 %v5082
        %v5121 = vpop.f32.mrf.mxu0
        %v5122 = vadd.f32 0.0, %v5121
        %v5123 = vpop.f32.mrf.mxu0
        %v5124 = vpop.f32.mrf.mxu0
        %v5125 = vadd.f32 0.0, %v5124
        %v5126 = vpop.f32.mrf.mxu0
        %5127 = vmatprep.mubr.bf16.mxu0 0
        %5128 = vmatmul.mubr.bf16.gmra.mxu0 %v5085
        %v5129 = vpop.f32.mrf.mxu0
        %v5130 = vadd.f32 0.0, %v5129
        %v5131 = vpop.f32.mrf.mxu0
        %v5132 = vpop.f32.mrf.mxu0
        %v5133 = vadd.f32 0.0, %v5132
        %v5134 = vpop.f32.mrf.mxu0
        %5135 = vdwg.mxu0
        %v5137 = vsel %vm4602, %v4961, 0
        %v5140 = vsel %vm4602, %v4962, 0
        %5142 = vmatprep.subr.bf16.mxu0 0
        %5143 = vmatpush1.bf16.msra.mxu0 0
        %5144 = vmatprep.subr.bf16.mxu0 0
        %5145 = vmatpush1.bf16.msra.mxu0 0
        %5146 = vmatprep.subr.bf16.mxu0 0
        %5147 = vmatpush1.bf16.msra.mxu0 0
        %5148 = vmatprep.subr.bf16.mxu0 0
        %5149 = vmatpush1.bf16.msra.mxu0 0
        %5150 = vmatprep.subr.bf16.mxu0 0
        %5151 = vmatpush1.bf16.msra.mxu0 0
        %5152 = vmatprep.subr.bf16.mxu0 0
        %5153 = vmatpush1.bf16.msra.mxu0 0
        %5154 = vmatprep.subr.bf16.mxu0 0
        %5155 = vmatpush1.bf16.msra.mxu0 %v3390
        %5156 = vmatprep.subr.bf16.mxu0 0
        %5157 = vmatpush1.bf16.msra.mxu0 %v3389
        %5158 = vmatprep.subr.bf16.mxu0 0
        %5159 = vmatpush2.bf16.msra.mxu0 0
        %5160 = vmatprep.subr.bf16.mxu0 0
        %5161 = vmatpush2.bf16.msra.mxu0 0
        %5162 = vmatprep.subr.bf16.mxu0 0
        %5163 = vmatpush2.bf16.msra.mxu0 0
        %5164 = vmatprep.subr.bf16.mxu0 0
        %5165 = vmatpush2.bf16.msra.mxu0 0
        %5166 = vmatprep.subr.bf16.mxu0 0
        %5167 = vmatpush2.bf16.msra.mxu0 0
        %5168 = vmatprep.subr.bf16.mxu0 0
        %5169 = vmatpush2.bf16.msra.mxu0 0
        %5170 = vmatprep.subr.bf16.mxu0 0
        %5171 = vmatpush2.bf16.msra.mxu0 0
        %5172 = vmatprep.subr.bf16.mxu0 0
        %5173 = vmatpush2.bf16.msra.mxu0 0
        %5174 = vmatprep.mubr.bf16.mxu0 0
        %5175 = vmatmul.mubr.bf16.gmra.mxu0 %v5137
        %v5176 = vpop.f32.mrf.mxu0
        %v5177 = vadd.f32 0.0, %v5176
        %v5178 = vpop.f32.mrf.mxu0
        %v5179 = vpop.f32.mrf.mxu0
        %v5180 = vadd.f32 0.0, %v5179
        %v5181 = vpop.f32.mrf.mxu0
        %5182 = vmatprep.mubr.bf16.mxu0 0
        %5183 = vmatmul.mubr.bf16.gmra.mxu0 %v5140
        %v5184 = vpop.f32.mrf.mxu0
        %v5185 = vadd.f32 0.0, %v5184
        %v5186 = vpop.f32.mrf.mxu0
        %v5187 = vpop.f32.mrf.mxu0
        %v5188 = vadd.f32 0.0, %v5187
        %v5189 = vpop.f32.mrf.mxu0
        %5190 = vdwg.mxu0
        %v5192 = vsel %vm4602, %v4963, 0
        %v5195 = vsel %vm4602, %v4964, 0
        %5197 = vmatprep.subr.bf16.mxu0 0
        %5198 = vmatpush1.bf16.msra.mxu0 0
        %5199 = vmatprep.subr.bf16.mxu0 0
        %5200 = vmatpush1.bf16.msra.mxu0 0
        %5201 = vmatprep.subr.bf16.mxu0 0
        %5202 = vmatpush1.bf16.msra.mxu0 0
        %5203 = vmatprep.subr.bf16.mxu0 0
        %5204 = vmatpush1.bf16.msra.mxu0 0
        %5205 = vmatprep.subr.bf16.mxu0 0
        %5206 = vmatpush1.bf16.msra.mxu0 0
        %5207 = vmatprep.subr.bf16.mxu0 0
        %5208 = vmatpush1.bf16.msra.mxu0 0
        %5209 = vmatprep.subr.bf16.mxu0 0
        %5210 = vmatpush1.bf16.msra.mxu0 %v3392
        %5211 = vmatprep.subr.bf16.mxu0 0
        %5212 = vmatpush1.bf16.msra.mxu0 %v3391
        %5213 = vmatprep.subr.bf16.mxu0 0
        %5214 = vmatpush2.bf16.msra.mxu0 0
        %5215 = vmatprep.subr.bf16.mxu0 0
        %5216 = vmatpush2.bf16.msra.mxu0 0
        %5217 = vmatprep.subr.bf16.mxu0 0
        %5218 = vmatpush2.bf16.msra.mxu0 0
        %5219 = vmatprep.subr.bf16.mxu0 0
        %5220 = vmatpush2.bf16.msra.mxu0 0
        %5221 = vmatprep.subr.bf16.mxu0 0
        %5222 = vmatpush2.bf16.msra.mxu0 0
        %5223 = vmatprep.subr.bf16.mxu0 0
        %5224 = vmatpush2.bf16.msra.mxu0 0
        %5225 = vmatprep.subr.bf16.mxu0 0
        %5226 = vmatpush2.bf16.msra.mxu0 0
        %5227 = vmatprep.subr.bf16.mxu0 0
        %5228 = vmatpush2.bf16.msra.mxu0 0
        %5229 = vmatprep.mubr.bf16.mxu0 0
        %5230 = vmatmul.mubr.bf16.gmra.mxu0 %v5192
        %v5231 = vpop.f32.mrf.mxu0
        %v5232 = vadd.f32 0.0, %v5231
        %v5233 = vpop.f32.mrf.mxu0
        %v5234 = vpop.f32.mrf.mxu0
        %v5235 = vadd.f32 0.0, %v5234
        %v5236 = vpop.f32.mrf.mxu0
        %5237 = vmatprep.mubr.bf16.mxu0 0
        %5238 = vmatmul.mubr.bf16.gmra.mxu0 %v5195
        %v5239 = vpop.f32.mrf.mxu0
        %v5240 = vadd.f32 0.0, %v5239
        %v5241 = vpop.f32.mrf.mxu0
        %v5242 = vpop.f32.mrf.mxu0
        %v5243 = vadd.f32 0.0, %v5242
        %v5244 = vpop.f32.mrf.mxu0
        %5245 = vdwg.mxu0
        %v5247 = vsel %vm4602, %v4965, 0
        %v5250 = vsel %vm4602, %v4966, 0
        %5252 = vmatprep.subr.bf16.mxu0 0
        %5253 = vmatpush1.bf16.msra.mxu0 0
        %5254 = vmatprep.subr.bf16.mxu0 0
        %5255 = vmatpush1.bf16.msra.mxu0 0
        %5256 = vmatprep.subr.bf16.mxu0 0
        %5257 = vmatpush1.bf16.msra.mxu0 0
        %5258 = vmatprep.subr.bf16.mxu0 0
        %5259 = vmatpush1.bf16.msra.mxu0 0
        %5260 = vmatprep.subr.bf16.mxu0 0
        %5261 = vmatpush1.bf16.msra.mxu0 0
        %5262 = vmatprep.subr.bf16.mxu0 0
        %5263 = vmatpush1.bf16.msra.mxu0 0
        %5264 = vmatprep.subr.bf16.mxu0 0
        %5265 = vmatpush1.bf16.msra.mxu0 %v3394
        %5266 = vmatprep.subr.bf16.mxu0 0
        %5267 = vmatpush1.bf16.msra.mxu0 %v3393
        %5268 = vmatprep.subr.bf16.mxu0 0
        %5269 = vmatpush2.bf16.msra.mxu0 0
        %5270 = vmatprep.subr.bf16.mxu0 0
        %5271 = vmatpush2.bf16.msra.mxu0 0
        %5272 = vmatprep.subr.bf16.mxu0 0
        %5273 = vmatpush2.bf16.msra.mxu0 0
        %5274 = vmatprep.subr.bf16.mxu0 0
        %5275 = vmatpush2.bf16.msra.mxu0 0
        %5276 = vmatprep.subr.bf16.mxu0 0
        %5277 = vmatpush2.bf16.msra.mxu0 0
        %5278 = vmatprep.subr.bf16.mxu0 0
        %5279 = vmatpush2.bf16.msra.mxu0 0
        %5280 = vmatprep.subr.bf16.mxu0 0
        %5281 = vmatpush2.bf16.msra.mxu0 0
        %5282 = vmatprep.subr.bf16.mxu0 0
        %5283 = vmatpush2.bf16.msra.mxu0 0
        %5284 = vmatprep.mubr.bf16.mxu0 0
        %5285 = vmatmul.mubr.bf16.gmra.mxu0 %v5247
        %v5286 = vpop.f32.mrf.mxu0
        %v5287 = vadd.f32 0.0, %v5286
        %v5288 = vpop.f32.mrf.mxu0
        %v5289 = vpop.f32.mrf.mxu0
        %v5290 = vadd.f32 0.0, %v5289
        %v5291 = vpop.f32.mrf.mxu0
        %5292 = vmatprep.mubr.bf16.mxu0 0
        %5293 = vmatmul.mubr.bf16.gmra.mxu0 %v5250
        %v5294 = vpop.f32.mrf.mxu0
        %v5295 = vadd.f32 0.0, %v5294
        %v5296 = vpop.f32.mrf.mxu0
        %v5297 = vpop.f32.mrf.mxu0
        %v5298 = vadd.f32 0.0, %v5297
        %v5299 = vpop.f32.mrf.mxu0
        %5300 = vdwg.mxu0
        %v5302 = vsel %vm4602, %v4967, 0
        %v5305 = vsel %vm4602, %v4968, 0
        %5307 = vmatprep.subr.bf16.mxu0 0
        %5308 = vmatpush1.bf16.msra.mxu0 0
        %5309 = vmatprep.subr.bf16.mxu0 0
        %5310 = vmatpush1.bf16.msra.mxu0 0
        %5311 = vmatprep.subr.bf16.mxu0 0
        %5312 = vmatpush1.bf16.msra.mxu0 0
        %5313 = vmatprep.subr.bf16.mxu0 0
        %5314 = vmatpush1.bf16.msra.mxu0 0
        %5315 = vmatprep.subr.bf16.mxu0 0
        %5316 = vmatpush1.bf16.msra.mxu0 0
        %5317 = vmatprep.subr.bf16.mxu0 0
        %5318 = vmatpush1.bf16.msra.mxu0 0
        %5319 = vmatprep.subr.bf16.mxu0 0
        %5320 = vmatpush1.bf16.msra.mxu0 %v3396
        %5321 = vmatprep.subr.bf16.mxu0 0
        %5322 = vmatpush1.bf16.msra.mxu0 %v3395
        %5323 = vmatprep.subr.bf16.mxu0 0
        %5324 = vmatpush2.bf16.msra.mxu0 0
        %5325 = vmatprep.subr.bf16.mxu0 0
        %5326 = vmatpush2.bf16.msra.mxu0 0
        %5327 = vmatprep.subr.bf16.mxu0 0
        %5328 = vmatpush2.bf16.msra.mxu0 0
        %5329 = vmatprep.subr.bf16.mxu0 0
        %5330 = vmatpush2.bf16.msra.mxu0 0
        %5331 = vmatprep.subr.bf16.mxu0 0
        %5332 = vmatpush2.bf16.msra.mxu0 0
        %5333 = vmatprep.subr.bf16.mxu0 0
        %5334 = vmatpush2.bf16.msra.mxu0 0
        %5335 = vmatprep.subr.bf16.mxu0 0
        %5336 = vmatpush2.bf16.msra.mxu0 0
        %5337 = vmatprep.subr.bf16.mxu0 0
        %5338 = vmatpush2.bf16.msra.mxu0 0
        %5339 = vmatprep.mubr.bf16.mxu0 0
        %5340 = vmatmul.mubr.bf16.gmra.mxu0 %v5302
        %v5341 = vpop.f32.mrf.mxu0
        %v5342 = vadd.f32 0.0, %v5341
        %v5343 = vpop.f32.mrf.mxu0
        %v5344 = vpop.f32.mrf.mxu0
        %v5345 = vadd.f32 0.0, %v5344
        %v5346 = vpop.f32.mrf.mxu0
        %5347 = vmatprep.mubr.bf16.mxu0 0
        %5348 = vmatmul.mubr.bf16.gmra.mxu0 %v5305
        %v5349 = vpop.f32.mrf.mxu0
        %v5350 = vadd.f32 0.0, %v5349
        %v5351 = vpop.f32.mrf.mxu0
        %v5352 = vpop.f32.mrf.mxu0
        %v5353 = vadd.f32 0.0, %v5352
        %v5354 = vpop.f32.mrf.mxu0
        %5355 = vdwg.mxu0
        %v5357 = vsel %vm4602, %v4969, 0
        %v5360 = vsel %vm4602, %v4970, 0
        %5362 = vmatprep.subr.bf16.mxu0 0
        %5363 = vmatpush1.bf16.msra.mxu0 0
        %5364 = vmatprep.subr.bf16.mxu0 0
        %5365 = vmatpush1.bf16.msra.mxu0 0
        %5366 = vmatprep.subr.bf16.mxu0 0
        %5367 = vmatpush1.bf16.msra.mxu0 0
        %5368 = vmatprep.subr.bf16.mxu0 0
        %5369 = vmatpush1.bf16.msra.mxu0 0
        %5370 = vmatprep.subr.bf16.mxu0 0
        %5371 = vmatpush1.bf16.msra.mxu0 0
        %5372 = vmatprep.subr.bf16.mxu0 0
        %5373 = vmatpush1.bf16.msra.mxu0 0
        %5374 = vmatprep.subr.bf16.mxu0 0
        %5375 = vmatpush1.bf16.msra.mxu0 %v3398
        %5376 = vmatprep.subr.bf16.mxu0 0
        %5377 = vmatpush1.bf16.msra.mxu0 %v3397
        %5378 = vmatprep.subr.bf16.mxu0 0
        %5379 = vmatpush2.bf16.msra.mxu0 0
        %5380 = vmatprep.subr.bf16.mxu0 0
        %5381 = vmatpush2.bf16.msra.mxu0 0
        %5382 = vmatprep.subr.bf16.mxu0 0
        %5383 = vmatpush2.bf16.msra.mxu0 0
        %5384 = vmatprep.subr.bf16.mxu0 0
        %5385 = vmatpush2.bf16.msra.mxu0 0
        %5386 = vmatprep.subr.bf16.mxu0 0
        %5387 = vmatpush2.bf16.msra.mxu0 0
        %5388 = vmatprep.subr.bf16.mxu0 0
        %5389 = vmatpush2.bf16.msra.mxu0 0
        %5390 = vmatprep.subr.bf16.mxu0 0
        %5391 = vmatpush2.bf16.msra.mxu0 0
        %5392 = vmatprep.subr.bf16.mxu0 0
        %5393 = vmatpush2.bf16.msra.mxu0 0
        %5394 = vmatprep.mubr.bf16.mxu0 0
        %5395 = vmatmul.mubr.bf16.gmra.mxu0 %v5357
        %v5396 = vpop.f32.mrf.mxu0
        %v5397 = vadd.f32 0.0, %v5396
        %v5398 = vpop.f32.mrf.mxu0
        %v5399 = vpop.f32.mrf.mxu0
        %v5400 = vadd.f32 0.0, %v5399
        %v5401 = vpop.f32.mrf.mxu0
        %5402 = vmatprep.mubr.bf16.mxu0 0
        %5403 = vmatmul.mubr.bf16.gmra.mxu0 %v5360
        %v5404 = vpop.f32.mrf.mxu0
        %v5405 = vadd.f32 0.0, %v5404
        %v5406 = vpop.f32.mrf.mxu0
        %v5407 = vpop.f32.mrf.mxu0
        %v5408 = vadd.f32 0.0, %v5407
        %v5409 = vpop.f32.mrf.mxu0
        %5410 = vdwg.mxu0
        %v5411 = vadd.f32 %v4048, %v5012
        %v5412 = vadd.f32 %v4049, %v5015
        %v5413 = vadd.f32 %v4050, %v5020
        %v5414 = vadd.f32 %v4051, %v5023
        %v5415 = vadd.f32 %v4052, %v5067
        %v5416 = vadd.f32 %v4053, %v5070
        %v5417 = vadd.f32 %v4054, %v5075
        %v5418 = vadd.f32 %v4055, %v5078
        %v5419 = vadd.f32 %v4056, %v5122
        %v5420 = vadd.f32 %v4057, %v5125
        %v5421 = vadd.f32 %v4058, %v5130
        %v5422 = vadd.f32 %v4059, %v5133
        %v5423 = vadd.f32 %v4060, %v5177
        %v5424 = vadd.f32 %v4061, %v5180
        %v5425 = vadd.f32 %v4062, %v5185
        %v5426 = vadd.f32 %v4063, %v5188
        %v5427 = vadd.f32 %v4064, %v5232
        %v5428 = vadd.f32 %v4065, %v5235
        %v5429 = vadd.f32 %v4066, %v5240
        %v5430 = vadd.f32 %v4067, %v5243
        %v5431 = vadd.f32 %v4068, %v5287
        %v5432 = vadd.f32 %v4069, %v5290
        %v5433 = vadd.f32 %v4070, %v5295
        %v5434 = vadd.f32 %v4071, %v5298
        %v5435 = vadd.f32 %v4072, %v5342
        %v5436 = vadd.f32 %v4073, %v5345
        %v5437 = vadd.f32 %v4074, %v5350
        %v5438 = vadd.f32 %v4075, %v5353
        %v5439 = vadd.f32 %v4076, %v5397
        %v5440 = vadd.f32 %v4077, %v5400
        %v5441 = vadd.f32 %v4078, %v5405
        %v5442 = vadd.f32 %v4079, %v5408
        %v5443 = vpack.c.bf16 %v5412, %v5411
        %v5444 = vpack.c.bf16 %v5414, %v5413
        %v5445 = vpack.c.bf16 %v5416, %v5415
        %v5446 = vpack.c.bf16 %v5418, %v5417
        %v5447 = vpack.c.bf16 %v5420, %v5419
        %v5448 = vpack.c.bf16 %v5422, %v5421
        %v5449 = vpack.c.bf16 %v5424, %v5423
        %v5450 = vpack.c.bf16 %v5426, %v5425
        %v5451 = vpack.c.bf16 %v5428, %v5427
        %v5452 = vpack.c.bf16 %v5430, %v5429
        %v5453 = vpack.c.bf16 %v5432, %v5431
        %v5454 = vpack.c.bf16 %v5434, %v5433
        %v5455 = vpack.c.bf16 %v5436, %v5435
        %v5456 = vpack.c.bf16 %v5438, %v5437
        %v5457 = vpack.c.bf16 %v5440, %v5439
        %v5458 = vpack.c.bf16 %v5442, %v5441
        %v5459 = vld [vmem:[#allocation20] sm:$0xff]
        %v5460 = vld [vmem:[#allocation20 + $0x8] sm:$0xff]
        %v5461 = vld [vmem:[#allocation20 + $0x10] sm:$0xff]
        %v5462 = vld [vmem:[#allocation20 + $0x18] sm:$0xff]
        %v5463 = vld [vmem:[#allocation20 + $0x20] sm:$0xff]
        %v5464 = vld [vmem:[#allocation20 + $0x28] sm:$0xff]
        %v5465 = vld [vmem:[#allocation20 + $0x30] sm:$0xff]
        %v5466 = vld [vmem:[#allocation20 + $0x38] sm:$0xff]
        %v5467 = vld [vmem:[#allocation20 + $0x40] sm:$0xff]
        %v5468 = vld [vmem:[#allocation20 + $0x48] sm:$0xff]
        %v5469 = vld [vmem:[#allocation20 + $0x50] sm:$0xff]
        %v5470 = vld [vmem:[#allocation20 + $0x58] sm:$0xff]
        %v5471 = vld [vmem:[#allocation20 + $0x60] sm:$0xff]
        %v5472 = vld [vmem:[#allocation20 + $0x68] sm:$0xff]
        %v5473 = vld [vmem:[#allocation20 + $0x70] sm:$0xff]
        %v5474 = vld [vmem:[#allocation20 + $0x78] sm:$0xff]
        %v5475 = vld [vmem:[%s14] sm:$0x3]
        %v5477 = vlaneseq
        %v5478 = vshrl.u32 %v5477, 7
        %v5479 = vsub.s32 0, %v5478
        %v5480 = vrot.slane %v5475, %v5479
        %v5481 = vlaneseq
        %v5482 = vshrl.u32 %v5481, 7
        %v5483 = vsub.s32 1, %v5482
        %v5484 = vrot.slane %v5475, %v5483
        %v5503 = vunpack.c.l.b16 %v5459
        %v5504 = vunpack.c.h.b16 %v5459
        %v5505 = vunpack.c.l.b16 %v5460
        %v5506 = vunpack.c.h.b16 %v5460
        %v5507 = vunpack.c.l.b16 %v5461
        %v5508 = vunpack.c.h.b16 %v5461
        %v5509 = vunpack.c.l.b16 %v5462
        %v5510 = vunpack.c.h.b16 %v5462
        %v5511 = vunpack.c.l.b16 %v5463
        %v5512 = vunpack.c.h.b16 %v5463
        %v5513 = vunpack.c.l.b16 %v5464
        %v5514 = vunpack.c.h.b16 %v5464
        %v5515 = vunpack.c.l.b16 %v5465
        %v5516 = vunpack.c.h.b16 %v5465
        %v5517 = vunpack.c.l.b16 %v5466
        %v5518 = vunpack.c.h.b16 %v5466
        %v5519 = vunpack.c.l.b16 %v5467
        %v5520 = vunpack.c.h.b16 %v5467
        %v5521 = vunpack.c.l.b16 %v5468
        %v5522 = vunpack.c.h.b16 %v5468
        %v5523 = vunpack.c.l.b16 %v5469
        %v5524 = vunpack.c.h.b16 %v5469
        %v5525 = vunpack.c.l.b16 %v5470
        %v5526 = vunpack.c.h.b16 %v5470
        %v5527 = vunpack.c.l.b16 %v5471
        %v5528 = vunpack.c.h.b16 %v5471
        %v5529 = vunpack.c.l.b16 %v5472
        %v5530 = vunpack.c.h.b16 %v5472
        %v5531 = vunpack.c.l.b16 %v5473
        %v5532 = vunpack.c.h.b16 %v5473
        %v5533 = vunpack.c.l.b16 %v5474
        %v5534 = vunpack.c.h.b16 %v5474
        %v5535 = vpack.c.b16 %v5505, %v5503
        %v5536 = vpack.c.b16 %v5506, %v5504
        %v5537 = vpack.c.b16 %v5509, %v5507
        %v5538 = vpack.c.b16 %v5510, %v5508
        %v5539 = vpack.c.b16 %v5513, %v5511
        %v5540 = vpack.c.b16 %v5514, %v5512
        %v5541 = vpack.c.b16 %v5517, %v5515
        %v5542 = vpack.c.b16 %v5518, %v5516
        %v5543 = vpack.c.b16 %v5521, %v5519
        %v5544 = vpack.c.b16 %v5522, %v5520
        %v5545 = vpack.c.b16 %v5525, %v5523
        %v5546 = vpack.c.b16 %v5526, %v5524
        %v5547 = vpack.c.b16 %v5529, %v5527
        %v5548 = vpack.c.b16 %v5530, %v5528
        %v5549 = vpack.c.b16 %v5533, %v5531
        %v5550 = vpack.c.b16 %v5534, %v5532
        %5567 = vmatprep.subr.bf16.mxu0 %v5550
        %5568 = vmatpush1.bf16.msra.mxu0 %v5549
        %5569 = vmatprep.subr.bf16.mxu0 %v5548
        %5570 = vmatpush1.bf16.msra.mxu0 %v5547
        %5571 = vmatprep.subr.bf16.mxu0 %v5546
        %5572 = vmatpush1.bf16.msra.mxu0 %v5545
        %5573 = vmatprep.subr.bf16.mxu0 %v5544
        %5574 = vmatpush1.bf16.msra.mxu0 %v5543
        %5575 = vmatprep.subr.bf16.mxu0 %v5542
        %5576 = vmatpush1.bf16.msra.mxu0 %v5541
        %5577 = vmatprep.subr.bf16.mxu0 %v5540
        %5578 = vmatpush1.bf16.msra.mxu0 %v5539
        %5579 = vmatprep.subr.bf16.mxu0 %v5538
        %5580 = vmatpush1.bf16.msra.mxu0 %v5537
        %5581 = vmatprep.subr.bf16.mxu0 %v5536
        %5582 = vmatpush1.bf16.msra.mxu0 %v5535
        %5583 = vmatprep.subr.bf16.mxu0 0
        %5584 = vmatpush2.bf16.msra.mxu0 0
        %5585 = vmatprep.subr.bf16.mxu0 0
        %5586 = vmatpush2.bf16.msra.mxu0 0
        %5587 = vmatprep.subr.bf16.mxu0 0
        %5588 = vmatpush2.bf16.msra.mxu0 0
        %5589 = vmatprep.subr.bf16.mxu0 0
        %5590 = vmatpush2.bf16.msra.mxu0 0
        %5591 = vmatprep.subr.bf16.mxu0 0
        %5592 = vmatpush2.bf16.msra.mxu0 0
        %5593 = vmatprep.subr.bf16.mxu0 0
        %5594 = vmatpush2.bf16.msra.mxu0 0
        %5595 = vmatprep.subr.bf16.mxu0 0
        %5596 = vmatpush2.bf16.msra.mxu0 0
        %5597 = vmatprep.subr.bf16.mxu0 0
        %5598 = vmatpush2.bf16.msra.mxu0 0
        %5599 = vmatprep.mubr.bf16.mxu0 0
        %5600 = vmatmul.mubr.bf16.gmra.mxu0 %v5443
        %v5601 = vpop.f32.mrf.mxu0
        %v5602 = vadd.f32 %v5480, %v5601
        %v5603 = vpop.f32.mrf.mxu0
        %v5604 = vadd.f32 %v5484, %v5603
        %v5605 = vpop.f32.mrf.mxu0
        %v5606 = vadd.f32 %v5480, %v5605
        %v5607 = vpop.f32.mrf.mxu0
        %v5608 = vadd.f32 %v5484, %v5607
        %5609 = vmatprep.mubr.bf16.mxu0 0
        %5610 = vmatmul.mubr.bf16.gmra.mxu0 %v5444
        %v5611 = vpop.f32.mrf.mxu0
        %v5612 = vadd.f32 %v5480, %v5611
        %v5613 = vpop.f32.mrf.mxu0
        %v5614 = vadd.f32 %v5484, %v5613
        %v5615 = vpop.f32.mrf.mxu0
        %v5616 = vadd.f32 %v5480, %v5615
        %v5617 = vpop.f32.mrf.mxu0
        %v5618 = vadd.f32 %v5484, %v5617
        %5619 = vmatprep.mubr.bf16.mxu0 0
        %5620 = vmatmul.mubr.bf16.gmra.mxu0 %v5445
        %v5621 = vpop.f32.mrf.mxu0
        %v5622 = vadd.f32 %v5480, %v5621
        %v5623 = vpop.f32.mrf.mxu0
        %v5624 = vadd.f32 %v5484, %v5623
        %v5625 = vpop.f32.mrf.mxu0
        %v5626 = vadd.f32 %v5480, %v5625
        %v5627 = vpop.f32.mrf.mxu0
        %v5628 = vadd.f32 %v5484, %v5627
        %5629 = vmatprep.mubr.bf16.mxu0 0
        %5630 = vmatmul.mubr.bf16.gmra.mxu0 %v5446
        %v5631 = vpop.f32.mrf.mxu0
        %v5632 = vadd.f32 %v5480, %v5631
        %v5633 = vpop.f32.mrf.mxu0
        %v5634 = vadd.f32 %v5484, %v5633
        %v5635 = vpop.f32.mrf.mxu0
        %v5636 = vadd.f32 %v5480, %v5635
        %v5637 = vpop.f32.mrf.mxu0
        %v5638 = vadd.f32 %v5484, %v5637
        %5639 = vmatprep.mubr.bf16.mxu0 0
        %5640 = vmatmul.mubr.bf16.gmra.mxu0 %v5447
        %v5641 = vpop.f32.mrf.mxu0
        %v5642 = vadd.f32 %v5480, %v5641
        %v5643 = vpop.f32.mrf.mxu0
        %v5644 = vadd.f32 %v5484, %v5643
        %v5645 = vpop.f32.mrf.mxu0
        %v5646 = vadd.f32 %v5480, %v5645
        %v5647 = vpop.f32.mrf.mxu0
        %v5648 = vadd.f32 %v5484, %v5647
        %5649 = vmatprep.mubr.bf16.mxu0 0
        %5650 = vmatmul.mubr.bf16.gmra.mxu0 %v5448
        %v5651 = vpop.f32.mrf.mxu0
        %v5652 = vadd.f32 %v5480, %v5651
        %v5653 = vpop.f32.mrf.mxu0
        %v5654 = vadd.f32 %v5484, %v5653
        %v5655 = vpop.f32.mrf.mxu0
        %v5656 = vadd.f32 %v5480, %v5655
        %v5657 = vpop.f32.mrf.mxu0
        %v5658 = vadd.f32 %v5484, %v5657
        %5659 = vmatprep.mubr.bf16.mxu0 0
        %5660 = vmatmul.mubr.bf16.gmra.mxu0 %v5449
        %v5661 = vpop.f32.mrf.mxu0
        %v5662 = vadd.f32 %v5480, %v5661
        %v5663 = vpop.f32.mrf.mxu0
        %v5664 = vadd.f32 %v5484, %v5663
        %v5665 = vpop.f32.mrf.mxu0
        %v5666 = vadd.f32 %v5480, %v5665
        %v5667 = vpop.f32.mrf.mxu0
        %v5668 = vadd.f32 %v5484, %v5667
        %5669 = vmatprep.mubr.bf16.mxu0 0
        %5670 = vmatmul.mubr.bf16.gmra.mxu0 %v5450
        %v5671 = vpop.f32.mrf.mxu0
        %v5672 = vadd.f32 %v5480, %v5671
        %v5673 = vpop.f32.mrf.mxu0
        %v5674 = vadd.f32 %v5484, %v5673
        %v5675 = vpop.f32.mrf.mxu0
        %v5676 = vadd.f32 %v5480, %v5675
        %v5677 = vpop.f32.mrf.mxu0
        %v5678 = vadd.f32 %v5484, %v5677
        %5679 = vmatprep.mubr.bf16.mxu0 0
        %5680 = vmatmul.mubr.bf16.gmra.mxu0 %v5451
        %v5681 = vpop.f32.mrf.mxu0
        %v5682 = vadd.f32 %v5480, %v5681
        %v5683 = vpop.f32.mrf.mxu0
        %v5684 = vadd.f32 %v5484, %v5683
        %v5685 = vpop.f32.mrf.mxu0
        %v5686 = vadd.f32 %v5480, %v5685
        %v5687 = vpop.f32.mrf.mxu0
        %v5688 = vadd.f32 %v5484, %v5687
        %5689 = vmatprep.mubr.bf16.mxu0 0
        %5690 = vmatmul.mubr.bf16.gmra.mxu0 %v5452
        %v5691 = vpop.f32.mrf.mxu0
        %v5692 = vadd.f32 %v5480, %v5691
        %v5693 = vpop.f32.mrf.mxu0
        %v5694 = vadd.f32 %v5484, %v5693
        %v5695 = vpop.f32.mrf.mxu0
        %v5696 = vadd.f32 %v5480, %v5695
        %v5697 = vpop.f32.mrf.mxu0
        %v5698 = vadd.f32 %v5484, %v5697
        %5699 = vmatprep.mubr.bf16.mxu0 0
        %5700 = vmatmul.mubr.bf16.gmra.mxu0 %v5453
        %v5701 = vpop.f32.mrf.mxu0
        %v5702 = vadd.f32 %v5480, %v5701
        %v5703 = vpop.f32.mrf.mxu0
        %v5704 = vadd.f32 %v5484, %v5703
        %v5705 = vpop.f32.mrf.mxu0
        %v5706 = vadd.f32 %v5480, %v5705
        %v5707 = vpop.f32.mrf.mxu0
        %v5708 = vadd.f32 %v5484, %v5707
        %5709 = vmatprep.mubr.bf16.mxu0 0
        %5710 = vmatmul.mubr.bf16.gmra.mxu0 %v5454
        %v5711 = vpop.f32.mrf.mxu0
        %v5712 = vadd.f32 %v5480, %v5711
        %v5713 = vpop.f32.mrf.mxu0
        %v5714 = vadd.f32 %v5484, %v5713
        %v5715 = vpop.f32.mrf.mxu0
        %v5716 = vadd.f32 %v5480, %v5715
        %v5717 = vpop.f32.mrf.mxu0
        %v5718 = vadd.f32 %v5484, %v5717
        %5719 = vmatprep.mubr.bf16.mxu0 0
        %5720 = vmatmul.mubr.bf16.gmra.mxu0 %v5455
        %v5721 = vpop.f32.mrf.mxu0
        %v5722 = vadd.f32 %v5480, %v5721
        %v5723 = vpop.f32.mrf.mxu0
        %v5724 = vadd.f32 %v5484, %v5723
        %v5725 = vpop.f32.mrf.mxu0
        %v5726 = vadd.f32 %v5480, %v5725
        %v5727 = vpop.f32.mrf.mxu0
        %v5728 = vadd.f32 %v5484, %v5727
        %5729 = vmatprep.mubr.bf16.mxu0 0
        %5730 = vmatmul.mubr.bf16.gmra.mxu0 %v5456
        %v5731 = vpop.f32.mrf.mxu0
        %v5732 = vadd.f32 %v5480, %v5731
        %v5733 = vpop.f32.mrf.mxu0
        %v5734 = vadd.f32 %v5484, %v5733
        %v5735 = vpop.f32.mrf.mxu0
        %v5736 = vadd.f32 %v5480, %v5735
        %v5737 = vpop.f32.mrf.mxu0
        %v5738 = vadd.f32 %v5484, %v5737
        %5739 = vmatprep.mubr.bf16.mxu0 0
        %5740 = vmatmul.mubr.bf16.gmra.mxu0 %v5457
        %v5741 = vpop.f32.mrf.mxu0
        %v5742 = vadd.f32 %v5480, %v5741
        %v5743 = vpop.f32.mrf.mxu0
        %v5744 = vadd.f32 %v5484, %v5743
        %v5745 = vpop.f32.mrf.mxu0
        %v5746 = vadd.f32 %v5480, %v5745
        %v5747 = vpop.f32.mrf.mxu0
        %v5748 = vadd.f32 %v5484, %v5747
        %5749 = vmatprep.mubr.bf16.mxu0 0
        %5750 = vmatmul.mubr.bf16.gmra.mxu0 %v5458
        %v5751 = vpop.f32.mrf.mxu0
        %v5752 = vadd.f32 %v5480, %v5751
        %v5753 = vpop.f32.mrf.mxu0
        %v5754 = vadd.f32 %v5484, %v5753
        %v5755 = vpop.f32.mrf.mxu0
        %v5756 = vadd.f32 %v5480, %v5755
        %v5757 = vpop.f32.mrf.mxu0
        %v5758 = vadd.f32 %v5484, %v5757
        %5759 = vdwg.mxu0
        %5760 = vst [vmem:[%s772] sm:$0xff] %v5602
        %5761 = vst [vmem:[%s772 + $0x8] sm:$0xff] %v5604
        %5762 = vst [vmem:[%s772 + $0x10] sm:$0xff] %v5606
        %5763 = vst [vmem:[%s772 + $0x18] sm:$0xff] %v5608
        %5764 = vst [vmem:[%s772 + $0x20] sm:$0xff] %v5612
        %5765 = vst [vmem:[%s772 + $0x28] sm:$0xff] %v5614
        %5766 = vst [vmem:[%s772 + $0x30] sm:$0xff] %v5616
        %5767 = vst [vmem:[%s772 + $0x38] sm:$0xff] %v5618
        %5768 = vst [vmem:[%s772 + $0x40] sm:$0xff] %v5622
        %5769 = vst [vmem:[%s772 + $0x48] sm:$0xff] %v5624
        %5770 = vst [vmem:[%s772 + $0x50] sm:$0xff] %v5626
        %5771 = vst [vmem:[%s772 + $0x58] sm:$0xff] %v5628
        %5772 = vst [vmem:[%s772 + $0x60] sm:$0xff] %v5632
        %5773 = vst [vmem:[%s772 + $0x68] sm:$0xff] %v5634
        %5774 = vst [vmem:[%s772 + $0x70] sm:$0xff] %v5636
        %5775 = vst [vmem:[%s772 + $0x78] sm:$0xff] %v5638
        %5776 = vst [vmem:[%s772 + $0x80] sm:$0xff] %v5642
        %5777 = vst [vmem:[%s772 + $0x88] sm:$0xff] %v5644
        %5778 = vst [vmem:[%s772 + $0x90] sm:$0xff] %v5646
        %5779 = vst [vmem:[%s772 + $0x98] sm:$0xff] %v5648
        %5780 = vst [vmem:[%s772 + $0xa0] sm:$0xff] %v5652
        %5781 = vst [vmem:[%s772 + $0xa8] sm:$0xff] %v5654
        %5782 = vst [vmem:[%s772 + $0xb0] sm:$0xff] %v5656
        %5783 = vst [vmem:[%s772 + $0xb8] sm:$0xff] %v5658
        %5784 = vst [vmem:[%s772 + $0xc0] sm:$0xff] %v5662
        %5785 = vst [vmem:[%s772 + $0xc8] sm:$0xff] %v5664
        %5786 = vst [vmem:[%s772 + $0xd0] sm:$0xff] %v5666
        %5787 = vst [vmem:[%s772 + $0xd8] sm:$0xff] %v5668
        %5788 = vst [vmem:[%s772 + $0xe0] sm:$0xff] %v5672
        %5789 = vst [vmem:[%s772 + $0xe8] sm:$0xff] %v5674
        %5790 = vst [vmem:[%s772 + $0xf0] sm:$0xff] %v5676
        %5791 = vst [vmem:[%s772 + $0xf8] sm:$0xff] %v5678
        %5792 = vst [vmem:[%s772 + $0x100] sm:$0xff] %v5682
        %5793 = vst [vmem:[%s772 + $0x108] sm:$0xff] %v5684
        %5794 = vst [vmem:[%s772 + $0x110] sm:$0xff] %v5686
        %5795 = vst [vmem:[%s772 + $0x118] sm:$0xff] %v5688
        %5796 = vst [vmem:[%s772 + $0x120] sm:$0xff] %v5692
        %5797 = vst [vmem:[%s772 + $0x128] sm:$0xff] %v5694
        %5798 = vst [vmem:[%s772 + $0x130] sm:$0xff] %v5696
        %5799 = vst [vmem:[%s772 + $0x138] sm:$0xff] %v5698
        %5800 = vst [vmem:[%s772 + $0x140] sm:$0xff] %v5702
        %5801 = vst [vmem:[%s772 + $0x148] sm:$0xff] %v5704
        %5802 = vst [vmem:[%s772 + $0x150] sm:$0xff] %v5706
        %5803 = vst [vmem:[%s772 + $0x158] sm:$0xff] %v5708
        %5804 = vst [vmem:[%s772 + $0x160] sm:$0xff] %v5712
        %5805 = vst [vmem:[%s772 + $0x168] sm:$0xff] %v5714
        %5806 = vst [vmem:[%s772 + $0x170] sm:$0xff] %v5716
        %5807 = vst [vmem:[%s772 + $0x178] sm:$0xff] %v5718
        %5808 = vst [vmem:[%s772 + $0x180] sm:$0xff] %v5722
        %5809 = vst [vmem:[%s772 + $0x188] sm:$0xff] %v5724
        %5810 = vst [vmem:[%s772 + $0x190] sm:$0xff] %v5726
        %5811 = vst [vmem:[%s772 + $0x198] sm:$0xff] %v5728
        %5812 = vst [vmem:[%s772 + $0x1a0] sm:$0xff] %v5732
        %5813 = vst [vmem:[%s772 + $0x1a8] sm:$0xff] %v5734
        %5814 = vst [vmem:[%s772 + $0x1b0] sm:$0xff] %v5736
        %5815 = vst [vmem:[%s772 + $0x1b8] sm:$0xff] %v5738
        %5816 = vst [vmem:[%s772 + $0x1c0] sm:$0xff] %v5742
        %5817 = vst [vmem:[%s772 + $0x1c8] sm:$0xff] %v5744
        %5818 = vst [vmem:[%s772 + $0x1d0] sm:$0xff] %v5746
        %5819 = vst [vmem:[%s772 + $0x1d8] sm:$0xff] %v5748
        %5820 = vst [vmem:[%s772 + $0x1e0] sm:$0xff] %v5752
        %5821 = vst [vmem:[%s772 + $0x1e8] sm:$0xff] %v5754
        %5822 = vst [vmem:[%s772 + $0x1f0] sm:$0xff] %v5756
        %5823 = vst [vmem:[%s772 + $0x1f8] sm:$0xff] %v5758
        %s5824 = sand.u32 %s390, 1
        %s5825 = scalar_lea.sflag [#allocation4], %s5824
        %s5826 = sand.u32 %s390, 1
        %s5827 = smul.addr %s5826, 512
        %s5828 = scalar_lea.vmem [#allocation22], %s5827
        // Predicated region
        $region129: #{tpu_custom_call.1} parent=79 // pred_check
          %p5829 = pneg %p400
        $region130: #{tpu_custom_call.1} parent=79 // pred_check_branch
          %5831 = sbr.rel (%p5829) target = $region132
        $region131: #{tpu_custom_call.1} parent=79 // pred_region
          %s5832 = smul.u32 8, %s42
          %s5834 = ssub.s32 8192, 8192
          %5835 = vsyncadd %s5825, %s5834
          %s5836 = smul.addr %s5832, 8
          %s5837 = smul.addr %s5836, 128
          %s5838 = scalar_lea.hbm %s15, %s5837
          %s5839 = sshll.u32 %s5828, 4
          %s5840 = int_to_ptr.vmem [resolvable:$true] %s5839
          %5845 = dma.vmem_to_hbm [thread:$0]  %s5840, 8192, %s5838, %s5825, 256, 256, 16
        $region132: #{tpu_custom_call.1} parent=79 // pred_fallthru
          _
      $region80: #{tpu_custom_call.1} parent=5 // pred_fallthru
        _
      %p5846 = scmp.le.s32.totalorder 2, %s37
      // Predicated region
      $region133: #{tpu_custom_call.1} parent=5 // pred_check
        %p5847 = pneg %p5846
      $region134: #{tpu_custom_call.1} parent=5 // pred_check_branch
        %5849 = sbr.rel (%p5847) target = $region136
      $region135: #{tpu_custom_call.1} parent=5 // pred_region
        %s5850 = ssub.s32 %s37, 2
        // Predicated region
        $region137: #{tpu_custom_call.1} parent=135 // pred_check
          %p5851 = pneg %p406
        $region138: #{tpu_custom_call.1} parent=135 // pred_check_branch
          %5853 = sbr.rel (%p5851) target = $region140
        $region139: #{tpu_custom_call.1} parent=135 // pred_region
          %s5854 = sand.u32 %s391, 1
          %s5855 = scalar_lea.sflag [#allocation4], %s5854
          %s5856 = sand.u32 %s391, 1
          %s5857 = smul.addr %s5856, 512
          %s5858 = scalar_lea.vmem [#allocation22], %s5857
          %5859 = dma.done %s5855, 8192
        $region140: #{tpu_custom_call.1} parent=135 // pred_fallthru
          _
      $region136: #{tpu_custom_call.1} parent=5 // pred_fallthru
        _
    $region6: #{tpu_custom_call.1} parent=1 // loop_footer
      %s41 = sadd.s32 1, %s37
    $region7: #{tpu_custom_call.1} parent=1 // loop_footer_branch
      %36 = sbr.rel target = $region3
    $region8: #{tpu_custom_call.1} parent=1 // loop_exit
      _
    %5860 = vsyncpa [#allocation3], 1
    %s5861 = scalar_lea.sflag [#allocation3], 1
    %5862 = vsyncpa %s5861, 1
    %5863 = vsyncpa [#allocation6], 1
    %s5864 = scalar_lea.sflag [#allocation6], 1
    %5865 = vsyncpa %s5864, 1
    %5866 = vsyncpa [#allocation9], 1
    %s5867 = scalar_lea.sflag [#allocation9], 1
    %5868 = vsyncpa %s5867, 1
    %5869 = vsyncpa [#allocation12], 1
    %5870 = vsyncpa [#allocation15], 1
    %5871 = vsyncpa [#allocation18], 1
    %5872 = vsyncpa [#allocation21], 1
    %5873 = vsyncpa [#allocation4], 1
    %s5874 = scalar_lea.sflag [#allocation4], 1
    %5875 = vsyncpa %s5874, 1

</llo_original>
